<compile_context>
chip_gen: v6e
topology: v6e:2x2x1
jax: 0.10.0
libtpu: 0.0.40
codegen_flags: <defaults>
</compile_context>

<pallas_src>
import functools

import jax
import jax.numpy as jnp
from jax.experimental import pallas as pl
from jax.experimental.pallas import tpu as pltpu

# ----- module hyper-parameters (RetroChunkedCrossAttention.__init__) -----
HIDDEN = 32        # hidden_size
CA_HIDDEN = 32     # ca_hidden_size
CHUNK = 8          # chunk_size (stored by the module, unused in forward)
QKV = 32           # qkv_size
NUM_HEADS = 4
DH = QKV // NUM_HEADS
NUM_BUCKETS = 8    # pos_bias_num_buckets
EPS = 1e-8         # RMSNorm eps

PREC = jax.lax.Precision.HIGHEST   # keep f32 matmuls at full precision on both sides


def compute_relative_position_bias(qlen, klen, num_buckets, emb_weight):
    """Linear-bucket, bidirectional relative position bias -> (H, qlen, klen)."""
    context = jnp.arange(qlen)[:, None]
    memory = jnp.arange(klen)[None, :]
    rel = memory - context
    mn = -(num_buckets // 2) - (num_buckets % 2 - 1)
    mx = num_buckets // 2
    buckets = jnp.clip(rel, mn, mx) - mn
    values = emb_weight[buckets]                       # (qlen, klen, H)
    return jnp.transpose(values, (2, 0, 1)).astype(jnp.float32)


def _cca_kernel(x_ref, past_ref, mask_ref, bias_ref, scale_ref,
                wq_ref, wkv_ref, wo_ref, out_ref, probs_ref=None, *,
                num_heads, dh, qkv, hidden, eps, approx, with_probs):
    cdt = wq_ref.dtype              # MXU operand dtype (f32 strict / bf16 production)

    xb = x_ref[0]                   # (S, hidden)  residual / RMSNorm input (f32)
    past = past_ref[0, 0]           # (KR, ca)     retrieved states for this (b, l)
    mask = mask_ref[0, 0]           # (1, KR)      additive mask for this (b, l) (f32)
    scale = scale_ref[...]          # (1, hidden)

    # ---- RMSNorm (p < 0 full-dim branch); kept in f32 (v5e VPU has no bf16) ----
    ssum = jnp.sum(xb * xb, axis=-1, keepdims=True)                  # (S, 1)
    rms = jnp.sqrt(ssum) * (hidden ** -0.5)
    inv = pl.reciprocal(rms + eps, approx=approx)                    # approx=True -> EUP
    xn = xb * inv * scale                                            # (S, hidden)

    # ---- fused, lane-dense projections: no per-head batching, no replication ----
    q = jnp.dot(xn.astype(cdt), wq_ref[...],
                preferred_element_type=jnp.float32, precision=PREC)   # (S, QKV)
    kv = jnp.dot(past, wkv_ref[...],
                 preferred_element_type=jnp.float32, precision=PREC)  # (KR, 2*QKV)
    q = q.astype(cdt)
    kv = kv.astype(cdt)

    # ---- per-head attention (heads are static lane slices; H is tiny, unrolled) ----
    ctx_heads = []
    probs_heads = []
    for h in range(num_heads):
        qh = q[:, h * dh:(h + 1) * dh]                               # (S, dh)
        kh = kv[:, h * dh:(h + 1) * dh]                              # (KR, dh)
        vh = kv[:, qkv + h * dh: qkv + (h + 1) * dh]                 # (KR, dh)
        s = jax.lax.dot_general(qh, kh, (((1,), (1,)), ((), ())),
                                preferred_element_type=jnp.float32,
                                precision=PREC)                      # (S, KR)
        s = s + bias_ref[h] + mask        # bias + mask broadcast-added in-kernel (VPU)
        s = s - jnp.max(s, axis=-1, keepdims=True)
        e = jnp.exp(s)
        p = e * pl.reciprocal(jnp.sum(e, axis=-1, keepdims=True), approx=approx)
        ctx_heads.append(jnp.dot(p.astype(cdt), vh,
                                 preferred_element_type=jnp.float32,
                                 precision=PREC))                    # (S, dh)
        if with_probs:
            probs_heads.append(p)

    # ---- heads back onto the lane dim, ONE output projection (head-sum folded in),
    #      residual add, single store per step ----
    ctx = jnp.concatenate(ctx_heads, axis=-1)                        # (S, QKV)
    o = jnp.dot(ctx.astype(cdt), wo_ref[...],
                preferred_element_type=jnp.float32, precision=PREC)  # (S, hidden)
    out_ref[0, 0] = (o + xb).astype(out_ref.dtype)
    if with_probs:
        probs_ref[0, 0] = jnp.stack(probs_heads, axis=0).astype(probs_ref.dtype)

    # TODO(synk): when hidden_size / K*R < 128 (as in this toy config) the final vst is a
    #             masked partial store; a lane-flattened (1, S*hidden) out layout would
    #             densify it, but at production dims (>=128 lanes) the current natural-
    #             shape block is already an unmasked, lane-dense slab store.


def retro_cca_forward(x, past, mask, params, return_attention=True,
                      mxu_bf16=False, approx_recip=False):
    """x: (B,S,HIDDEN); past: (B,L,K,R,CA_HIDDEN); mask: (B,L,K,R) in {0,1}."""
    scale, wq, wkv, wo, pos_emb = params
    B, S, _ = x.shape
    _, L, K, R, _ = past.shape
    KR = K * R
    H = NUM_HEADS

    cdt = jnp.bfloat16 if mxu_bf16 else jnp.float32

    # bias is (H,S,KR), independent of (B,L): one constant-index DMA stream.
    # mask is (B,L,1,KR), independent of (H,S): tiny per-(b,l) stream.
    bias = compute_relative_position_bias(S, KR, NUM_BUCKETS, pos_emb)        # (H,S,KR)
    mask_add = ((1.0 - mask) * -10000.0).reshape(B, L, 1, KR).astype(jnp.float32)
    past4 = past.reshape(B, L, KR, CA_HIDDEN).astype(cdt)
    scale2 = scale.reshape(1, HIDDEN).astype(jnp.float32)
    wq_c = wq.astype(cdt)            # (HIDDEN, QKV)       fused q weight
    wkv_c = wkv.astype(cdt)          # (CA_HIDDEN, 2*QKV)  fused k|v weight (one stream)
    wo_c = wo.astype(cdt)            # (QKV, HIDDEN)       fused output weight

    kernel = functools.partial(_cca_kernel, num_heads=H, dh=DH, qkv=QKV,
                               hidden=HIDDEN, eps=EPS, approx=approx_recip,
                               with_probs=return_attention)

    in_specs = [
        pl.BlockSpec((1, S, HIDDEN), lambda b, l: (b, 0, 0)),             # x (reused over l)
        pl.BlockSpec((1, 1, KR, CA_HIDDEN), lambda b, l: (b, l, 0, 0)),   # past[b, l]
        pl.BlockSpec((1, 1, 1, KR), lambda b, l: (b, l, 0, 0)),           # additive mask[b, l]
        pl.BlockSpec((H, S, KR), lambda b, l: (0, 0, 0)),                 # rel-pos bias (const)
        pl.BlockSpec((1, HIDDEN), lambda b, l: (0, 0)),                   # RMSNorm scale
        pl.BlockSpec((HIDDEN, QKV), lambda b, l: (0, 0)),                 # Wq
        pl.BlockSpec((CA_HIDDEN, 2 * QKV), lambda b, l: (0, 0)),          # Wkv (fused)
        pl.BlockSpec((QKV, HIDDEN), lambda b, l: (0, 0)),                 # Wo
    ]

    if return_attention:
        out_shape = (jax.ShapeDtypeStruct((B, L, S, HIDDEN), jnp.float32),
                     jax.ShapeDtypeStruct((B, L, H, S, KR), jnp.float32))
        out_specs = (pl.BlockSpec((1, 1, S, HIDDEN), lambda b, l: (b, l, 0, 0)),
                     pl.BlockSpec((1, 1, H, S, KR), lambda b, l: (b, l, 0, 0, 0)))
    else:
        out_shape = jax.ShapeDtypeStruct((B, L, S, HIDDEN), jnp.float32)
        out_specs = pl.BlockSpec((1, 1, S, HIDDEN), lambda b, l: (b, l, 0, 0))

    # scoped-VMEM budget derived from the actual per-step blocks (double-buffered),
    # clamped to the v7x physical ceiling so the same setting is safe on all gens.
    cb = 2 if mxu_bf16 else 4
    per_step = (S * HIDDEN * 4 + KR * CA_HIDDEN * cb + KR * 4 + H * S * KR * 4
                + (HIDDEN * QKV + CA_HIDDEN * 2 * QKV + QKV * HIDDEN) * cb + HIDDEN * 4
                + S * HIDDEN * 4 + (H * S * KR * 4 if return_attention else 0))
    vmem_limit = int(min(64 * 2 ** 20, max(16 * 2 ** 20, 4 * per_step + 2 * 2 ** 20)))

    results = pl.pallas_call(
        kernel,
        out_shape=out_shape,
        grid_spec=pltpu.PrefetchScalarGridSpec(
            num_scalar_prefetch=0,
            grid=(B, L),                                   # per-chunk steps; both parallel
            in_specs=in_specs,
            out_specs=out_specs),
        compiler_params=pltpu.CompilerParams(
            dimension_semantics=("parallel", "parallel"),  # v7x: 2 TCs share (B, L)
            vmem_limit_bytes=vmem_limit),
    )(x.astype(jnp.float32), past4, mask_add, bias, scale2, wq_c, wkv_c, wo_c)

    if return_attention:
        out4, probs = results
    else:
        out4, probs = results, None

    # 'b l m d -> b (l m) d' ; residual was already added inside the kernel.
    output = out4.reshape(B, L * S, HIDDEN)
    return output, probs


def reference(x, past, mask, params):
    """Pure-JAX re-implementation of the PyTorch forward (for verification)."""
    scale, wq, wkv, wo, pos_emb = params
    B, S, _ = x.shape
    _, L, K, R, _ = past.shape
    KR = K * R
    norm = jnp.sqrt(jnp.sum(x * x, axis=-1, keepdims=True))
    rms = norm * (HIDDEN ** -0.5)
    xn = x / (rms + EPS) * scale
    q = jnp.dot(xn, wq, precision=PREC).reshape(B, S, NUM_HEADS, DH).transpose(0, 2, 1, 3)
    kv = jnp.dot(past, wkv, precision=PREC).reshape(B, L, K, R, 2, NUM_HEADS, DH)
    kv = jnp.transpose(kv, (4, 0, 1, 5, 2, 3, 6)).reshape(2, B, L, NUM_HEADS, KR, DH)
    k_, v_ = kv[0], kv[1]
    bias = compute_relative_position_bias(S, KR, NUM_BUCKETS, pos_emb)
    mask_add = (1.0 - mask).reshape(B, L, 1, 1, KR) * -10000.0
    scores = (jnp.einsum('bhsd,blhkd->blhsk', q, k_, precision=PREC)
              + bias[None, None] + mask_add)
    probs = jax.nn.softmax(scores, axis=-1)
    ctx = jnp.einsum('blhsk,blhkd->blhsd', probs, v_, precision=PREC)
    ctx = jnp.transpose(ctx, (0, 1, 3, 2, 4)).reshape(B, L, S, QKV)
    out = jnp.dot(ctx, wo, precision=PREC).reshape(B, L * S, HIDDEN) + x
    return out, probs


if __name__ == "__main__":
    B, L, K, R, S = 2, 1, 2, 4, 8   # batch, chunks, neighbours, retrieved len, seq

    key = jax.random.PRNGKey(0)
    ks = jax.random.split(key, 8)

    # deterministic synthetic parameters (shapes from __init__). pos_emb / scale are
    # non-trivial so the relative-position bucket path and RMSNorm scale are exercised.
    scale = 1.0 + 0.1 * jax.random.normal(ks[6], (HIDDEN,), jnp.float32)       # RMSNorm.scale
    wq = 0.05 * jax.random.normal(ks[0], (HIDDEN, QKV), jnp.float32)           # q_proj
    wkv = 0.05 * jax.random.normal(ks[1], (CA_HIDDEN, 2 * QKV), jnp.float32)   # kv_proj
    wo = 0.05 * jax.random.normal(ks[2], (QKV, HIDDEN), jnp.float32)           # final_proj
    pos_emb = 0.1 * jax.random.normal(ks[7], (NUM_BUCKETS, NUM_HEADS), jnp.float32)
    params = (scale, wq, wkv, wo, pos_emb)

    # deterministic synthetic inputs
    x = jax.random.normal(ks[3], (B, S, HIDDEN), jnp.float32)
    past = jax.random.normal(ks[4], (B, L, K, R, CA_HIDDEN), jnp.float32)
    mask = (jax.random.uniform(ks[5], (B, L, K, R)) > 0.25).astype(jnp.float32)

    ref_out, ref_probs = reference(x, past, mask, params)

    # ---- strict-parity config: f32 MXU operands, exact reciprocals ----
    out, probs = retro_cca_forward(x, past, mask, params, return_attention=True)
    out = jax.block_until_ready(out)
    probs = jax.block_until_ready(probs)
    assert jnp.allclose(out, ref_out, rtol=1e-5, atol=1e-5), "output mismatch"
    assert jnp.allclose(probs, ref_probs, rtol=1e-5, atol=1e-5), "attention mismatch"

    # ---- probs-free fast path (drops the attention-map writeback stream) ----
    out2, _ = retro_cca_forward(x, past, mask, params, return_attention=False)
    out2 = jax.block_until_ready(out2)
    assert jnp.allclose(out2, ref_out, rtol=1e-5, atol=1e-5), "output mismatch (no probs)"

    # ---- production config (v6e/v7x feedback): bf16 MXU operands + EUP approx
    #      reciprocals; elementwise math stays f32 (v5e-safe). Looser tolerance. ----
    out3, probs3 = retro_cca_forward(x, past, mask, params, return_attention=True,
                                     mxu_bf16=True, approx_recip=True)
    out3 = jax.block_until_ready(out3)
    probs3 = jax.block_until_ready(probs3)
    assert jnp.allclose(out3, ref_out, rtol=3e-2, atol=3e-2), "output mismatch (bf16)"
    assert jnp.allclose(probs3, ref_probs, rtol=3e-2, atol=3e-2), "attention mismatch (bf16)"

    # TODO(synk): nn.Dropout layers are inference-mode identities and are omitted.
    print("KERNEL_OK")
</pallas_src>

<mosaic_0001>
module attributes {stable_mosaic.version = 11 : i64} {
  func.func @_cca_kernel(%arg0: i32, %arg1: i32, %arg2: memref<1x8x32xf32, #tpu.memory_space<vmem>>, %arg3: memref<1x1x8x32xf32, #tpu.memory_space<vmem>>, %arg4: memref<1x1x1x8xf32, #tpu.memory_space<vmem>>, %arg5: memref<4x8x8xf32, #tpu.memory_space<vmem>>, %arg6: memref<1x32xf32, #tpu.memory_space<vmem>>, %arg7: memref<32x32xf32, #tpu.memory_space<vmem>>, %arg8: memref<32x64xf32, #tpu.memory_space<vmem>>, %arg9: memref<32x32xf32, #tpu.memory_space<vmem>>, %arg10: memref<1x1x8x32xf32, #tpu.memory_space<vmem>>, %arg11: memref<1x1x4x8x8xf32, #tpu.memory_space<vmem>>) attributes {dimension_semantics = [#tpu.dimension_semantics<parallel>, #tpu.dimension_semantics<parallel>], iteration_bounds = array<i64: 2, 1>, scalar_prefetch = 0 : i64, scratch_operands = 0 : i64, tpu.core_type = #tpu.core_type<tc>, window_params = [{transform_indices = @transform_0, window_bounds = array<i64: 1, 8, 32>}, {transform_indices = @transform_1, window_bounds = array<i64: 1, 1, 8, 32>}, {transform_indices = @transform_2, window_bounds = array<i64: 1, 1, 1, 8>}, {pipeline_mode = #tpu.pipeline_mode<synchronous>, transform_indices = @transform_3, window_bounds = array<i64: 4, 8, 8>}, {pipeline_mode = #tpu.pipeline_mode<synchronous>, transform_indices = @transform_4, window_bounds = array<i64: 1, 32>}, {pipeline_mode = #tpu.pipeline_mode<synchronous>, transform_indices = @transform_5, window_bounds = array<i64: 32, 32>}, {pipeline_mode = #tpu.pipeline_mode<synchronous>, transform_indices = @transform_6, window_bounds = array<i64: 32, 64>}, {pipeline_mode = #tpu.pipeline_mode<synchronous>, transform_indices = @transform_7, window_bounds = array<i64: 32, 32>}, {transform_indices = @transform_8, window_bounds = array<i64: 1, 1, 8, 32>}, {transform_indices = @transform_9, window_bounds = array<i64: 1, 1, 4, 8, 8>}]} {
    %c0 = arith.constant 0 : index
    %c0_0 = arith.constant 0 : index
    %c0_1 = arith.constant 0 : index
    %0 = vector.load %arg2[%c0, %c0_0, %c0_1] : memref<1x8x32xf32, #tpu.memory_space<vmem>>, vector<1x8x32xf32>
    %1 = vector.shape_cast %0 : vector<1x8x32xf32> to vector<8x32xf32>
    %c0_2 = arith.constant 0 : index
    %c0_3 = arith.constant 0 : index
    %c0_4 = arith.constant 0 : index
    %c0_5 = arith.constant 0 : index
    %2 = vector.load %arg3[%c0_2, %c0_3, %c0_4, %c0_5] : memref<1x1x8x32xf32, #tpu.memory_space<vmem>>, vector<1x1x8x32xf32>
    %3 = vector.shape_cast %2 : vector<1x1x8x32xf32> to vector<8x32xf32>
    %c0_6 = arith.constant 0 : index
    %c0_7 = arith.constant 0 : index
    %c0_8 = arith.constant 0 : index
    %c0_9 = arith.constant 0 : index
    %4 = vector.load %arg4[%c0_6, %c0_7, %c0_8, %c0_9] : memref<1x1x1x8xf32, #tpu.memory_space<vmem>>, vector<1x1x1x8xf32>
    %5 = vector.shape_cast %4 : vector<1x1x1x8xf32> to vector<1x8xf32>
    %c0_10 = arith.constant 0 : index
    %c0_11 = arith.constant 0 : index
    %6 = vector.load %arg6[%c0_10, %c0_11] : memref<1x32xf32, #tpu.memory_space<vmem>>, vector<1x32xf32>
    %7 = arith.mulf %1, %1 : vector<8x32xf32>
    %cst = arith.constant dense<0.000000e+00> : vector<8xf32>
    %8 = vector.multi_reduction <add>, %7, %cst [1] : vector<8x32xf32> to vector<8xf32>
    %9 = vector.shape_cast %8 : vector<8xf32> to vector<8x1xf32>
    %10 = math.sqrt %9 : vector<8x1xf32>
    %cst_12 = arith.constant 0.176776692 : f32
    %11 = vector.broadcast %cst_12 : f32 to vector<8x1xf32>
    %12 = arith.mulf %10, %11 : vector<8x1xf32>
    %cst_13 = arith.constant 9.99999993E-9 : f32
    %13 = vector.broadcast %cst_13 : f32 to vector<8x1xf32>
    %14 = arith.addf %12, %13 : vector<8x1xf32>
    %15 = tpu.reciprocal %14 : vector<8x1xf32> -> vector<8x1xf32>
    %16 = vector.broadcast %15 : vector<8x1xf32> to vector<8x32xf32>
    %17 = arith.mulf %1, %16 : vector<8x32xf32>
    %18 = vector.broadcast %6 : vector<1x32xf32> to vector<8x32xf32>
    %19 = arith.mulf %17, %18 : vector<8x32xf32>
    %c0_14 = arith.constant 0 : index
    %c0_15 = arith.constant 0 : index
    %20 = vector.load %arg7[%c0_14, %c0_15] : memref<32x32xf32, #tpu.memory_space<vmem>>, vector<32x32xf32>
    %cst_16 = arith.constant dense<0.000000e+00> : vector<8x32xf32>
    %21 = tpu.matmul %19, %20, %cst_16 {dimension_numbers = #tpu.dot_dimension_numbers<[1], [0], [0], [1], [0, 0, 1, 1], [], []>, precision = #tpu.contract_precision<fp32>} : vector<8x32xf32>, vector<32x32xf32>, vector<8x32xf32> -> vector<8x32xf32>
    %c0_17 = arith.constant 0 : index
    %c0_18 = arith.constant 0 : index
    %22 = vector.load %arg8[%c0_17, %c0_18] : memref<32x64xf32, #tpu.memory_space<vmem>>, vector<32x64xf32>
    %cst_19 = arith.constant dense<0.000000e+00> : vector<8x64xf32>
    %23 = tpu.matmul %3, %22, %cst_19 {dimension_numbers = #tpu.dot_dimension_numbers<[1], [0], [0], [1], [0, 0, 1, 1], [], []>, precision = #tpu.contract_precision<fp32>} : vector<8x32xf32>, vector<32x64xf32>, vector<8x64xf32> -> vector<8x64xf32>
    %24 = vector.extract_strided_slice %21 {offsets = [0, 0], sizes = [8, 8], strides = [1, 1]} : vector<8x32xf32> to vector<8x8xf32>
    %25 = vector.extract_strided_slice %23 {offsets = [0, 0], sizes = [8, 8], strides = [1, 1]} : vector<8x64xf32> to vector<8x8xf32>
    %26 = vector.extract_strided_slice %23 {offsets = [0, 32], sizes = [8, 8], strides = [1, 1]} : vector<8x64xf32> to vector<8x8xf32>
    %cst_20 = arith.constant dense<0.000000e+00> : vector<8x8xf32>
    %27 = tpu.matmul %24, %25, %cst_20 {dimension_numbers = #tpu.dot_dimension_numbers<[1], [1], [0], [0], [0, 0, 1, 0], [], []>, precision = #tpu.contract_precision<fp32>} : vector<8x8xf32>, vector<8x8xf32>, vector<8x8xf32> -> vector<8x8xf32>
    %c0_21 = arith.constant 0 : index
    %c0_22 = arith.constant 0 : index
    %c0_23 = arith.constant 0 : index
    %28 = vector.load %arg5[%c0_21, %c0_22, %c0_23] : memref<4x8x8xf32, #tpu.memory_space<vmem>>, vector<1x8x8xf32>
    %29 = vector.shape_cast %28 : vector<1x8x8xf32> to vector<8x8xf32>
    %30 = arith.addf %27, %29 : vector<8x8xf32>
    %31 = vector.broadcast %5 : vector<1x8xf32> to vector<8x8xf32>
    %32 = arith.addf %30, %31 : vector<8x8xf32>
    %cst_24 = arith.constant dense<0xFF800000> : vector<8xf32>
    %33 = vector.multi_reduction <maximumf>, %32, %cst_24 [1] : vector<8x8xf32> to vector<8xf32>
    %34 = vector.shape_cast %33 : vector<8xf32> to vector<8x1xf32>
    %35 = vector.broadcast %34 : vector<8x1xf32> to vector<8x8xf32>
    %36 = arith.subf %32, %35 : vector<8x8xf32>
    %37 = math.exp %36 : vector<8x8xf32>
    %cst_25 = arith.constant dense<0.000000e+00> : vector<8xf32>
    %38 = vector.multi_reduction <add>, %37, %cst_25 [1] : vector<8x8xf32> to vector<8xf32>
    %39 = vector.shape_cast %38 : vector<8xf32> to vector<8x1xf32>
    %40 = tpu.reciprocal %39 : vector<8x1xf32> -> vector<8x1xf32>
    %41 = vector.broadcast %40 : vector<8x1xf32> to vector<8x8xf32>
    %42 = arith.mulf %37, %41 : vector<8x8xf32>
    %cst_26 = arith.constant dense<0.000000e+00> : vector<8x8xf32>
    %43 = tpu.matmul %42, %26, %cst_26 {dimension_numbers = #tpu.dot_dimension_numbers<[1], [0], [0], [1], [0, 0, 1, 1], [], []>, precision = #tpu.contract_precision<fp32>} : vector<8x8xf32>, vector<8x8xf32>, vector<8x8xf32> -> vector<8x8xf32>
    %44 = vector.extract_strided_slice %21 {offsets = [0, 8], sizes = [8, 8], strides = [1, 1]} : vector<8x32xf32> to vector<8x8xf32>
    %45 = vector.extract_strided_slice %23 {offsets = [0, 8], sizes = [8, 8], strides = [1, 1]} : vector<8x64xf32> to vector<8x8xf32>
    %46 = vector.extract_strided_slice %23 {offsets = [0, 40], sizes = [8, 8], strides = [1, 1]} : vector<8x64xf32> to vector<8x8xf32>
    %cst_27 = arith.constant dense<0.000000e+00> : vector<8x8xf32>
    %47 = tpu.matmul %44, %45, %cst_27 {dimension_numbers = #tpu.dot_dimension_numbers<[1], [1], [0], [0], [0, 0, 1, 0], [], []>, precision = #tpu.contract_precision<fp32>} : vector<8x8xf32>, vector<8x8xf32>, vector<8x8xf32> -> vector<8x8xf32>
    %c1 = arith.constant 1 : index
    %c0_28 = arith.constant 0 : index
    %c0_29 = arith.constant 0 : index
    %48 = vector.load %arg5[%c1, %c0_28, %c0_29] : memref<4x8x8xf32, #tpu.memory_space<vmem>>, vector<1x8x8xf32>
    %49 = vector.shape_cast %48 : vector<1x8x8xf32> to vector<8x8xf32>
    %50 = arith.addf %47, %49 : vector<8x8xf32>
    %51 = vector.broadcast %5 : vector<1x8xf32> to vector<8x8xf32>
    %52 = arith.addf %50, %51 : vector<8x8xf32>
    %cst_30 = arith.constant dense<0xFF800000> : vector<8xf32>
    %53 = vector.multi_reduction <maximumf>, %52, %cst_30 [1] : vector<8x8xf32> to vector<8xf32>
    %54 = vector.shape_cast %53 : vector<8xf32> to vector<8x1xf32>
    %55 = vector.broadcast %54 : vector<8x1xf32> to vector<8x8xf32>
    %56 = arith.subf %52, %55 : vector<8x8xf32>
    %57 = math.exp %56 : vector<8x8xf32>
    %cst_31 = arith.constant dense<0.000000e+00> : vector<8xf32>
    %58 = vector.multi_reduction <add>, %57, %cst_31 [1] : vector<8x8xf32> to vector<8xf32>
    %59 = vector.shape_cast %58 : vector<8xf32> to vector<8x1xf32>
    %60 = tpu.reciprocal %59 : vector<8x1xf32> -> vector<8x1xf32>
    %61 = vector.broadcast %60 : vector<8x1xf32> to vector<8x8xf32>
    %62 = arith.mulf %57, %61 : vector<8x8xf32>
    %cst_32 = arith.constant dense<0.000000e+00> : vector<8x8xf32>
    %63 = tpu.matmul %62, %46, %cst_32 {dimension_numbers = #tpu.dot_dimension_numbers<[1], [0], [0], [1], [0, 0, 1, 1], [], []>, precision = #tpu.contract_precision<fp32>} : vector<8x8xf32>, vector<8x8xf32>, vector<8x8xf32> -> vector<8x8xf32>
    %64 = vector.extract_strided_slice %21 {offsets = [0, 16], sizes = [8, 8], strides = [1, 1]} : vector<8x32xf32> to vector<8x8xf32>
    %65 = vector.extract_strided_slice %23 {offsets = [0, 16], sizes = [8, 8], strides = [1, 1]} : vector<8x64xf32> to vector<8x8xf32>
    %66 = vector.extract_strided_slice %23 {offsets = [0, 48], sizes = [8, 8], strides = [1, 1]} : vector<8x64xf32> to vector<8x8xf32>
    %cst_33 = arith.constant dense<0.000000e+00> : vector<8x8xf32>
    %67 = tpu.matmul %64, %65, %cst_33 {dimension_numbers = #tpu.dot_dimension_numbers<[1], [1], [0], [0], [0, 0, 1, 0], [], []>, precision = #tpu.contract_precision<fp32>} : vector<8x8xf32>, vector<8x8xf32>, vector<8x8xf32> -> vector<8x8xf32>
    %c2 = arith.constant 2 : index
    %c0_34 = arith.constant 0 : index
    %c0_35 = arith.constant 0 : index
    %68 = vector.load %arg5[%c2, %c0_34, %c0_35] : memref<4x8x8xf32, #tpu.memory_space<vmem>>, vector<1x8x8xf32>
    %69 = vector.shape_cast %68 : vector<1x8x8xf32> to vector<8x8xf32>
    %70 = arith.addf %67, %69 : vector<8x8xf32>
    %71 = vector.broadcast %5 : vector<1x8xf32> to vector<8x8xf32>
    %72 = arith.addf %70, %71 : vector<8x8xf32>
    %cst_36 = arith.constant dense<0xFF800000> : vector<8xf32>
    %73 = vector.multi_reduction <maximumf>, %72, %cst_36 [1] : vector<8x8xf32> to vector<8xf32>
    %74 = vector.shape_cast %73 : vector<8xf32> to vector<8x1xf32>
    %75 = vector.broadcast %74 : vector<8x1xf32> to vector<8x8xf32>
    %76 = arith.subf %72, %75 : vector<8x8xf32>
    %77 = math.exp %76 : vector<8x8xf32>
    %cst_37 = arith.constant dense<0.000000e+00> : vector<8xf32>
    %78 = vector.multi_reduction <add>, %77, %cst_37 [1] : vector<8x8xf32> to vector<8xf32>
    %79 = vector.shape_cast %78 : vector<8xf32> to vector<8x1xf32>
    %80 = tpu.reciprocal %79 : vector<8x1xf32> -> vector<8x1xf32>
    %81 = vector.broadcast %80 : vector<8x1xf32> to vector<8x8xf32>
    %82 = arith.mulf %77, %81 : vector<8x8xf32>
    %cst_38 = arith.constant dense<0.000000e+00> : vector<8x8xf32>
    %83 = tpu.matmul %82, %66, %cst_38 {dimension_numbers = #tpu.dot_dimension_numbers<[1], [0], [0], [1], [0, 0, 1, 1], [], []>, precision = #tpu.contract_precision<fp32>} : vector<8x8xf32>, vector<8x8xf32>, vector<8x8xf32> -> vector<8x8xf32>
    %84 = vector.extract_strided_slice %21 {offsets = [0, 24], sizes = [8, 8], strides = [1, 1]} : vector<8x32xf32> to vector<8x8xf32>
    %85 = vector.extract_strided_slice %23 {offsets = [0, 24], sizes = [8, 8], strides = [1, 1]} : vector<8x64xf32> to vector<8x8xf32>
    %86 = vector.extract_strided_slice %23 {offsets = [0, 56], sizes = [8, 8], strides = [1, 1]} : vector<8x64xf32> to vector<8x8xf32>
    %cst_39 = arith.constant dense<0.000000e+00> : vector<8x8xf32>
    %87 = tpu.matmul %84, %85, %cst_39 {dimension_numbers = #tpu.dot_dimension_numbers<[1], [1], [0], [0], [0, 0, 1, 0], [], []>, precision = #tpu.contract_precision<fp32>} : vector<8x8xf32>, vector<8x8xf32>, vector<8x8xf32> -> vector<8x8xf32>
    %c3 = arith.constant 3 : index
    %c0_40 = arith.constant 0 : index
    %c0_41 = arith.constant 0 : index
    %88 = vector.load %arg5[%c3, %c0_40, %c0_41] : memref<4x8x8xf32, #tpu.memory_space<vmem>>, vector<1x8x8xf32>
    %89 = vector.shape_cast %88 : vector<1x8x8xf32> to vector<8x8xf32>
    %90 = arith.addf %87, %89 : vector<8x8xf32>
    %91 = vector.broadcast %5 : vector<1x8xf32> to vector<8x8xf32>
    %92 = arith.addf %90, %91 : vector<8x8xf32>
    %cst_42 = arith.constant dense<0xFF800000> : vector<8xf32>
    %93 = vector.multi_reduction <maximumf>, %92, %cst_42 [1] : vector<8x8xf32> to vector<8xf32>
    %94 = vector.shape_cast %93 : vector<8xf32> to vector<8x1xf32>
    %95 = vector.broadcast %94 : vector<8x1xf32> to vector<8x8xf32>
    %96 = arith.subf %92, %95 : vector<8x8xf32>
    %97 = math.exp %96 : vector<8x8xf32>
    %cst_43 = arith.constant dense<0.000000e+00> : vector<8xf32>
    %98 = vector.multi_reduction <add>, %97, %cst_43 [1] : vector<8x8xf32> to vector<8xf32>
    %99 = vector.shape_cast %98 : vector<8xf32> to vector<8x1xf32>
    %100 = tpu.reciprocal %99 : vector<8x1xf32> -> vector<8x1xf32>
    %101 = vector.broadcast %100 : vector<8x1xf32> to vector<8x8xf32>
    %102 = arith.mulf %97, %101 : vector<8x8xf32>
    %cst_44 = arith.constant dense<0.000000e+00> : vector<8x8xf32>
    %103 = tpu.matmul %102, %86, %cst_44 {dimension_numbers = #tpu.dot_dimension_numbers<[1], [0], [0], [1], [0, 0, 1, 1], [], []>, precision = #tpu.contract_precision<fp32>} : vector<8x8xf32>, vector<8x8xf32>, vector<8x8xf32> -> vector<8x8xf32>
    %104 = tpu.concatenate %43, %63, %83, %103 in 1 : vector<8x8xf32>, vector<8x8xf32>, vector<8x8xf32>, vector<8x8xf32> -> vector<8x32xf32>
    %c0_45 = arith.constant 0 : index
    %c0_46 = arith.constant 0 : index
    %105 = vector.load %arg9[%c0_45, %c0_46] : memref<32x32xf32, #tpu.memory_space<vmem>>, vector<32x32xf32>
    %cst_47 = arith.constant dense<0.000000e+00> : vector<8x32xf32>
    %106 = tpu.matmul %104, %105, %cst_47 {dimension_numbers = #tpu.dot_dimension_numbers<[1], [0], [0], [1], [0, 0, 1, 1], [], []>, precision = #tpu.contract_precision<fp32>} : vector<8x32xf32>, vector<32x32xf32>, vector<8x32xf32> -> vector<8x32xf32>
    %107 = arith.addf %106, %1 : vector<8x32xf32>
    %c0_48 = arith.constant 0 : index
    %c0_49 = arith.constant 0 : index
    %c0_50 = arith.constant 0 : index
    %c0_51 = arith.constant 0 : index
    %108 = vector.load %arg10[%c0_48, %c0_49, %c0_50, %c0_51] : memref<1x1x8x32xf32, #tpu.memory_space<vmem>>, vector<1x1x8x32xf32>
    %109 = vector.shape_cast %108 : vector<1x1x8x32xf32> to vector<8x32xf32>
    %110 = vector.shape_cast %107 : vector<8x32xf32> to vector<1x1x8x32xf32>
    tpu.vector_store %arg10[%c0_48, %c0_49, %c0_50, %c0_51], %110 {strides = array<i32>} : memref<1x1x8x32xf32, #tpu.memory_space<vmem>>, vector<1x1x8x32xf32>,
    %111 = vector.shape_cast %42 : vector<8x8xf32> to vector<1x8x8xf32>
    %112 = vector.shape_cast %62 : vector<8x8xf32> to vector<1x8x8xf32>
    %113 = vector.shape_cast %82 : vector<8x8xf32> to vector<1x8x8xf32>
    %114 = vector.shape_cast %102 : vector<8x8xf32> to vector<1x8x8xf32>
    %115 = tpu.concatenate %111, %112, %113, %114 in 0 : vector<1x8x8xf32>, vector<1x8x8xf32>, vector<1x8x8xf32>, vector<1x8x8xf32> -> vector<4x8x8xf32>
    %c0_52 = arith.constant 0 : index
    %c0_53 = arith.constant 0 : index
    %c0_54 = arith.constant 0 : index
    %c0_55 = arith.constant 0 : index
    %c0_56 = arith.constant 0 : index
    %116 = vector.load %arg11[%c0_52, %c0_53, %c0_54, %c0_55, %c0_56] : memref<1x1x4x8x8xf32, #tpu.memory_space<vmem>>, vector<1x1x4x8x8xf32>
    %117 = vector.shape_cast %116 : vector<1x1x4x8x8xf32> to vector<4x8x8xf32>
    %118 = vector.shape_cast %115 : vector<4x8x8xf32> to vector<1x1x4x8x8xf32>
    tpu.vector_store %arg11[%c0_52, %c0_53, %c0_54, %c0_55, %c0_56], %118 {strides = array<i32>} : memref<1x1x4x8x8xf32, #tpu.memory_space<vmem>>, vector<1x1x4x8x8xf32>,
    return
  }
  func.func @transform_0(%arg0: i32, %arg1: i32) -> (i32, i32, i32) {
    %c0_i32 = arith.constant 0 : i32
    %c0_i32_0 = arith.constant 0 : i32
    %c0_i32_1 = arith.constant 0 : i32
    return %arg0, %c0_i32, %c0_i32_0 : i32, i32, i32
  }
  func.func @transform_1(%arg0: i32, %arg1: i32) -> (i32, i32, i32, i32) {
    %c0_i32 = arith.constant 0 : i32
    %c0_i32_0 = arith.constant 0 : i32
    %c0_i32_1 = arith.constant 0 : i32
    return %arg0, %arg1, %c0_i32, %c0_i32_0 : i32, i32, i32, i32
  }
  func.func @transform_2(%arg0: i32, %arg1: i32) -> (i32, i32, i32, i32) {
    %c0_i32 = arith.constant 0 : i32
    %c0_i32_0 = arith.constant 0 : i32
    %c0_i32_1 = arith.constant 0 : i32
    return %arg0, %arg1, %c0_i32, %c0_i32_0 : i32, i32, i32, i32
  }
  func.func @transform_3(%arg0: i32, %arg1: i32) -> (i32, i32, i32) {
    %c0_i32 = arith.constant 0 : i32
    %c0_i32_0 = arith.constant 0 : i32
    %c0_i32_1 = arith.constant 0 : i32
    %c0_i32_2 = arith.constant 0 : i32
    return %c0_i32, %c0_i32_0, %c0_i32_1 : i32, i32, i32
  }
  func.func @transform_4(%arg0: i32, %arg1: i32) -> (i32, i32) {
    %c0_i32 = arith.constant 0 : i32
    %c0_i32_0 = arith.constant 0 : i32
    %c0_i32_1 = arith.constant 0 : i32
    return %c0_i32, %c0_i32_0 : i32, i32
  }
  func.func @transform_5(%arg0: i32, %arg1: i32) -> (i32, i32) {
    %c0_i32 = arith.constant 0 : i32
    %c0_i32_0 = arith.constant 0 : i32
    %c0_i32_1 = arith.constant 0 : i32
    return %c0_i32, %c0_i32_0 : i32, i32
  }
  func.func @transform_6(%arg0: i32, %arg1: i32) -> (i32, i32) {
    %c0_i32 = arith.constant 0 : i32
    %c0_i32_0 = arith.constant 0 : i32
    %c0_i32_1 = arith.constant 0 : i32
    return %c0_i32, %c0_i32_0 : i32, i32
  }
  func.func @transform_7(%arg0: i32, %arg1: i32) -> (i32, i32) {
    %c0_i32 = arith.constant 0 : i32
    %c0_i32_0 = arith.constant 0 : i32
    %c0_i32_1 = arith.constant 0 : i32
    return %c0_i32, %c0_i32_0 : i32, i32
  }
  func.func @transform_8(%arg0: i32, %arg1: i32) -> (i32, i32, i32, i32) {
    %c0_i32 = arith.constant 0 : i32
    %c0_i32_0 = arith.constant 0 : i32
    %c0_i32_1 = arith.constant 0 : i32
    return %arg0, %arg1, %c0_i32, %c0_i32_0 : i32, i32, i32, i32
  }
  func.func @transform_9(%arg0: i32, %arg1: i32) -> (i32, i32, i32, i32, i32) {
    %c0_i32 = arith.constant 0 : i32
    %c0_i32_0 = arith.constant 0 : i32
    %c0_i32_1 = arith.constant 0 : i32
    %c0_i32_2 = arith.constant 0 : i32
    return %arg0, %arg1, %c0_i32, %c0_i32_0, %c0_i32_1 : i32, i32, i32, i32, i32
  }
}

</mosaic_0001>

<llo_original>
// kernel: tpu_custom_call.1
$region0: #{tpu_custom_call.1}
  #allocation0 [shape = 'u32[]', space=smem, size = 0x4, offset = 0x4, fixed_abs, tag = 'smem constant byte address 0x4 - core index']
  #allocation1 [shape = 'u32[144,128]{1,0:T(1,128)}', space=vmem, size = 0x12000, scoped, tag = 'internal scratch']
  %s0 = inlined_call_operand.hbm [shape: f32[2,8,32], index: 0, kind: input, shape index: {}]
  %s1 = inlined_call_operand.hbm [shape: f32[2,1,8,32], index: 1, kind: input, shape index: {}]
  %s2 = inlined_call_operand.vmem [shape: f32[2,1,1,8], index: 2, kind: input, shape index: {}]
  %s3 = inlined_call_operand.hbm [shape: f32[4,8,8], index: 3, kind: input, shape index: {}]
  %s4 = inlined_call_operand.vmem [shape: f32[1,32], index: 4, kind: input, shape index: {}]
  %s5 = inlined_call_operand.hbm [shape: f32[32,32], index: 5, kind: input, shape index: {}]
  %s6 = inlined_call_operand.hbm [shape: f32[32,64], index: 6, kind: input, shape index: {}]
  %s7 = inlined_call_operand.hbm [shape: f32[32,32], index: 7, kind: input, shape index: {}]
  %s8 = inlined_call_operand.hbm [shape: f32[2,1,8,32], index: 8, kind: output, shape index: {0}]
  %s9 = inlined_call_operand.hbm [shape: f32[2,1,4,8,8], index: 9, kind: output, shape index: {1}]
  %10 = xla_tuple %s8, %s9
  %s11 = sld [smem:[#allocation0]]
  $region97: #{tpu_custom_call.1} parent=0
    _
  %s13 = ssub.s32 1, %s11
  %s14 = scalar_select 0, %s13, %s11
  $region1: #{tpu_custom_call.1} parent=0
    #allocation2 [shape = 'u8[8192]{0}', space=vmem, size = 0x2000, scoped, tag = 'input window, operand 0']
    #allocation3 [shape = 's32[2]{0}', space=sflag, size = 0x8, scoped, tag = 'scoped memory for tpu_custom_call.1']
    #allocation4 [shape = 's32[2]{0}', space=sflag, size = 0x8, scoped, tag = 'scoped memory for tpu_custom_call.1']
    #allocation5 [shape = 'u8[8192]{0}', space=vmem, size = 0x2000, scoped, tag = 'input window, operand 1']
    #allocation6 [shape = 's32[2]{0}', space=sflag, size = 0x8, scoped, tag = 'scoped memory for tpu_custom_call.1']
    #allocation7 [shape = 'u8[16384]{0}', space=vmem, size = 0x4000, scoped, tag = 'input window, operand 3, single buffered']
    #allocation8 [shape = 'u8[16384]{0}', space=vmem, size = 0x4000, scoped, tag = 'input window, operand 5, single buffered']
    #allocation9 [shape = 's32[1]{0}', space=sflag, size = 0x4, scoped, tag = 'scoped memory for tpu_custom_call.1']
    #allocation10 [shape = 'u8[16384]{0}', space=vmem, size = 0x4000, scoped, tag = 'input window, operand 6, single buffered']
    #allocation11 [shape = 'u8[16384]{0}', space=vmem, size = 0x4000, scoped, tag = 'input window, operand 7, single buffered']
    #allocation12 [shape = 's32[1]{0}', space=sflag, size = 0x4, scoped, tag = 'scoped memory for tpu_custom_call.1']
    #allocation13 [shape = 'u8[8192]{0}', space=vmem, size = 0x2000, scoped, tag = 'output window, operand 0']
    #allocation14 [shape = 'u8[32768]{0}', space=vmem, size = 0x8000, scoped, tag = 'output window, operand 1']
    #allocation15 [shape = 's32[2]{0}', space=sflag, size = 0x8, scoped, tag = 'scoped memory for tpu_custom_call.1']
    %15 = vsyncpa [#allocation3], 0
    %s16 = scalar_lea.sflag [#allocation3], 1
    %17 = vsyncpa %s16, 0
    %18 = vsyncpa [#allocation6], 0
    %s19 = scalar_lea.sflag [#allocation6], 1
    %20 = vsyncpa %s19, 0
    %21 = vsyncpa [#allocation9], 0
    %22 = vsyncpa [#allocation12], 0
    %23 = vsyncpa [#allocation4], 0
    %s24 = scalar_lea.sflag [#allocation4], 1
    %25 = vsyncpa %s24, 0
    %26 = vsyncpa [#allocation15], 0
    %s27 = scalar_lea.sflag [#allocation15], 1
    %28 = vsyncpa %s27, 0
    loop: start=0, step=1, limit=4
    $region2: #{tpu_custom_call.1} parent=1 // loop_pre_header
      _
    $region3: #{tpu_custom_call.1} parent=1 // loop_header
      %s30 = sphi 0, %s34
      %p31 = scmp.ge.s32.totalorder %s30, 4
      %s37 = sphi 0, %s49
      %s38 = sphi 0, %s45
      %s39 = sphi 0, %s37
      %s40 = sphi 0, %s38
      %s41 = sphi 0, %s39
      %s42 = sphi 0, %s40
      %s52 = sphi 0, %s54
      %s55 = sphi 0, %s52
      %s56 = sphi 0, %s55
      %s72 = sphi 0, %s56
      %s80 = sphi 0, %s82
      %s83 = sphi 0, %s80
      %s84 = sphi 0, %s83
      %s100 = sphi 0, %s84
      %s108 = sphi 0, %s110
      %s111 = sphi 0, %s108
      %s112 = sphi 0, %s111
      %s128 = sphi 0, %s112
      %s132 = sphi 0, %s132
      %s134 = sphi 0, %s132
      %s135 = sphi 0, %s134
      %s149 = sphi 0, %s135
      %s153 = sphi 0, %s153
      %s155 = sphi 0, %s153
      %s156 = sphi 0, %s155
      %s170 = sphi 0, %s156
      %s174 = sphi 0, %s174
      %s176 = sphi 0, %s174
      %s177 = sphi 0, %s176
      %s191 = sphi 0, %s177
      %s195 = sphi 0, %s195
      %s197 = sphi 0, %s195
      %s198 = sphi 0, %s197
      %s212 = sphi 0, %s198
      %s216 = sphi 0, %s216
      %s218 = sphi 0, %s216
      %s219 = sphi 0, %s218
      %s233 = sphi 0, %s219
      %s241 = sphi 0, %s243
      %s244 = sphi 0, %s241
      %s245 = sphi 0, %s244
      %s261 = sphi 0, %s245
      %s269 = sphi 0, %s271
      %s272 = sphi 0, %s269
      %s273 = sphi 0, %s272
      %s289 = sphi 0, %s273
    $region4: #{tpu_custom_call.1} parent=1 // loop_header_branch
      %33 = sbr.rel (%p31) target = $region8
    $region5: #{tpu_custom_call.1} parent=1 // loop_body
      %s35 = ssub.s32 %s30, 1
      %s36 = ssub.s32 %s30, 2
      %s43 = sadd.s32 1, %s38
      %p44 = scmp.ge.s32.totalorder %s43, 1
      %s45 = scalar_select %p44, 0, %s43
      %s46 = sadd.s32 1, %s37
      %s47 = scalar_select %p44, %s46, %s37
      %p48 = scmp.ge.s32.totalorder %s47, 2
      %s49 = scalar_select %p48, 0, %s47
      %s50 = ssub.s32 %s37, %s49
      %p51 = scmp.eq.s32.totalorder %s50, 0
      %s53 = sadd.s32 %s52, 1
      %s54 = scalar_select %p51, %s52, %s53
      %p57 = pneg %p51
      %p58 = scmp.eq.s32.totalorder %s30, 1
      %p59 = por %p57, %p58
      %p60 = scmp.ne.s32.totalorder %s52, %s55
      %p61 = scmp.eq.s32.totalorder %s30, 0
      %p62 = por %p60, %p61
      %p63 = scmp.ne.s32.totalorder %s52, %s55
      %p64 = scmp.eq.s32.totalorder %s35, 1
      %p65 = por %p63, %p64
      %p66 = scmp.ne.s32.totalorder %s55, %s56
      %p67 = scmp.eq.s32.totalorder %s35, 0
      %p68 = por %p66, %p67
      %p69 = scmp.ne.s32.totalorder %s55, %s56
      %p70 = scmp.eq.s32.totalorder %s36, 1
      %p71 = por %p69, %p70
      %p73 = scmp.ne.s32.totalorder %s56, %s72
      %p74 = scmp.eq.s32.totalorder %s36, 0
      %p75 = por %p73, %p74
      %s76 = ssub.s32 %s37, %s49
      %s77 = ssub.s32 %s38, %s45
      %s78 = sor.u32 %s76, %s77
      %p79 = scmp.eq.s32.totalorder %s78, 0
      %s81 = sadd.s32 %s80, 1
      %s82 = scalar_select %p79, %s80, %s81
      %p85 = pneg %p79
      %p86 = scmp.eq.s32.totalorder %s30, 1
      %p87 = por %p85, %p86
      %p88 = scmp.ne.s32.totalorder %s80, %s83
      %p89 = scmp.eq.s32.totalorder %s30, 0
      %p90 = por %p88, %p89
      %p91 = scmp.ne.s32.totalorder %s80, %s83
      %p92 = scmp.eq.s32.totalorder %s35, 1
      %p93 = por %p91, %p92
      %p94 = scmp.ne.s32.totalorder %s83, %s84
      %p95 = scmp.eq.s32.totalorder %s35, 0
      %p96 = por %p94, %p95
      %p97 = scmp.ne.s32.totalorder %s83, %s84
      %p98 = scmp.eq.s32.totalorder %s36, 1
      %p99 = por %p97, %p98
      %p101 = scmp.ne.s32.totalorder %s84, %s100
      %p102 = scmp.eq.s32.totalorder %s36, 0
      %p103 = por %p101, %p102
      %s104 = ssub.s32 %s37, %s49
      %s105 = ssub.s32 %s38, %s45
      %s106 = sor.u32 %s104, %s105
      %p107 = scmp.eq.s32.totalorder %s106, 0
      %s109 = sadd.s32 %s108, 1
      %s110 = scalar_select %p107, %s108, %s109
      %p113 = pneg %p107
      %p114 = scmp.eq.s32.totalorder %s30, 1
      %p115 = por %p113, %p114
      %p116 = scmp.ne.s32.totalorder %s108, %s111
      %p117 = scmp.eq.s32.totalorder %s30, 0
      %p118 = por %p116, %p117
      %p119 = scmp.ne.s32.totalorder %s108, %s111
      %p120 = scmp.eq.s32.totalorder %s35, 1
      %p121 = por %p119, %p120
      %p122 = scmp.ne.s32.totalorder %s111, %s112
      %p123 = scmp.eq.s32.totalorder %s35, 0
      %p124 = por %p122, %p123
      %p125 = scmp.ne.s32.totalorder %s111, %s112
      %p126 = scmp.eq.s32.totalorder %s36, 1
      %p127 = por %p125, %p126
      %p129 = scmp.ne.s32.totalorder %s112, %s128
      %p130 = scmp.eq.s32.totalorder %s36, 0
      %p131 = por %p129, %p130
      %s133 = sadd.s32 %s132, 1
      %p136 = scmp.eq.s32.totalorder %s30, 1
      %p137 = scmp.ne.s32.totalorder %s132, %s134
      %p138 = scmp.eq.s32.totalorder %s30, 0
      %p139 = por %p137, %p138
      %p140 = scmp.ne.s32.totalorder %s132, %s134
      %p141 = scmp.eq.s32.totalorder %s35, 1
      %p142 = por %p140, %p141
      %p143 = scmp.ne.s32.totalorder %s134, %s135
      %p144 = scmp.eq.s32.totalorder %s35, 0
      %p145 = por %p143, %p144
      %p146 = scmp.ne.s32.totalorder %s134, %s135
      %p147 = scmp.eq.s32.totalorder %s36, 1
      %p148 = por %p146, %p147
      %p150 = scmp.ne.s32.totalorder %s135, %s149
      %p151 = scmp.eq.s32.totalorder %s36, 0
      %p152 = por %p150, %p151
      %s154 = sadd.s32 %s153, 1
      %p157 = scmp.eq.s32.totalorder %s30, 1
      %p158 = scmp.ne.s32.totalorder %s153, %s155
      %p159 = scmp.eq.s32.totalorder %s30, 0
      %p160 = por %p158, %p159
      %p161 = scmp.ne.s32.totalorder %s153, %s155
      %p162 = scmp.eq.s32.totalorder %s35, 1
      %p163 = por %p161, %p162
      %p164 = scmp.ne.s32.totalorder %s155, %s156
      %p165 = scmp.eq.s32.totalorder %s35, 0
      %p166 = por %p164, %p165
      %p167 = scmp.ne.s32.totalorder %s155, %s156
      %p168 = scmp.eq.s32.totalorder %s36, 1
      %p169 = por %p167, %p168
      %p171 = scmp.ne.s32.totalorder %s156, %s170
      %p172 = scmp.eq.s32.totalorder %s36, 0
      %p173 = por %p171, %p172
      %s175 = sadd.s32 %s174, 1
      %p178 = scmp.eq.s32.totalorder %s30, 1
      %p179 = scmp.ne.s32.totalorder %s174, %s176
      %p180 = scmp.eq.s32.totalorder %s30, 0
      %p181 = por %p179, %p180
      %p182 = scmp.ne.s32.totalorder %s174, %s176
      %p183 = scmp.eq.s32.totalorder %s35, 1
      %p184 = por %p182, %p183
      %p185 = scmp.ne.s32.totalorder %s176, %s177
      %p186 = scmp.eq.s32.totalorder %s35, 0
      %p187 = por %p185, %p186
      %p188 = scmp.ne.s32.totalorder %s176, %s177
      %p189 = scmp.eq.s32.totalorder %s36, 1
      %p190 = por %p188, %p189
      %p192 = scmp.ne.s32.totalorder %s177, %s191
      %p193 = scmp.eq.s32.totalorder %s36, 0
      %p194 = por %p192, %p193
      %s196 = sadd.s32 %s195, 1
      %p199 = scmp.eq.s32.totalorder %s30, 1
      %p200 = scmp.ne.s32.totalorder %s195, %s197
      %p201 = scmp.eq.s32.totalorder %s30, 0
      %p202 = por %p200, %p201
      %p203 = scmp.ne.s32.totalorder %s195, %s197
      %p204 = scmp.eq.s32.totalorder %s35, 1
      %p205 = por %p203, %p204
      %p206 = scmp.ne.s32.totalorder %s197, %s198
      %p207 = scmp.eq.s32.totalorder %s35, 0
      %p208 = por %p206, %p207
      %p209 = scmp.ne.s32.totalorder %s197, %s198
      %p210 = scmp.eq.s32.totalorder %s36, 1
      %p211 = por %p209, %p210
      %p213 = scmp.ne.s32.totalorder %s198, %s212
      %p214 = scmp.eq.s32.totalorder %s36, 0
      %p215 = por %p213, %p214
      %s217 = sadd.s32 %s216, 1
      %p220 = scmp.eq.s32.totalorder %s30, 1
      %p221 = scmp.ne.s32.totalorder %s216, %s218
      %p222 = scmp.eq.s32.totalorder %s30, 0
      %p223 = por %p221, %p222
      %p224 = scmp.ne.s32.totalorder %s216, %s218
      %p225 = scmp.eq.s32.totalorder %s35, 1
      %p226 = por %p224, %p225
      %p227 = scmp.ne.s32.totalorder %s218, %s219
      %p228 = scmp.eq.s32.totalorder %s35, 0
      %p229 = por %p227, %p228
      %p230 = scmp.ne.s32.totalorder %s218, %s219
      %p231 = scmp.eq.s32.totalorder %s36, 1
      %p232 = por %p230, %p231
      %p234 = scmp.ne.s32.totalorder %s219, %s233
      %p235 = scmp.eq.s32.totalorder %s36, 0
      %p236 = por %p234, %p235
      %s237 = ssub.s32 %s37, %s49
      %s238 = ssub.s32 %s38, %s45
      %s239 = sor.u32 %s237, %s238
      %p240 = scmp.eq.s32.totalorder %s239, 0
      %s242 = sadd.s32 %s241, 1
      %s243 = scalar_select %p240, %s241, %s242
      %p246 = pneg %p240
      %p247 = scmp.eq.s32.totalorder %s30, 1
      %p248 = por %p246, %p247
      %p249 = scmp.ne.s32.totalorder %s241, %s244
      %p250 = scmp.eq.s32.totalorder %s30, 0
      %p251 = por %p249, %p250
      %p252 = scmp.ne.s32.totalorder %s241, %s244
      %p253 = scmp.eq.s32.totalorder %s35, 1
      %p254 = por %p252, %p253
      %p255 = scmp.ne.s32.totalorder %s244, %s245
      %p256 = scmp.eq.s32.totalorder %s35, 0
      %p257 = por %p255, %p256
      %p258 = scmp.ne.s32.totalorder %s244, %s245
      %p259 = scmp.eq.s32.totalorder %s36, 1
      %p260 = por %p258, %p259
      %p262 = scmp.ne.s32.totalorder %s245, %s261
      %p263 = scmp.eq.s32.totalorder %s36, 0
      %p264 = por %p262, %p263
      %s265 = ssub.s32 %s37, %s49
      %s266 = ssub.s32 %s38, %s45
      %s267 = sor.u32 %s265, %s266
      %p268 = scmp.eq.s32.totalorder %s267, 0
      %s270 = sadd.s32 %s269, 1
      %s271 = scalar_select %p268, %s269, %s270
      %p274 = pneg %p268
      %p275 = scmp.eq.s32.totalorder %s30, 1
      %p276 = por %p274, %p275
      %p277 = scmp.ne.s32.totalorder %s269, %s272
      %p278 = scmp.eq.s32.totalorder %s30, 0
      %p279 = por %p277, %p278
      %p280 = scmp.ne.s32.totalorder %s269, %s272
      %p281 = scmp.eq.s32.totalorder %s35, 1
      %p282 = por %p280, %p281
      %p283 = scmp.ne.s32.totalorder %s272, %s273
      %p284 = scmp.eq.s32.totalorder %s35, 0
      %p285 = por %p283, %p284
      %p286 = scmp.ne.s32.totalorder %s272, %s273
      %p287 = scmp.eq.s32.totalorder %s36, 1
      %p288 = por %p286, %p287
      %p290 = scmp.ne.s32.totalorder %s273, %s289
      %p291 = scmp.eq.s32.totalorder %s36, 0
      %p292 = por %p290, %p291
      %p293 = scmp.le.s32.totalorder 1, %s30
      %p294 = scmp.lt.s32.totalorder %s30, 3
      %p295 = pnand %p293, %p294
      %p296 = pneg %p295
      // Predicated region
      $region9: #{tpu_custom_call.1} parent=5 // pred_check
        _
      $region10: #{tpu_custom_call.1} parent=5 // pred_check_branch
        %298 = sbr.rel (%p295) target = $region12
      $region11: #{tpu_custom_call.1} parent=5 // pred_region
        %s299 = ssub.s32 %s30, 1
        // Predicated region
        $region13: #{tpu_custom_call.1} parent=11 // pred_check
          %p300 = pneg %p145
        $region14: #{tpu_custom_call.1} parent=11 // pred_check_branch
          %302 = sbr.rel (%p300) target = $region16
        $region15: #{tpu_custom_call.1} parent=11 // pred_region
          %s304 = ssub.s32 512, 512
          %305 = vsyncadd [#allocation6], %s304
          %s306 = sshll.u32 [#allocation7], 4
          %s307 = int_to_ptr.vmem [resolvable:$true] %s306
          %312 = dma.hbm_to_vmem [thread:$0]  %s3, 512, %s307, [#allocation6], 128, 128, 8
        $region16: #{tpu_custom_call.1} parent=11 // pred_fallthru
          _
        // Predicated region
        $region17: #{tpu_custom_call.1} parent=11 // pred_check
          %p313 = pneg %p166
        $region18: #{tpu_custom_call.1} parent=11 // pred_check_branch
          %315 = sbr.rel (%p313) target = $region20
        $region19: #{tpu_custom_call.1} parent=11 // pred_region
          _
        $region20: #{tpu_custom_call.1} parent=11 // pred_fallthru
          _
        // Predicated region
        $region21: #{tpu_custom_call.1} parent=11 // pred_check
          %p316 = pneg %p187
        $region22: #{tpu_custom_call.1} parent=11 // pred_check_branch
          %318 = sbr.rel (%p316) target = $region24
        $region23: #{tpu_custom_call.1} parent=11 // pred_region
          %s320 = ssub.s32 512, 512
          %321 = vsyncadd [#allocation9], %s320
          %s322 = sshll.u32 [#allocation8], 4
          %s323 = int_to_ptr.vmem [resolvable:$true] %s322
          %328 = dma.hbm_to_vmem [thread:$0]  %s5, 512, %s323, [#allocation9], 128, 128, 8
        $region24: #{tpu_custom_call.1} parent=11 // pred_fallthru
          _
        // Predicated region
        $region25: #{tpu_custom_call.1} parent=11 // pred_check
          %p329 = pneg %p208
        $region26: #{tpu_custom_call.1} parent=11 // pred_check_branch
          %331 = sbr.rel (%p329) target = $region28
        $region27: #{tpu_custom_call.1} parent=11 // pred_region
          %s333 = ssub.s32 512, 512
          %334 = vsyncadd [#allocation9], %s333
          %s335 = sshll.u32 [#allocation10], 4
          %s336 = int_to_ptr.vmem [resolvable:$true] %s335
          %341 = dma.hbm_to_vmem [thread:$0]  %s6, 512, %s336, [#allocation9], 128, 128, 8
        $region28: #{tpu_custom_call.1} parent=11 // pred_fallthru
          _
        // Predicated region
        $region29: #{tpu_custom_call.1} parent=11 // pred_check
          %p342 = pneg %p229
        $region30: #{tpu_custom_call.1} parent=11 // pred_check_branch
          %344 = sbr.rel (%p342) target = $region32
        $region31: #{tpu_custom_call.1} parent=11 // pred_region
          %s346 = ssub.s32 512, 512
          %347 = vsyncadd [#allocation12], %s346
          %s348 = sshll.u32 [#allocation11], 4
          %s349 = int_to_ptr.vmem [resolvable:$true] %s348
          %354 = dma.hbm_to_vmem [thread:$0]  %s7, 512, %s349, [#allocation12], 128, 128, 8
        $region32: #{tpu_custom_call.1} parent=11 // pred_fallthru
          _
      $region12: #{tpu_custom_call.1} parent=5 // pred_fallthru
        _
      %p355 = scmp.lt.s32.totalorder %s30, 2
      // Predicated region
      $region33: #{tpu_custom_call.1} parent=5 // pred_check
        %p356 = pneg %p355
      $region34: #{tpu_custom_call.1} parent=5 // pred_check_branch
        %358 = sbr.rel (%p356) target = $region36
      $region35: #{tpu_custom_call.1} parent=5 // pred_region
        // Predicated region
        $region37: #{tpu_custom_call.1} parent=35 // pred_check
          %p359 = pneg %p62
        $region38: #{tpu_custom_call.1} parent=35 // pred_check_branch
          %361 = sbr.rel (%p359) target = $region40
        $region39: #{tpu_custom_call.1} parent=35 // pred_region
          %s362 = sand.u32 %s52, 1
          %s363 = scalar_lea.sflag [#allocation3], %s362
          %s364 = sand.u32 %s52, 1
          %s365 = smul.addr %s364, 8
          %s366 = scalar_lea.vmem [#allocation2], %s365
          %s368 = ssub.s32 128, 128
          %369 = vsyncadd %s363, %s368
          %s370 = smul.addr %s37, 128
          %s371 = scalar_lea.hbm %s0, %s370
          %s373 = sshll.u32 %s366, 4
          %s374 = int_to_ptr.vmem [resolvable:$true] %s373
          %376 = dma.hbm_to_vmem [thread:$0]  %s371, 128, %s374, %s363
        $region40: #{tpu_custom_call.1} parent=35 // pred_fallthru
          _
        // Predicated region
        $region41: #{tpu_custom_call.1} parent=35 // pred_check
          %p377 = pneg %p90
        $region42: #{tpu_custom_call.1} parent=35 // pred_check_branch
          %379 = sbr.rel (%p377) target = $region44
        $region43: #{tpu_custom_call.1} parent=35 // pred_region
          %s380 = sand.u32 %s30, 1
          %s381 = scalar_lea.sflag [#allocation6], %s380
          %s382 = sand.u32 %s80, 1
          %s383 = smul.addr %s382, 8
          %s384 = scalar_lea.vmem [#allocation5], %s383
          %s386 = ssub.s32 128, 128
          %387 = vsyncadd %s381, %s386
          %s388 = sadd.s32 %s38, %s37
          %s389 = smul.addr %s388, 128
          %s390 = scalar_lea.hbm %s1, %s389
          %s392 = sshll.u32 %s384, 4
          %s393 = int_to_ptr.vmem [resolvable:$true] %s392
          %395 = dma.hbm_to_vmem [thread:$0]  %s390, 128, %s393, %s381
        $region44: #{tpu_custom_call.1} parent=35 // pred_fallthru
          _
        // Predicated region
        $region45: #{tpu_custom_call.1} parent=35 // pred_check
          %p396 = pneg %p118
        $region46: #{tpu_custom_call.1} parent=35 // pred_check_branch
          %398 = sbr.rel (%p396) target = $region48
        $region47: #{tpu_custom_call.1} parent=35 // pred_region
          %p399 = scmp.lt.s32.totalorder %s37, 1
          %s400 = scalar_select %p399, %s37, 1
          %p401 = scmp.lt.s32.totalorder %s38, 0
          %s402 = scalar_select %p401, %s38, 0
          %s403 = sadd.s32 %s402, %s400
          %s404 = scalar_lea.vmem %s2, %s403
        $region48: #{tpu_custom_call.1} parent=35 // pred_fallthru
          _
      $region36: #{tpu_custom_call.1} parent=5 // pred_fallthru
        _
      %p405 = scmp.le.s32.totalorder 1, %s30
      %p406 = scmp.lt.s32.totalorder %s30, 3
      %p407 = pnand %p405, %p406
      %p408 = pneg %p407
      // Predicated region
      $region49: #{tpu_custom_call.1} parent=5 // pred_check
        _
      $region50: #{tpu_custom_call.1} parent=5 // pred_check_branch
        %410 = sbr.rel (%p407) target = $region52
      $region51: #{tpu_custom_call.1} parent=5 // pred_region
        %s411 = ssub.s32 %s30, 1
        %s412 = sand.u32 %s55, 1
        %s413 = scalar_lea.sflag [#allocation3], %s412
        %s414 = sand.u32 %s55, 1
        %s415 = smul.addr %s414, 8
        %s416 = scalar_lea.vmem [#allocation2], %s415
        // Predicated region
        $region53: #{tpu_custom_call.1} parent=51 // pred_check
          %p417 = pneg %p68
        $region54: #{tpu_custom_call.1} parent=51 // pred_check_branch
          %419 = sbr.rel (%p417) target = $region56
        $region55: #{tpu_custom_call.1} parent=51 // pred_region
          %420 = dma.done %s413, 128
        $region56: #{tpu_custom_call.1} parent=51 // pred_fallthru
          _
        %s421 = sand.u32 %s35, 1
        %s422 = scalar_lea.sflag [#allocation6], %s421
        %s423 = sand.u32 %s83, 1
        %s424 = smul.addr %s423, 8
        %s425 = scalar_lea.vmem [#allocation5], %s424
        // Predicated region
        $region57: #{tpu_custom_call.1} parent=51 // pred_check
          %p426 = pneg %p96
        $region58: #{tpu_custom_call.1} parent=51 // pred_check_branch
          %428 = sbr.rel (%p426) target = $region60
        $region59: #{tpu_custom_call.1} parent=51 // pred_region
          %429 = dma.done %s422, 128
        $region60: #{tpu_custom_call.1} parent=51 // pred_fallthru
          _
        // Predicated region
        $region61: #{tpu_custom_call.1} parent=51 // pred_check
          %p430 = pneg %p145
        $region62: #{tpu_custom_call.1} parent=51 // pred_check_branch
          %432 = sbr.rel (%p430) target = $region64
        $region63: #{tpu_custom_call.1} parent=51 // pred_region
          %433 = dma.done [#allocation6], 512
        $region64: #{tpu_custom_call.1} parent=51 // pred_fallthru
          _
        // Predicated region
        $region65: #{tpu_custom_call.1} parent=51 // pred_check
          %p434 = pneg %p187
        $region66: #{tpu_custom_call.1} parent=51 // pred_check_branch
          %436 = sbr.rel (%p434) target = $region68
        $region67: #{tpu_custom_call.1} parent=51 // pred_region
          %437 = dma.done [#allocation9], 512
        $region68: #{tpu_custom_call.1} parent=51 // pred_fallthru
          _
        // Predicated region
        $region69: #{tpu_custom_call.1} parent=51 // pred_check
          %p438 = pneg %p208
        $region70: #{tpu_custom_call.1} parent=51 // pred_check_branch
          %440 = sbr.rel (%p438) target = $region72
        $region71: #{tpu_custom_call.1} parent=51 // pred_region
          %441 = dma.done [#allocation9], 512
        $region72: #{tpu_custom_call.1} parent=51 // pred_fallthru
          _
        // Predicated region
        $region73: #{tpu_custom_call.1} parent=51 // pred_check
          %p442 = pneg %p229
        $region74: #{tpu_custom_call.1} parent=51 // pred_check_branch
          %444 = sbr.rel (%p442) target = $region76
        $region75: #{tpu_custom_call.1} parent=51 // pred_region
          %445 = dma.done [#allocation12], 512
        $region76: #{tpu_custom_call.1} parent=51 // pred_fallthru
          _
        %s446 = sand.u32 %s55, 1
        %s447 = scalar_lea.sflag [#allocation3], %s446
        %s448 = sand.u32 %s55, 1
        %s449 = smul.addr %s448, 8
        %s450 = scalar_lea.vmem [#allocation2], %s449
        %p451 = pneg %p68
        %p452 = pneg %p65
        %s453 = sand.u32 %s35, 1
        %s454 = scalar_lea.sflag [#allocation6], %s453
        %s455 = sand.u32 %s83, 1
        %s456 = smul.addr %s455, 8
        %s457 = scalar_lea.vmem [#allocation5], %s456
        %p458 = pneg %p96
        %p459 = pneg %p93
        %p460 = scmp.lt.s32.totalorder %s39, 1
        %s461 = scalar_select %p460, %s39, 1
        %p462 = scmp.lt.s32.totalorder %s40, 0
        %s463 = scalar_select %p462, %s40, 0
        %s464 = sadd.s32 %s463, %s461
        %s465 = scalar_lea.vmem %s2, %s464
        %p466 = pneg %p124
        %p467 = pneg %p121
        %p468 = pneg %p145
        %p469 = pneg %p142
        %p470 = pneg %p166
        %p471 = pneg %p163
        %p472 = pneg %p187
        %p473 = pneg %p184
        %p474 = pneg %p208
        %p475 = pneg %p205
        %p476 = pneg %p229
        %p477 = pneg %p226
        %p478 = pneg %p257
        %p479 = pneg %p254
        %s480 = sand.u32 %s244, 1
        %s481 = scalar_lea.sflag [#allocation4], %s480
        %s482 = sand.u32 %s244, 1
        %s483 = smul.addr %s482, 8
        %s484 = scalar_lea.vmem [#allocation13], %s483
        %p485 = pneg %p285
        %p486 = pneg %p282
        %s487 = sand.u32 %s272, 1
        %s488 = scalar_lea.sflag [#allocation15], %s487
        %s489 = sand.u32 %s272, 1
        %s490 = smul.addr %s489, 32
        %s491 = scalar_lea.vmem [#allocation14], %s490
        %p492 = scmp.lt.s32.totalorder %s39, 1
        %s493 = scalar_select %p492, %s39, 1
        %p494 = scmp.lt.s32.totalorder %s40, 0
        %s495 = scalar_select %p494, %s40, 0
        %s496 = sadd.s32 %s495, %s493
        %s497 = scalar_lea.vmem %s2, %s496
        %v498 = vld [vmem:[%s416] sm:$0xff]
        %v499 = vld [vmem:[%s425] sm:$0xff]
        %v500 = vld [vmem:[%s497] sm:$0x1]
        %v501 = vld [vmem:[%s4] sm:$0x1]
        %v502 = vmul.f32 %v498, %v498
        %vm503 = vcmask 261120
        %v504 = vsel %vm503, %v502, 0.0
        %505 = vadd.xlane.f32.xlu0 %v504
        %v506 = vpop.xlane.xlu0 %505
        %v507 = vrsqrt.pop %v506
        %v508 = vmul.f32 %v506, %v507
        %vm509 = vcmp.eq.f32.partialorder %v506, inf
        %v510 = vsel %vm509, %v506, %v508
        %vm511 = vcmp.eq.f32.partialorder %v506, 0.0
        %v512 = vand.u32 %v506, 2147483648
        %v513 = vsel %vm511, %v512, %v510
        %v514 = vmul.f32 %v513, 0.17677669
        %v515 = vadd.f32 %v514, 1e-08
        %v516 = vrcp.pop %v515
        %v517 = vmul.f32 %v498, %v516
        %v519 = vlaneseq
        %v520 = vshrl.u32 %v519, 7
        %v521 = vsub.s32 0, %v520
        %v522 = vrot.slane %v501, %v521
        %v524 = vmul.f32 %v517, %v522
        %v525 = vld [vmem:[#allocation8] sm:$0xff]
        %v526 = vld [vmem:[#allocation8 + $0x8] sm:$0xff]
        %v527 = vld [vmem:[#allocation8 + $0x10] sm:$0xff]
        %v528 = vld [vmem:[#allocation8 + $0x18] sm:$0xff]
        %v530 = vsel %vm503, %v524, 0
        %532 = vmatprep.subr.mxu0 0.0
        %533 = vmatpush1.msra.mxu0 0.0
        %534 = vmatprep.subr.mxu0 0.0
        %535 = vmatpush1.msra.mxu0 0.0
        %536 = vmatprep.subr.mxu0 0.0
        %537 = vmatpush1.msra.mxu0 0.0
        %538 = vmatprep.subr.mxu0 0.0
        %539 = vmatpush1.msra.mxu0 0.0
        %540 = vmatprep.subr.mxu0 0.0
        %541 = vmatpush1.msra.mxu0 0.0
        %542 = vmatprep.subr.mxu0 0.0
        %543 = vmatpush1.msra.mxu0 0.0
        %544 = vmatprep.subr.mxu0 0.0
        %545 = vmatpush1.msra.mxu0 0.0
        %546 = vmatprep.subr.mxu0 0.0
        %547 = vmatpush1.msra.mxu0 0.0
        %548 = vmatprep.subr.mxu0 0.0
        %549 = vmatpush1.msra.mxu0 0.0
        %550 = vmatprep.subr.mxu0 0.0
        %551 = vmatpush1.msra.mxu0 0.0
        %552 = vmatprep.subr.mxu0 0.0
        %553 = vmatpush1.msra.mxu0 0.0
        %554 = vmatprep.subr.mxu0 0.0
        %555 = vmatpush1.msra.mxu0 0.0
        %556 = vmatprep.subr.mxu0 0.0
        %v557 = vand.u32 %v528, 4294901760
        %558 = vmatpush1.msra.mxu0 %v557
        %559 = vmatprep.subr.mxu0 0.0
        %v560 = vand.u32 %v527, 4294901760
        %561 = vmatpush1.msra.mxu0 %v560
        %562 = vmatprep.subr.mxu0 0.0
        %v563 = vand.u32 %v526, 4294901760
        %564 = vmatpush1.msra.mxu0 %v563
        %565 = vmatprep.subr.mxu0 0.0
        %v566 = vand.u32 %v525, 4294901760
        %567 = vmatpush1.msra.mxu0 %v566
        %568 = vmatprep.subr.mxu0 0.0
        %569 = vmatpush2.msra.mxu0 0.0
        %570 = vmatprep.subr.mxu0 0.0
        %571 = vmatpush2.msra.mxu0 0.0
        %572 = vmatprep.subr.mxu0 0.0
        %573 = vmatpush2.msra.mxu0 0.0
        %574 = vmatprep.subr.mxu0 0.0
        %575 = vmatpush2.msra.mxu0 0.0
        %576 = vmatprep.subr.mxu0 0.0
        %577 = vmatpush2.msra.mxu0 0.0
        %578 = vmatprep.subr.mxu0 0.0
        %579 = vmatpush2.msra.mxu0 0.0
        %580 = vmatprep.subr.mxu0 0.0
        %581 = vmatpush2.msra.mxu0 0.0
        %582 = vmatprep.subr.mxu0 0.0
        %583 = vmatpush2.msra.mxu0 0.0
        %584 = vmatprep.subr.mxu0 0.0
        %585 = vmatpush2.msra.mxu0 0.0
        %586 = vmatprep.subr.mxu0 0.0
        %587 = vmatpush2.msra.mxu0 0.0
        %588 = vmatprep.subr.mxu0 0.0
        %589 = vmatpush2.msra.mxu0 0.0
        %590 = vmatprep.subr.mxu0 0.0
        %591 = vmatpush2.msra.mxu0 0.0
        %592 = vmatprep.subr.mxu0 0.0
        %593 = vmatpush2.msra.mxu0 0.0
        %594 = vmatprep.subr.mxu0 0.0
        %595 = vmatpush2.msra.mxu0 0.0
        %596 = vmatprep.subr.mxu0 0.0
        %597 = vmatpush2.msra.mxu0 0.0
        %598 = vmatprep.subr.mxu0 0.0
        %599 = vmatpush2.msra.mxu0 0.0
        %600 = vmatprep.mubr.f32.mxu0 0.0
        %v601 = vand.u32 %v530, 4294901760
        %v602 = vsub.f32 %v530, %v601
        %v603 = vand.u32 %v602, 4294901760
        %v604 = vsub.f32 %v602, %v603
        %v605 = vand.u32 %v604, 4294901760
        %606 = vmatmul.mubr.f32.gmra.mxu0 %v605
        %v607 = vpop.f32.mrf.mxu0
        %v608 = vadd.f32 0.0, %v607
        %v609 = vpop.f32.mrf.mxu0
        %610 = vdwg.mxu0
        %611 = vmatprep.subr.mxu0 0.0
        %612 = vmatpush1.msra.mxu0 0.0
        %613 = vmatprep.subr.mxu0 0.0
        %614 = vmatpush1.msra.mxu0 0.0
        %615 = vmatprep.subr.mxu0 0.0
        %616 = vmatpush1.msra.mxu0 0.0
        %617 = vmatprep.subr.mxu0 0.0
        %618 = vmatpush1.msra.mxu0 0.0
        %619 = vmatprep.subr.mxu0 0.0
        %620 = vmatpush1.msra.mxu0 0.0
        %621 = vmatprep.subr.mxu0 0.0
        %622 = vmatpush1.msra.mxu0 0.0
        %623 = vmatprep.subr.mxu0 0.0
        %624 = vmatpush1.msra.mxu0 0.0
        %625 = vmatprep.subr.mxu0 0.0
        %626 = vmatpush1.msra.mxu0 0.0
        %627 = vmatprep.subr.mxu0 0.0
        %628 = vmatpush1.msra.mxu0 0.0
        %629 = vmatprep.subr.mxu0 0.0
        %630 = vmatpush1.msra.mxu0 0.0
        %631 = vmatprep.subr.mxu0 0.0
        %632 = vmatpush1.msra.mxu0 0.0
        %633 = vmatprep.subr.mxu0 0.0
        %634 = vmatpush1.msra.mxu0 0.0
        %635 = vmatprep.subr.mxu0 0.0
        %v636 = vand.u32 %v528, 4294901760
        %v637 = vsub.f32 %v528, %v636
        %v638 = vand.u32 %v637, 4294901760
        %v639 = vsub.f32 %v637, %v638
        %v640 = vand.u32 %v639, 4294901760
        %641 = vmatpush1.msra.mxu0 %v640
        %642 = vmatprep.subr.mxu0 0.0
        %v643 = vand.u32 %v527, 4294901760
        %v644 = vsub.f32 %v527, %v643
        %v645 = vand.u32 %v644, 4294901760
        %v646 = vsub.f32 %v644, %v645
        %v647 = vand.u32 %v646, 4294901760
        %648 = vmatpush1.msra.mxu0 %v647
        %649 = vmatprep.subr.mxu0 0.0
        %v650 = vand.u32 %v526, 4294901760
        %v651 = vsub.f32 %v526, %v650
        %v652 = vand.u32 %v651, 4294901760
        %v653 = vsub.f32 %v651, %v652
        %v654 = vand.u32 %v653, 4294901760
        %655 = vmatpush1.msra.mxu0 %v654
        %656 = vmatprep.subr.mxu0 0.0
        %v657 = vand.u32 %v525, 4294901760
        %v658 = vsub.f32 %v525, %v657
        %v659 = vand.u32 %v658, 4294901760
        %v660 = vsub.f32 %v658, %v659
        %v661 = vand.u32 %v660, 4294901760
        %662 = vmatpush1.msra.mxu0 %v661
        %663 = vmatprep.subr.mxu0 0.0
        %664 = vmatpush2.msra.mxu0 0.0
        %665 = vmatprep.subr.mxu0 0.0
        %666 = vmatpush2.msra.mxu0 0.0
        %667 = vmatprep.subr.mxu0 0.0
        %668 = vmatpush2.msra.mxu0 0.0
        %669 = vmatprep.subr.mxu0 0.0
        %670 = vmatpush2.msra.mxu0 0.0
        %671 = vmatprep.subr.mxu0 0.0
        %672 = vmatpush2.msra.mxu0 0.0
        %673 = vmatprep.subr.mxu0 0.0
        %674 = vmatpush2.msra.mxu0 0.0
        %675 = vmatprep.subr.mxu0 0.0
        %676 = vmatpush2.msra.mxu0 0.0
        %677 = vmatprep.subr.mxu0 0.0
        %678 = vmatpush2.msra.mxu0 0.0
        %679 = vmatprep.subr.mxu0 0.0
        %680 = vmatpush2.msra.mxu0 0.0
        %681 = vmatprep.subr.mxu0 0.0
        %682 = vmatpush2.msra.mxu0 0.0
        %683 = vmatprep.subr.mxu0 0.0
        %684 = vmatpush2.msra.mxu0 0.0
        %685 = vmatprep.subr.mxu0 0.0
        %686 = vmatpush2.msra.mxu0 0.0
        %687 = vmatprep.subr.mxu0 0.0
        %688 = vmatpush2.msra.mxu0 0.0
        %689 = vmatprep.subr.mxu0 0.0
        %690 = vmatpush2.msra.mxu0 0.0
        %691 = vmatprep.subr.mxu0 0.0
        %692 = vmatpush2.msra.mxu0 0.0
        %693 = vmatprep.subr.mxu0 0.0
        %694 = vmatpush2.msra.mxu0 0.0
        %695 = vmatprep.mubr.f32.mxu0 0.0
        %v696 = vand.u32 %v530, 4294901760
        %697 = vmatmul.mubr.f32.gmra.mxu0 %v696
        %v698 = vpop.f32.mrf.mxu0
        %v699 = vadd.f32 %v608, %v698
        %v700 = vpop.f32.mrf.mxu0
        %701 = vdwg.mxu0
        %702 = vmatprep.subr.mxu0 0.0
        %703 = vmatpush1.msra.mxu0 0.0
        %704 = vmatprep.subr.mxu0 0.0
        %705 = vmatpush1.msra.mxu0 0.0
        %706 = vmatprep.subr.mxu0 0.0
        %707 = vmatpush1.msra.mxu0 0.0
        %708 = vmatprep.subr.mxu0 0.0
        %709 = vmatpush1.msra.mxu0 0.0
        %710 = vmatprep.subr.mxu0 0.0
        %711 = vmatpush1.msra.mxu0 0.0
        %712 = vmatprep.subr.mxu0 0.0
        %713 = vmatpush1.msra.mxu0 0.0
        %714 = vmatprep.subr.mxu0 0.0
        %715 = vmatpush1.msra.mxu0 0.0
        %716 = vmatprep.subr.mxu0 0.0
        %717 = vmatpush1.msra.mxu0 0.0
        %718 = vmatprep.subr.mxu0 0.0
        %719 = vmatpush1.msra.mxu0 0.0
        %720 = vmatprep.subr.mxu0 0.0
        %721 = vmatpush1.msra.mxu0 0.0
        %722 = vmatprep.subr.mxu0 0.0
        %723 = vmatpush1.msra.mxu0 0.0
        %724 = vmatprep.subr.mxu0 0.0
        %725 = vmatpush1.msra.mxu0 0.0
        %726 = vmatprep.subr.mxu0 0.0
        %v727 = vand.u32 %v528, 4294901760
        %v728 = vsub.f32 %v528, %v727
        %729 = vmatpush1.msra.mxu0 %v728
        %730 = vmatprep.subr.mxu0 0.0
        %v731 = vand.u32 %v527, 4294901760
        %v732 = vsub.f32 %v527, %v731
        %733 = vmatpush1.msra.mxu0 %v732
        %734 = vmatprep.subr.mxu0 0.0
        %v735 = vand.u32 %v526, 4294901760
        %v736 = vsub.f32 %v526, %v735
        %737 = vmatpush1.msra.mxu0 %v736
        %738 = vmatprep.subr.mxu0 0.0
        %v739 = vand.u32 %v525, 4294901760
        %v740 = vsub.f32 %v525, %v739
        %741 = vmatpush1.msra.mxu0 %v740
        %742 = vmatprep.subr.mxu0 0.0
        %743 = vmatpush2.msra.mxu0 0.0
        %744 = vmatprep.subr.mxu0 0.0
        %745 = vmatpush2.msra.mxu0 0.0
        %746 = vmatprep.subr.mxu0 0.0
        %747 = vmatpush2.msra.mxu0 0.0
        %748 = vmatprep.subr.mxu0 0.0
        %749 = vmatpush2.msra.mxu0 0.0
        %750 = vmatprep.subr.mxu0 0.0
        %751 = vmatpush2.msra.mxu0 0.0
        %752 = vmatprep.subr.mxu0 0.0
        %753 = vmatpush2.msra.mxu0 0.0
        %754 = vmatprep.subr.mxu0 0.0
        %755 = vmatpush2.msra.mxu0 0.0
        %756 = vmatprep.subr.mxu0 0.0
        %757 = vmatpush2.msra.mxu0 0.0
        %758 = vmatprep.subr.mxu0 0.0
        %759 = vmatpush2.msra.mxu0 0.0
        %760 = vmatprep.subr.mxu0 0.0
        %761 = vmatpush2.msra.mxu0 0.0
        %762 = vmatprep.subr.mxu0 0.0
        %763 = vmatpush2.msra.mxu0 0.0
        %764 = vmatprep.subr.mxu0 0.0
        %765 = vmatpush2.msra.mxu0 0.0
        %766 = vmatprep.subr.mxu0 0.0
        %767 = vmatpush2.msra.mxu0 0.0
        %768 = vmatprep.subr.mxu0 0.0
        %769 = vmatpush2.msra.mxu0 0.0
        %770 = vmatprep.subr.mxu0 0.0
        %771 = vmatpush2.msra.mxu0 0.0
        %772 = vmatprep.subr.mxu0 0.0
        %773 = vmatpush2.msra.mxu0 0.0
        %774 = vmatprep.mubr.f32.mxu0 0.0
        %v775 = vand.u32 %v530, 4294901760
        %v776 = vsub.f32 %v530, %v775
        %777 = vmatmul.mubr.f32.gmra.mxu0 %v776
        %v778 = vpop.f32.mrf.mxu0
        %v779 = vadd.f32 %v699, %v778
        %v780 = vpop.f32.mrf.mxu0
        %781 = vdwg.mxu0
        %782 = vmatprep.subr.mxu0 0.0
        %783 = vmatpush1.msra.mxu0 0.0
        %784 = vmatprep.subr.mxu0 0.0
        %785 = vmatpush1.msra.mxu0 0.0
        %786 = vmatprep.subr.mxu0 0.0
        %787 = vmatpush1.msra.mxu0 0.0
        %788 = vmatprep.subr.mxu0 0.0
        %789 = vmatpush1.msra.mxu0 0.0
        %790 = vmatprep.subr.mxu0 0.0
        %791 = vmatpush1.msra.mxu0 0.0
        %792 = vmatprep.subr.mxu0 0.0
        %793 = vmatpush1.msra.mxu0 0.0
        %794 = vmatprep.subr.mxu0 0.0
        %795 = vmatpush1.msra.mxu0 0.0
        %796 = vmatprep.subr.mxu0 0.0
        %797 = vmatpush1.msra.mxu0 0.0
        %798 = vmatprep.subr.mxu0 0.0
        %799 = vmatpush1.msra.mxu0 0.0
        %800 = vmatprep.subr.mxu0 0.0
        %801 = vmatpush1.msra.mxu0 0.0
        %802 = vmatprep.subr.mxu0 0.0
        %803 = vmatpush1.msra.mxu0 0.0
        %804 = vmatprep.subr.mxu0 0.0
        %805 = vmatpush1.msra.mxu0 0.0
        %806 = vmatprep.subr.mxu0 0.0
        %v807 = vand.u32 %v528, 4294901760
        %808 = vmatpush1.msra.mxu0 %v807
        %809 = vmatprep.subr.mxu0 0.0
        %v810 = vand.u32 %v527, 4294901760
        %811 = vmatpush1.msra.mxu0 %v810
        %812 = vmatprep.subr.mxu0 0.0
        %v813 = vand.u32 %v526, 4294901760
        %814 = vmatpush1.msra.mxu0 %v813
        %815 = vmatprep.subr.mxu0 0.0
        %v816 = vand.u32 %v525, 4294901760
        %817 = vmatpush1.msra.mxu0 %v816
        %818 = vmatprep.subr.mxu0 0.0
        %819 = vmatpush2.msra.mxu0 0.0
        %820 = vmatprep.subr.mxu0 0.0
        %821 = vmatpush2.msra.mxu0 0.0
        %822 = vmatprep.subr.mxu0 0.0
        %823 = vmatpush2.msra.mxu0 0.0
        %824 = vmatprep.subr.mxu0 0.0
        %825 = vmatpush2.msra.mxu0 0.0
        %826 = vmatprep.subr.mxu0 0.0
        %827 = vmatpush2.msra.mxu0 0.0
        %828 = vmatprep.subr.mxu0 0.0
        %829 = vmatpush2.msra.mxu0 0.0
        %830 = vmatprep.subr.mxu0 0.0
        %831 = vmatpush2.msra.mxu0 0.0
        %832 = vmatprep.subr.mxu0 0.0
        %833 = vmatpush2.msra.mxu0 0.0
        %834 = vmatprep.subr.mxu0 0.0
        %835 = vmatpush2.msra.mxu0 0.0
        %836 = vmatprep.subr.mxu0 0.0
        %837 = vmatpush2.msra.mxu0 0.0
        %838 = vmatprep.subr.mxu0 0.0
        %839 = vmatpush2.msra.mxu0 0.0
        %840 = vmatprep.subr.mxu0 0.0
        %841 = vmatpush2.msra.mxu0 0.0
        %842 = vmatprep.subr.mxu0 0.0
        %843 = vmatpush2.msra.mxu0 0.0
        %844 = vmatprep.subr.mxu0 0.0
        %845 = vmatpush2.msra.mxu0 0.0
        %846 = vmatprep.subr.mxu0 0.0
        %847 = vmatpush2.msra.mxu0 0.0
        %848 = vmatprep.subr.mxu0 0.0
        %849 = vmatpush2.msra.mxu0 0.0
        %850 = vmatprep.mubr.f32.mxu0 0.0
        %v851 = vand.u32 %v530, 4294901760
        %v852 = vsub.f32 %v530, %v851
        %v853 = vand.u32 %v852, 4294901760
        %854 = vmatmul.mubr.f32.gmra.mxu0 %v853
        %v855 = vpop.f32.mrf.mxu0
        %v856 = vadd.f32 %v779, %v855
        %v857 = vpop.f32.mrf.mxu0
        %858 = vdwg.mxu0
        %859 = vmatprep.subr.mxu0 0.0
        %860 = vmatpush1.msra.mxu0 0.0
        %861 = vmatprep.subr.mxu0 0.0
        %862 = vmatpush1.msra.mxu0 0.0
        %863 = vmatprep.subr.mxu0 0.0
        %864 = vmatpush1.msra.mxu0 0.0
        %865 = vmatprep.subr.mxu0 0.0
        %866 = vmatpush1.msra.mxu0 0.0
        %867 = vmatprep.subr.mxu0 0.0
        %868 = vmatpush1.msra.mxu0 0.0
        %869 = vmatprep.subr.mxu0 0.0
        %870 = vmatpush1.msra.mxu0 0.0
        %871 = vmatprep.subr.mxu0 0.0
        %872 = vmatpush1.msra.mxu0 0.0
        %873 = vmatprep.subr.mxu0 0.0
        %874 = vmatpush1.msra.mxu0 0.0
        %875 = vmatprep.subr.mxu0 0.0
        %876 = vmatpush1.msra.mxu0 0.0
        %877 = vmatprep.subr.mxu0 0.0
        %878 = vmatpush1.msra.mxu0 0.0
        %879 = vmatprep.subr.mxu0 0.0
        %880 = vmatpush1.msra.mxu0 0.0
        %881 = vmatprep.subr.mxu0 0.0
        %882 = vmatpush1.msra.mxu0 0.0
        %883 = vmatprep.subr.mxu0 0.0
        %v884 = vand.u32 %v528, 4294901760
        %v885 = vsub.f32 %v528, %v884
        %v886 = vand.u32 %v885, 4294901760
        %887 = vmatpush1.msra.mxu0 %v886
        %888 = vmatprep.subr.mxu0 0.0
        %v889 = vand.u32 %v527, 4294901760
        %v890 = vsub.f32 %v527, %v889
        %v891 = vand.u32 %v890, 4294901760
        %892 = vmatpush1.msra.mxu0 %v891
        %893 = vmatprep.subr.mxu0 0.0
        %v894 = vand.u32 %v526, 4294901760
        %v895 = vsub.f32 %v526, %v894
        %v896 = vand.u32 %v895, 4294901760
        %897 = vmatpush1.msra.mxu0 %v896
        %898 = vmatprep.subr.mxu0 0.0
        %v899 = vand.u32 %v525, 4294901760
        %v900 = vsub.f32 %v525, %v899
        %v901 = vand.u32 %v900, 4294901760
        %902 = vmatpush1.msra.mxu0 %v901
        %903 = vmatprep.subr.mxu0 0.0
        %904 = vmatpush2.msra.mxu0 0.0
        %905 = vmatprep.subr.mxu0 0.0
        %906 = vmatpush2.msra.mxu0 0.0
        %907 = vmatprep.subr.mxu0 0.0
        %908 = vmatpush2.msra.mxu0 0.0
        %909 = vmatprep.subr.mxu0 0.0
        %910 = vmatpush2.msra.mxu0 0.0
        %911 = vmatprep.subr.mxu0 0.0
        %912 = vmatpush2.msra.mxu0 0.0
        %913 = vmatprep.subr.mxu0 0.0
        %914 = vmatpush2.msra.mxu0 0.0
        %915 = vmatprep.subr.mxu0 0.0
        %916 = vmatpush2.msra.mxu0 0.0
        %917 = vmatprep.subr.mxu0 0.0
        %918 = vmatpush2.msra.mxu0 0.0
        %919 = vmatprep.subr.mxu0 0.0
        %920 = vmatpush2.msra.mxu0 0.0
        %921 = vmatprep.subr.mxu0 0.0
        %922 = vmatpush2.msra.mxu0 0.0
        %923 = vmatprep.subr.mxu0 0.0
        %924 = vmatpush2.msra.mxu0 0.0
        %925 = vmatprep.subr.mxu0 0.0
        %926 = vmatpush2.msra.mxu0 0.0
        %927 = vmatprep.subr.mxu0 0.0
        %928 = vmatpush2.msra.mxu0 0.0
        %929 = vmatprep.subr.mxu0 0.0
        %930 = vmatpush2.msra.mxu0 0.0
        %931 = vmatprep.subr.mxu0 0.0
        %932 = vmatpush2.msra.mxu0 0.0
        %933 = vmatprep.subr.mxu0 0.0
        %934 = vmatpush2.msra.mxu0 0.0
        %935 = vmatprep.mubr.f32.mxu0 0.0
        %v936 = vand.u32 %v530, 4294901760
        %937 = vmatmul.mubr.f32.gmra.mxu0 %v936
        %v938 = vpop.f32.mrf.mxu0
        %v939 = vadd.f32 %v856, %v938
        %v940 = vpop.f32.mrf.mxu0
        %941 = vdwg.mxu0
        %942 = vmatprep.subr.mxu0 0.0
        %943 = vmatpush1.msra.mxu0 0.0
        %944 = vmatprep.subr.mxu0 0.0
        %945 = vmatpush1.msra.mxu0 0.0
        %946 = vmatprep.subr.mxu0 0.0
        %947 = vmatpush1.msra.mxu0 0.0
        %948 = vmatprep.subr.mxu0 0.0
        %949 = vmatpush1.msra.mxu0 0.0
        %950 = vmatprep.subr.mxu0 0.0
        %951 = vmatpush1.msra.mxu0 0.0
        %952 = vmatprep.subr.mxu0 0.0
        %953 = vmatpush1.msra.mxu0 0.0
        %954 = vmatprep.subr.mxu0 0.0
        %955 = vmatpush1.msra.mxu0 0.0
        %956 = vmatprep.subr.mxu0 0.0
        %957 = vmatpush1.msra.mxu0 0.0
        %958 = vmatprep.subr.mxu0 0.0
        %959 = vmatpush1.msra.mxu0 0.0
        %960 = vmatprep.subr.mxu0 0.0
        %961 = vmatpush1.msra.mxu0 0.0
        %962 = vmatprep.subr.mxu0 0.0
        %963 = vmatpush1.msra.mxu0 0.0
        %964 = vmatprep.subr.mxu0 0.0
        %965 = vmatpush1.msra.mxu0 0.0
        %966 = vmatprep.subr.mxu0 0.0
        %v967 = vand.u32 %v528, 4294901760
        %968 = vmatpush1.msra.mxu0 %v967
        %969 = vmatprep.subr.mxu0 0.0
        %v970 = vand.u32 %v527, 4294901760
        %971 = vmatpush1.msra.mxu0 %v970
        %972 = vmatprep.subr.mxu0 0.0
        %v973 = vand.u32 %v526, 4294901760
        %974 = vmatpush1.msra.mxu0 %v973
        %975 = vmatprep.subr.mxu0 0.0
        %v976 = vand.u32 %v525, 4294901760
        %977 = vmatpush1.msra.mxu0 %v976
        %978 = vmatprep.subr.mxu0 0.0
        %979 = vmatpush2.msra.mxu0 0.0
        %980 = vmatprep.subr.mxu0 0.0
        %981 = vmatpush2.msra.mxu0 0.0
        %982 = vmatprep.subr.mxu0 0.0
        %983 = vmatpush2.msra.mxu0 0.0
        %984 = vmatprep.subr.mxu0 0.0
        %985 = vmatpush2.msra.mxu0 0.0
        %986 = vmatprep.subr.mxu0 0.0
        %987 = vmatpush2.msra.mxu0 0.0
        %988 = vmatprep.subr.mxu0 0.0
        %989 = vmatpush2.msra.mxu0 0.0
        %990 = vmatprep.subr.mxu0 0.0
        %991 = vmatpush2.msra.mxu0 0.0
        %992 = vmatprep.subr.mxu0 0.0
        %993 = vmatpush2.msra.mxu0 0.0
        %994 = vmatprep.subr.mxu0 0.0
        %995 = vmatpush2.msra.mxu0 0.0
        %996 = vmatprep.subr.mxu0 0.0
        %997 = vmatpush2.msra.mxu0 0.0
        %998 = vmatprep.subr.mxu0 0.0
        %999 = vmatpush2.msra.mxu0 0.0
        %1000 = vmatprep.subr.mxu0 0.0
        %1001 = vmatpush2.msra.mxu0 0.0
        %1002 = vmatprep.subr.mxu0 0.0
        %1003 = vmatpush2.msra.mxu0 0.0
        %1004 = vmatprep.subr.mxu0 0.0
        %1005 = vmatpush2.msra.mxu0 0.0
        %1006 = vmatprep.subr.mxu0 0.0
        %1007 = vmatpush2.msra.mxu0 0.0
        %1008 = vmatprep.subr.mxu0 0.0
        %1009 = vmatpush2.msra.mxu0 0.0
        %1010 = vmatprep.mubr.f32.mxu0 0.0
        %v1011 = vand.u32 %v530, 4294901760
        %1012 = vmatmul.mubr.f32.gmra.mxu0 %v1011
        %v1013 = vpop.f32.mrf.mxu0
        %v1014 = vadd.f32 %v939, %v1013
        %v1015 = vpop.f32.mrf.mxu0
        %1016 = vdwg.mxu0
        %v1017 = vld [vmem:[#allocation10] sm:$0xff]
        %v1018 = vld [vmem:[#allocation10 + $0x8] sm:$0xff]
        %v1019 = vld [vmem:[#allocation10 + $0x10] sm:$0xff]
        %v1020 = vld [vmem:[#allocation10 + $0x18] sm:$0xff]
        %v1022 = vsel %vm503, %v499, 0
        %1024 = vmatprep.subr.mxu0 0.0
        %1025 = vmatpush1.msra.mxu0 0.0
        %1026 = vmatprep.subr.mxu0 0.0
        %1027 = vmatpush1.msra.mxu0 0.0
        %1028 = vmatprep.subr.mxu0 0.0
        %1029 = vmatpush1.msra.mxu0 0.0
        %1030 = vmatprep.subr.mxu0 0.0
        %1031 = vmatpush1.msra.mxu0 0.0
        %1032 = vmatprep.subr.mxu0 0.0
        %1033 = vmatpush1.msra.mxu0 0.0
        %1034 = vmatprep.subr.mxu0 0.0
        %1035 = vmatpush1.msra.mxu0 0.0
        %1036 = vmatprep.subr.mxu0 0.0
        %1037 = vmatpush1.msra.mxu0 0.0
        %1038 = vmatprep.subr.mxu0 0.0
        %1039 = vmatpush1.msra.mxu0 0.0
        %1040 = vmatprep.subr.mxu0 0.0
        %1041 = vmatpush1.msra.mxu0 0.0
        %1042 = vmatprep.subr.mxu0 0.0
        %1043 = vmatpush1.msra.mxu0 0.0
        %1044 = vmatprep.subr.mxu0 0.0
        %1045 = vmatpush1.msra.mxu0 0.0
        %1046 = vmatprep.subr.mxu0 0.0
        %1047 = vmatpush1.msra.mxu0 0.0
        %1048 = vmatprep.subr.mxu0 0.0
        %v1049 = vand.u32 %v1020, 4294901760
        %1050 = vmatpush1.msra.mxu0 %v1049
        %1051 = vmatprep.subr.mxu0 0.0
        %v1052 = vand.u32 %v1019, 4294901760
        %1053 = vmatpush1.msra.mxu0 %v1052
        %1054 = vmatprep.subr.mxu0 0.0
        %v1055 = vand.u32 %v1018, 4294901760
        %1056 = vmatpush1.msra.mxu0 %v1055
        %1057 = vmatprep.subr.mxu0 0.0
        %v1058 = vand.u32 %v1017, 4294901760
        %1059 = vmatpush1.msra.mxu0 %v1058
        %1060 = vmatprep.subr.mxu0 0.0
        %1061 = vmatpush2.msra.mxu0 0.0
        %1062 = vmatprep.subr.mxu0 0.0
        %1063 = vmatpush2.msra.mxu0 0.0
        %1064 = vmatprep.subr.mxu0 0.0
        %1065 = vmatpush2.msra.mxu0 0.0
        %1066 = vmatprep.subr.mxu0 0.0
        %1067 = vmatpush2.msra.mxu0 0.0
        %1068 = vmatprep.subr.mxu0 0.0
        %1069 = vmatpush2.msra.mxu0 0.0
        %1070 = vmatprep.subr.mxu0 0.0
        %1071 = vmatpush2.msra.mxu0 0.0
        %1072 = vmatprep.subr.mxu0 0.0
        %1073 = vmatpush2.msra.mxu0 0.0
        %1074 = vmatprep.subr.mxu0 0.0
        %1075 = vmatpush2.msra.mxu0 0.0
        %1076 = vmatprep.subr.mxu0 0.0
        %1077 = vmatpush2.msra.mxu0 0.0
        %1078 = vmatprep.subr.mxu0 0.0
        %1079 = vmatpush2.msra.mxu0 0.0
        %1080 = vmatprep.subr.mxu0 0.0
        %1081 = vmatpush2.msra.mxu0 0.0
        %1082 = vmatprep.subr.mxu0 0.0
        %1083 = vmatpush2.msra.mxu0 0.0
        %1084 = vmatprep.subr.mxu0 0.0
        %1085 = vmatpush2.msra.mxu0 0.0
        %1086 = vmatprep.subr.mxu0 0.0
        %1087 = vmatpush2.msra.mxu0 0.0
        %1088 = vmatprep.subr.mxu0 0.0
        %1089 = vmatpush2.msra.mxu0 0.0
        %1090 = vmatprep.subr.mxu0 0.0
        %1091 = vmatpush2.msra.mxu0 0.0
        %1092 = vmatprep.mubr.f32.mxu0 0.0
        %v1093 = vand.u32 %v1022, 4294901760
        %v1094 = vsub.f32 %v1022, %v1093
        %v1095 = vand.u32 %v1094, 4294901760
        %v1096 = vsub.f32 %v1094, %v1095
        %v1097 = vand.u32 %v1096, 4294901760
        %1098 = vmatmul.mubr.f32.gmra.mxu0 %v1097
        %v1099 = vpop.f32.mrf.mxu0
        %v1100 = vadd.f32 0.0, %v1099
        %v1101 = vpop.f32.mrf.mxu0
        %1102 = vdwg.mxu0
        %1103 = vmatprep.subr.mxu0 0.0
        %1104 = vmatpush1.msra.mxu0 0.0
        %1105 = vmatprep.subr.mxu0 0.0
        %1106 = vmatpush1.msra.mxu0 0.0
        %1107 = vmatprep.subr.mxu0 0.0
        %1108 = vmatpush1.msra.mxu0 0.0
        %1109 = vmatprep.subr.mxu0 0.0
        %1110 = vmatpush1.msra.mxu0 0.0
        %1111 = vmatprep.subr.mxu0 0.0
        %1112 = vmatpush1.msra.mxu0 0.0
        %1113 = vmatprep.subr.mxu0 0.0
        %1114 = vmatpush1.msra.mxu0 0.0
        %1115 = vmatprep.subr.mxu0 0.0
        %1116 = vmatpush1.msra.mxu0 0.0
        %1117 = vmatprep.subr.mxu0 0.0
        %1118 = vmatpush1.msra.mxu0 0.0
        %1119 = vmatprep.subr.mxu0 0.0
        %1120 = vmatpush1.msra.mxu0 0.0
        %1121 = vmatprep.subr.mxu0 0.0
        %1122 = vmatpush1.msra.mxu0 0.0
        %1123 = vmatprep.subr.mxu0 0.0
        %1124 = vmatpush1.msra.mxu0 0.0
        %1125 = vmatprep.subr.mxu0 0.0
        %1126 = vmatpush1.msra.mxu0 0.0
        %1127 = vmatprep.subr.mxu0 0.0
        %v1128 = vand.u32 %v1020, 4294901760
        %v1129 = vsub.f32 %v1020, %v1128
        %v1130 = vand.u32 %v1129, 4294901760
        %v1131 = vsub.f32 %v1129, %v1130
        %v1132 = vand.u32 %v1131, 4294901760
        %1133 = vmatpush1.msra.mxu0 %v1132
        %1134 = vmatprep.subr.mxu0 0.0
        %v1135 = vand.u32 %v1019, 4294901760
        %v1136 = vsub.f32 %v1019, %v1135
        %v1137 = vand.u32 %v1136, 4294901760
        %v1138 = vsub.f32 %v1136, %v1137
        %v1139 = vand.u32 %v1138, 4294901760
        %1140 = vmatpush1.msra.mxu0 %v1139
        %1141 = vmatprep.subr.mxu0 0.0
        %v1142 = vand.u32 %v1018, 4294901760
        %v1143 = vsub.f32 %v1018, %v1142
        %v1144 = vand.u32 %v1143, 4294901760
        %v1145 = vsub.f32 %v1143, %v1144
        %v1146 = vand.u32 %v1145, 4294901760
        %1147 = vmatpush1.msra.mxu0 %v1146
        %1148 = vmatprep.subr.mxu0 0.0
        %v1149 = vand.u32 %v1017, 4294901760
        %v1150 = vsub.f32 %v1017, %v1149
        %v1151 = vand.u32 %v1150, 4294901760
        %v1152 = vsub.f32 %v1150, %v1151
        %v1153 = vand.u32 %v1152, 4294901760
        %1154 = vmatpush1.msra.mxu0 %v1153
        %1155 = vmatprep.subr.mxu0 0.0
        %1156 = vmatpush2.msra.mxu0 0.0
        %1157 = vmatprep.subr.mxu0 0.0
        %1158 = vmatpush2.msra.mxu0 0.0
        %1159 = vmatprep.subr.mxu0 0.0
        %1160 = vmatpush2.msra.mxu0 0.0
        %1161 = vmatprep.subr.mxu0 0.0
        %1162 = vmatpush2.msra.mxu0 0.0
        %1163 = vmatprep.subr.mxu0 0.0
        %1164 = vmatpush2.msra.mxu0 0.0
        %1165 = vmatprep.subr.mxu0 0.0
        %1166 = vmatpush2.msra.mxu0 0.0
        %1167 = vmatprep.subr.mxu0 0.0
        %1168 = vmatpush2.msra.mxu0 0.0
        %1169 = vmatprep.subr.mxu0 0.0
        %1170 = vmatpush2.msra.mxu0 0.0
        %1171 = vmatprep.subr.mxu0 0.0
        %1172 = vmatpush2.msra.mxu0 0.0
        %1173 = vmatprep.subr.mxu0 0.0
        %1174 = vmatpush2.msra.mxu0 0.0
        %1175 = vmatprep.subr.mxu0 0.0
        %1176 = vmatpush2.msra.mxu0 0.0
        %1177 = vmatprep.subr.mxu0 0.0
        %1178 = vmatpush2.msra.mxu0 0.0
        %1179 = vmatprep.subr.mxu0 0.0
        %1180 = vmatpush2.msra.mxu0 0.0
        %1181 = vmatprep.subr.mxu0 0.0
        %1182 = vmatpush2.msra.mxu0 0.0
        %1183 = vmatprep.subr.mxu0 0.0
        %1184 = vmatpush2.msra.mxu0 0.0
        %1185 = vmatprep.subr.mxu0 0.0
        %1186 = vmatpush2.msra.mxu0 0.0
        %1187 = vmatprep.mubr.f32.mxu0 0.0
        %v1188 = vand.u32 %v1022, 4294901760
        %1189 = vmatmul.mubr.f32.gmra.mxu0 %v1188
        %v1190 = vpop.f32.mrf.mxu0
        %v1191 = vadd.f32 %v1100, %v1190
        %v1192 = vpop.f32.mrf.mxu0
        %1193 = vdwg.mxu0
        %1194 = vmatprep.subr.mxu0 0.0
        %1195 = vmatpush1.msra.mxu0 0.0
        %1196 = vmatprep.subr.mxu0 0.0
        %1197 = vmatpush1.msra.mxu0 0.0
        %1198 = vmatprep.subr.mxu0 0.0
        %1199 = vmatpush1.msra.mxu0 0.0
        %1200 = vmatprep.subr.mxu0 0.0
        %1201 = vmatpush1.msra.mxu0 0.0
        %1202 = vmatprep.subr.mxu0 0.0
        %1203 = vmatpush1.msra.mxu0 0.0
        %1204 = vmatprep.subr.mxu0 0.0
        %1205 = vmatpush1.msra.mxu0 0.0
        %1206 = vmatprep.subr.mxu0 0.0
        %1207 = vmatpush1.msra.mxu0 0.0
        %1208 = vmatprep.subr.mxu0 0.0
        %1209 = vmatpush1.msra.mxu0 0.0
        %1210 = vmatprep.subr.mxu0 0.0
        %1211 = vmatpush1.msra.mxu0 0.0
        %1212 = vmatprep.subr.mxu0 0.0
        %1213 = vmatpush1.msra.mxu0 0.0
        %1214 = vmatprep.subr.mxu0 0.0
        %1215 = vmatpush1.msra.mxu0 0.0
        %1216 = vmatprep.subr.mxu0 0.0
        %1217 = vmatpush1.msra.mxu0 0.0
        %1218 = vmatprep.subr.mxu0 0.0
        %v1219 = vand.u32 %v1020, 4294901760
        %v1220 = vsub.f32 %v1020, %v1219
        %1221 = vmatpush1.msra.mxu0 %v1220
        %1222 = vmatprep.subr.mxu0 0.0
        %v1223 = vand.u32 %v1019, 4294901760
        %v1224 = vsub.f32 %v1019, %v1223
        %1225 = vmatpush1.msra.mxu0 %v1224
        %1226 = vmatprep.subr.mxu0 0.0
        %v1227 = vand.u32 %v1018, 4294901760
        %v1228 = vsub.f32 %v1018, %v1227
        %1229 = vmatpush1.msra.mxu0 %v1228
        %1230 = vmatprep.subr.mxu0 0.0
        %v1231 = vand.u32 %v1017, 4294901760
        %v1232 = vsub.f32 %v1017, %v1231
        %1233 = vmatpush1.msra.mxu0 %v1232
        %1234 = vmatprep.subr.mxu0 0.0
        %1235 = vmatpush2.msra.mxu0 0.0
        %1236 = vmatprep.subr.mxu0 0.0
        %1237 = vmatpush2.msra.mxu0 0.0
        %1238 = vmatprep.subr.mxu0 0.0
        %1239 = vmatpush2.msra.mxu0 0.0
        %1240 = vmatprep.subr.mxu0 0.0
        %1241 = vmatpush2.msra.mxu0 0.0
        %1242 = vmatprep.subr.mxu0 0.0
        %1243 = vmatpush2.msra.mxu0 0.0
        %1244 = vmatprep.subr.mxu0 0.0
        %1245 = vmatpush2.msra.mxu0 0.0
        %1246 = vmatprep.subr.mxu0 0.0
        %1247 = vmatpush2.msra.mxu0 0.0
        %1248 = vmatprep.subr.mxu0 0.0
        %1249 = vmatpush2.msra.mxu0 0.0
        %1250 = vmatprep.subr.mxu0 0.0
        %1251 = vmatpush2.msra.mxu0 0.0
        %1252 = vmatprep.subr.mxu0 0.0
        %1253 = vmatpush2.msra.mxu0 0.0
        %1254 = vmatprep.subr.mxu0 0.0
        %1255 = vmatpush2.msra.mxu0 0.0
        %1256 = vmatprep.subr.mxu0 0.0
        %1257 = vmatpush2.msra.mxu0 0.0
        %1258 = vmatprep.subr.mxu0 0.0
        %1259 = vmatpush2.msra.mxu0 0.0
        %1260 = vmatprep.subr.mxu0 0.0
        %1261 = vmatpush2.msra.mxu0 0.0
        %1262 = vmatprep.subr.mxu0 0.0
        %1263 = vmatpush2.msra.mxu0 0.0
        %1264 = vmatprep.subr.mxu0 0.0
        %1265 = vmatpush2.msra.mxu0 0.0
        %1266 = vmatprep.mubr.f32.mxu0 0.0
        %v1267 = vand.u32 %v1022, 4294901760
        %v1268 = vsub.f32 %v1022, %v1267
        %1269 = vmatmul.mubr.f32.gmra.mxu0 %v1268
        %v1270 = vpop.f32.mrf.mxu0
        %v1271 = vadd.f32 %v1191, %v1270
        %v1272 = vpop.f32.mrf.mxu0
        %1273 = vdwg.mxu0
        %1274 = vmatprep.subr.mxu0 0.0
        %1275 = vmatpush1.msra.mxu0 0.0
        %1276 = vmatprep.subr.mxu0 0.0
        %1277 = vmatpush1.msra.mxu0 0.0
        %1278 = vmatprep.subr.mxu0 0.0
        %1279 = vmatpush1.msra.mxu0 0.0
        %1280 = vmatprep.subr.mxu0 0.0
        %1281 = vmatpush1.msra.mxu0 0.0
        %1282 = vmatprep.subr.mxu0 0.0
        %1283 = vmatpush1.msra.mxu0 0.0
        %1284 = vmatprep.subr.mxu0 0.0
        %1285 = vmatpush1.msra.mxu0 0.0
        %1286 = vmatprep.subr.mxu0 0.0
        %1287 = vmatpush1.msra.mxu0 0.0
        %1288 = vmatprep.subr.mxu0 0.0
        %1289 = vmatpush1.msra.mxu0 0.0
        %1290 = vmatprep.subr.mxu0 0.0
        %1291 = vmatpush1.msra.mxu0 0.0
        %1292 = vmatprep.subr.mxu0 0.0
        %1293 = vmatpush1.msra.mxu0 0.0
        %1294 = vmatprep.subr.mxu0 0.0
        %1295 = vmatpush1.msra.mxu0 0.0
        %1296 = vmatprep.subr.mxu0 0.0
        %1297 = vmatpush1.msra.mxu0 0.0
        %1298 = vmatprep.subr.mxu0 0.0
        %v1299 = vand.u32 %v1020, 4294901760
        %1300 = vmatpush1.msra.mxu0 %v1299
        %1301 = vmatprep.subr.mxu0 0.0
        %v1302 = vand.u32 %v1019, 4294901760
        %1303 = vmatpush1.msra.mxu0 %v1302
        %1304 = vmatprep.subr.mxu0 0.0
        %v1305 = vand.u32 %v1018, 4294901760
        %1306 = vmatpush1.msra.mxu0 %v1305
        %1307 = vmatprep.subr.mxu0 0.0
        %v1308 = vand.u32 %v1017, 4294901760
        %1309 = vmatpush1.msra.mxu0 %v1308
        %1310 = vmatprep.subr.mxu0 0.0
        %1311 = vmatpush2.msra.mxu0 0.0
        %1312 = vmatprep.subr.mxu0 0.0
        %1313 = vmatpush2.msra.mxu0 0.0
        %1314 = vmatprep.subr.mxu0 0.0
        %1315 = vmatpush2.msra.mxu0 0.0
        %1316 = vmatprep.subr.mxu0 0.0
        %1317 = vmatpush2.msra.mxu0 0.0
        %1318 = vmatprep.subr.mxu0 0.0
        %1319 = vmatpush2.msra.mxu0 0.0
        %1320 = vmatprep.subr.mxu0 0.0
        %1321 = vmatpush2.msra.mxu0 0.0
        %1322 = vmatprep.subr.mxu0 0.0
        %1323 = vmatpush2.msra.mxu0 0.0
        %1324 = vmatprep.subr.mxu0 0.0
        %1325 = vmatpush2.msra.mxu0 0.0
        %1326 = vmatprep.subr.mxu0 0.0
        %1327 = vmatpush2.msra.mxu0 0.0
        %1328 = vmatprep.subr.mxu0 0.0
        %1329 = vmatpush2.msra.mxu0 0.0
        %1330 = vmatprep.subr.mxu0 0.0
        %1331 = vmatpush2.msra.mxu0 0.0
        %1332 = vmatprep.subr.mxu0 0.0
        %1333 = vmatpush2.msra.mxu0 0.0
        %1334 = vmatprep.subr.mxu0 0.0
        %1335 = vmatpush2.msra.mxu0 0.0
        %1336 = vmatprep.subr.mxu0 0.0
        %1337 = vmatpush2.msra.mxu0 0.0
        %1338 = vmatprep.subr.mxu0 0.0
        %1339 = vmatpush2.msra.mxu0 0.0
        %1340 = vmatprep.subr.mxu0 0.0
        %1341 = vmatpush2.msra.mxu0 0.0
        %1342 = vmatprep.mubr.f32.mxu0 0.0
        %v1343 = vand.u32 %v1022, 4294901760
        %v1344 = vsub.f32 %v1022, %v1343
        %v1345 = vand.u32 %v1344, 4294901760
        %1346 = vmatmul.mubr.f32.gmra.mxu0 %v1345
        %v1347 = vpop.f32.mrf.mxu0
        %v1348 = vadd.f32 %v1271, %v1347
        %v1349 = vpop.f32.mrf.mxu0
        %1350 = vdwg.mxu0
        %1351 = vmatprep.subr.mxu0 0.0
        %1352 = vmatpush1.msra.mxu0 0.0
        %1353 = vmatprep.subr.mxu0 0.0
        %1354 = vmatpush1.msra.mxu0 0.0
        %1355 = vmatprep.subr.mxu0 0.0
        %1356 = vmatpush1.msra.mxu0 0.0
        %1357 = vmatprep.subr.mxu0 0.0
        %1358 = vmatpush1.msra.mxu0 0.0
        %1359 = vmatprep.subr.mxu0 0.0
        %1360 = vmatpush1.msra.mxu0 0.0
        %1361 = vmatprep.subr.mxu0 0.0
        %1362 = vmatpush1.msra.mxu0 0.0
        %1363 = vmatprep.subr.mxu0 0.0
        %1364 = vmatpush1.msra.mxu0 0.0
        %1365 = vmatprep.subr.mxu0 0.0
        %1366 = vmatpush1.msra.mxu0 0.0
        %1367 = vmatprep.subr.mxu0 0.0
        %1368 = vmatpush1.msra.mxu0 0.0
        %1369 = vmatprep.subr.mxu0 0.0
        %1370 = vmatpush1.msra.mxu0 0.0
        %1371 = vmatprep.subr.mxu0 0.0
        %1372 = vmatpush1.msra.mxu0 0.0
        %1373 = vmatprep.subr.mxu0 0.0
        %1374 = vmatpush1.msra.mxu0 0.0
        %1375 = vmatprep.subr.mxu0 0.0
        %v1376 = vand.u32 %v1020, 4294901760
        %v1377 = vsub.f32 %v1020, %v1376
        %v1378 = vand.u32 %v1377, 4294901760
        %1379 = vmatpush1.msra.mxu0 %v1378
        %1380 = vmatprep.subr.mxu0 0.0
        %v1381 = vand.u32 %v1019, 4294901760
        %v1382 = vsub.f32 %v1019, %v1381
        %v1383 = vand.u32 %v1382, 4294901760
        %1384 = vmatpush1.msra.mxu0 %v1383
        %1385 = vmatprep.subr.mxu0 0.0
        %v1386 = vand.u32 %v1018, 4294901760
        %v1387 = vsub.f32 %v1018, %v1386
        %v1388 = vand.u32 %v1387, 4294901760
        %1389 = vmatpush1.msra.mxu0 %v1388
        %1390 = vmatprep.subr.mxu0 0.0
        %v1391 = vand.u32 %v1017, 4294901760
        %v1392 = vsub.f32 %v1017, %v1391
        %v1393 = vand.u32 %v1392, 4294901760
        %1394 = vmatpush1.msra.mxu0 %v1393
        %1395 = vmatprep.subr.mxu0 0.0
        %1396 = vmatpush2.msra.mxu0 0.0
        %1397 = vmatprep.subr.mxu0 0.0
        %1398 = vmatpush2.msra.mxu0 0.0
        %1399 = vmatprep.subr.mxu0 0.0
        %1400 = vmatpush2.msra.mxu0 0.0
        %1401 = vmatprep.subr.mxu0 0.0
        %1402 = vmatpush2.msra.mxu0 0.0
        %1403 = vmatprep.subr.mxu0 0.0
        %1404 = vmatpush2.msra.mxu0 0.0
        %1405 = vmatprep.subr.mxu0 0.0
        %1406 = vmatpush2.msra.mxu0 0.0
        %1407 = vmatprep.subr.mxu0 0.0
        %1408 = vmatpush2.msra.mxu0 0.0
        %1409 = vmatprep.subr.mxu0 0.0
        %1410 = vmatpush2.msra.mxu0 0.0
        %1411 = vmatprep.subr.mxu0 0.0
        %1412 = vmatpush2.msra.mxu0 0.0
        %1413 = vmatprep.subr.mxu0 0.0
        %1414 = vmatpush2.msra.mxu0 0.0
        %1415 = vmatprep.subr.mxu0 0.0
        %1416 = vmatpush2.msra.mxu0 0.0
        %1417 = vmatprep.subr.mxu0 0.0
        %1418 = vmatpush2.msra.mxu0 0.0
        %1419 = vmatprep.subr.mxu0 0.0
        %1420 = vmatpush2.msra.mxu0 0.0
        %1421 = vmatprep.subr.mxu0 0.0
        %1422 = vmatpush2.msra.mxu0 0.0
        %1423 = vmatprep.subr.mxu0 0.0
        %1424 = vmatpush2.msra.mxu0 0.0
        %1425 = vmatprep.subr.mxu0 0.0
        %1426 = vmatpush2.msra.mxu0 0.0
        %1427 = vmatprep.mubr.f32.mxu0 0.0
        %v1428 = vand.u32 %v1022, 4294901760
        %1429 = vmatmul.mubr.f32.gmra.mxu0 %v1428
        %v1430 = vpop.f32.mrf.mxu0
        %v1431 = vadd.f32 %v1348, %v1430
        %v1432 = vpop.f32.mrf.mxu0
        %1433 = vdwg.mxu0
        %1434 = vmatprep.subr.mxu0 0.0
        %1435 = vmatpush1.msra.mxu0 0.0
        %1436 = vmatprep.subr.mxu0 0.0
        %1437 = vmatpush1.msra.mxu0 0.0
        %1438 = vmatprep.subr.mxu0 0.0
        %1439 = vmatpush1.msra.mxu0 0.0
        %1440 = vmatprep.subr.mxu0 0.0
        %1441 = vmatpush1.msra.mxu0 0.0
        %1442 = vmatprep.subr.mxu0 0.0
        %1443 = vmatpush1.msra.mxu0 0.0
        %1444 = vmatprep.subr.mxu0 0.0
        %1445 = vmatpush1.msra.mxu0 0.0
        %1446 = vmatprep.subr.mxu0 0.0
        %1447 = vmatpush1.msra.mxu0 0.0
        %1448 = vmatprep.subr.mxu0 0.0
        %1449 = vmatpush1.msra.mxu0 0.0
        %1450 = vmatprep.subr.mxu0 0.0
        %1451 = vmatpush1.msra.mxu0 0.0
        %1452 = vmatprep.subr.mxu0 0.0
        %1453 = vmatpush1.msra.mxu0 0.0
        %1454 = vmatprep.subr.mxu0 0.0
        %1455 = vmatpush1.msra.mxu0 0.0
        %1456 = vmatprep.subr.mxu0 0.0
        %1457 = vmatpush1.msra.mxu0 0.0
        %1458 = vmatprep.subr.mxu0 0.0
        %v1459 = vand.u32 %v1020, 4294901760
        %1460 = vmatpush1.msra.mxu0 %v1459
        %1461 = vmatprep.subr.mxu0 0.0
        %v1462 = vand.u32 %v1019, 4294901760
        %1463 = vmatpush1.msra.mxu0 %v1462
        %1464 = vmatprep.subr.mxu0 0.0
        %v1465 = vand.u32 %v1018, 4294901760
        %1466 = vmatpush1.msra.mxu0 %v1465
        %1467 = vmatprep.subr.mxu0 0.0
        %v1468 = vand.u32 %v1017, 4294901760
        %1469 = vmatpush1.msra.mxu0 %v1468
        %1470 = vmatprep.subr.mxu0 0.0
        %1471 = vmatpush2.msra.mxu0 0.0
        %1472 = vmatprep.subr.mxu0 0.0
        %1473 = vmatpush2.msra.mxu0 0.0
        %1474 = vmatprep.subr.mxu0 0.0
        %1475 = vmatpush2.msra.mxu0 0.0
        %1476 = vmatprep.subr.mxu0 0.0
        %1477 = vmatpush2.msra.mxu0 0.0
        %1478 = vmatprep.subr.mxu0 0.0
        %1479 = vmatpush2.msra.mxu0 0.0
        %1480 = vmatprep.subr.mxu0 0.0
        %1481 = vmatpush2.msra.mxu0 0.0
        %1482 = vmatprep.subr.mxu0 0.0
        %1483 = vmatpush2.msra.mxu0 0.0
        %1484 = vmatprep.subr.mxu0 0.0
        %1485 = vmatpush2.msra.mxu0 0.0
        %1486 = vmatprep.subr.mxu0 0.0
        %1487 = vmatpush2.msra.mxu0 0.0
        %1488 = vmatprep.subr.mxu0 0.0
        %1489 = vmatpush2.msra.mxu0 0.0
        %1490 = vmatprep.subr.mxu0 0.0
        %1491 = vmatpush2.msra.mxu0 0.0
        %1492 = vmatprep.subr.mxu0 0.0
        %1493 = vmatpush2.msra.mxu0 0.0
        %1494 = vmatprep.subr.mxu0 0.0
        %1495 = vmatpush2.msra.mxu0 0.0
        %1496 = vmatprep.subr.mxu0 0.0
        %1497 = vmatpush2.msra.mxu0 0.0
        %1498 = vmatprep.subr.mxu0 0.0
        %1499 = vmatpush2.msra.mxu0 0.0
        %1500 = vmatprep.subr.mxu0 0.0
        %1501 = vmatpush2.msra.mxu0 0.0
        %1502 = vmatprep.mubr.f32.mxu0 0.0
        %v1503 = vand.u32 %v1022, 4294901760
        %1504 = vmatmul.mubr.f32.gmra.mxu0 %v1503
        %v1505 = vpop.f32.mrf.mxu0
        %v1506 = vadd.f32 %v1431, %v1505
        %v1507 = vpop.f32.mrf.mxu0
        %1508 = vdwg.mxu0
        %v1509 = vld [vmem:[#allocation7] sm:$0xff]
        %vm1510 = vcmask 64512
        %v1512 = vsel %vm1510, %v1014, 0
        %v1515 = vsel %vm1510, %v1506, 0
        %1517 = vmatprep.subr.mxu0 0.0
        %1518 = vmatpush1.xpose.msra.mxu0 0.0
        %1519 = vmatprep.subr.mxu0 0.0
        %1520 = vmatpush1.xpose.msra.mxu0 0.0
        %1521 = vmatprep.subr.mxu0 0.0
        %1522 = vmatpush1.xpose.msra.mxu0 0.0
        %1523 = vmatprep.subr.mxu0 0.0
        %1524 = vmatpush1.xpose.msra.mxu0 0.0
        %1525 = vmatprep.subr.mxu0 0.0
        %1526 = vmatpush1.xpose.msra.mxu0 0.0
        %1527 = vmatprep.subr.mxu0 0.0
        %1528 = vmatpush1.xpose.msra.mxu0 0.0
        %1529 = vmatprep.subr.mxu0 0.0
        %1530 = vmatpush1.xpose.msra.mxu0 0.0
        %1531 = vmatprep.subr.mxu0 0.0
        %1532 = vmatpush1.xpose.msra.mxu0 0.0
        %1533 = vmatprep.subr.mxu0 0.0
        %1534 = vmatpush1.xpose.msra.mxu0 0.0
        %1535 = vmatprep.subr.mxu0 0.0
        %1536 = vmatpush1.xpose.msra.mxu0 0.0
        %1537 = vmatprep.subr.mxu0 0.0
        %1538 = vmatpush1.xpose.msra.mxu0 0.0
        %1539 = vmatprep.subr.mxu0 0.0
        %1540 = vmatpush1.xpose.msra.mxu0 0.0
        %1541 = vmatprep.subr.mxu0 0.0
        %1542 = vmatpush1.xpose.msra.mxu0 0.0
        %1543 = vmatprep.subr.mxu0 0.0
        %1544 = vmatpush1.xpose.msra.mxu0 0.0
        %1545 = vmatprep.subr.mxu0 0.0
        %1546 = vmatpush1.xpose.msra.mxu0 0.0
        %1547 = vmatprep.subr.mxu0 0.0
        %v1548 = vand.u32 %v1515, 4294901760
        %1549 = vmatpush1.xpose.msra.mxu0 %v1548
        %1550 = vmatprep.subr.mxu0 0.0
        %1551 = vmatpush2.xpose.msra.mxu0 0.0
        %1552 = vmatprep.subr.mxu0 0.0
        %1553 = vmatpush2.xpose.msra.mxu0 0.0
        %1554 = vmatprep.subr.mxu0 0.0
        %1555 = vmatpush2.xpose.msra.mxu0 0.0
        %1556 = vmatprep.subr.mxu0 0.0
        %1557 = vmatpush2.xpose.msra.mxu0 0.0
        %1558 = vmatprep.subr.mxu0 0.0
        %1559 = vmatpush2.xpose.msra.mxu0 0.0
        %1560 = vmatprep.subr.mxu0 0.0
        %1561 = vmatpush2.xpose.msra.mxu0 0.0
        %1562 = vmatprep.subr.mxu0 0.0
        %1563 = vmatpush2.xpose.msra.mxu0 0.0
        %1564 = vmatprep.subr.mxu0 0.0
        %1565 = vmatpush2.xpose.msra.mxu0 0.0
        %1566 = vmatprep.subr.mxu0 0.0
        %1567 = vmatpush2.xpose.msra.mxu0 0.0
        %1568 = vmatprep.subr.mxu0 0.0
        %1569 = vmatpush2.xpose.msra.mxu0 0.0
        %1570 = vmatprep.subr.mxu0 0.0
        %1571 = vmatpush2.xpose.msra.mxu0 0.0
        %1572 = vmatprep.subr.mxu0 0.0
        %1573 = vmatpush2.xpose.msra.mxu0 0.0
        %1574 = vmatprep.subr.mxu0 0.0
        %1575 = vmatpush2.xpose.msra.mxu0 0.0
        %1576 = vmatprep.subr.mxu0 0.0
        %1577 = vmatpush2.xpose.msra.mxu0 0.0
        %1578 = vmatprep.subr.mxu0 0.0
        %1579 = vmatpush2.xpose.msra.mxu0 0.0
        %1580 = vmatprep.subr.mxu0 0.0
        %1581 = vmatpush2.xpose.msra.mxu0 0.0
        %1582 = vmatprep.mubr.f32.mxu0 0.0
        %v1583 = vand.u32 %v1512, 4294901760
        %v1584 = vsub.f32 %v1512, %v1583
        %v1585 = vand.u32 %v1584, 4294901760
        %v1586 = vsub.f32 %v1584, %v1585
        %v1587 = vand.u32 %v1586, 4294901760
        %1588 = vmatmul.mubr.f32.gmra.mxu0 %v1587
        %v1589 = vpop.f32.mrf.mxu0
        %v1590 = vadd.f32 %v1509, %v1589
        %v1591 = vpop.f32.mrf.mxu0
        %1592 = vdwg.mxu0
        %1593 = vmatprep.subr.mxu0 0.0
        %1594 = vmatpush1.xpose.msra.mxu0 0.0
        %1595 = vmatprep.subr.mxu0 0.0
        %1596 = vmatpush1.xpose.msra.mxu0 0.0
        %1597 = vmatprep.subr.mxu0 0.0
        %1598 = vmatpush1.xpose.msra.mxu0 0.0
        %1599 = vmatprep.subr.mxu0 0.0
        %1600 = vmatpush1.xpose.msra.mxu0 0.0
        %1601 = vmatprep.subr.mxu0 0.0
        %1602 = vmatpush1.xpose.msra.mxu0 0.0
        %1603 = vmatprep.subr.mxu0 0.0
        %1604 = vmatpush1.xpose.msra.mxu0 0.0
        %1605 = vmatprep.subr.mxu0 0.0
        %1606 = vmatpush1.xpose.msra.mxu0 0.0
        %1607 = vmatprep.subr.mxu0 0.0
        %1608 = vmatpush1.xpose.msra.mxu0 0.0
        %1609 = vmatprep.subr.mxu0 0.0
        %1610 = vmatpush1.xpose.msra.mxu0 0.0
        %1611 = vmatprep.subr.mxu0 0.0
        %1612 = vmatpush1.xpose.msra.mxu0 0.0
        %1613 = vmatprep.subr.mxu0 0.0
        %1614 = vmatpush1.xpose.msra.mxu0 0.0
        %1615 = vmatprep.subr.mxu0 0.0
        %1616 = vmatpush1.xpose.msra.mxu0 0.0
        %1617 = vmatprep.subr.mxu0 0.0
        %1618 = vmatpush1.xpose.msra.mxu0 0.0
        %1619 = vmatprep.subr.mxu0 0.0
        %1620 = vmatpush1.xpose.msra.mxu0 0.0
        %1621 = vmatprep.subr.mxu0 0.0
        %1622 = vmatpush1.xpose.msra.mxu0 0.0
        %1623 = vmatprep.subr.mxu0 0.0
        %v1624 = vand.u32 %v1515, 4294901760
        %v1625 = vsub.f32 %v1515, %v1624
        %v1626 = vand.u32 %v1625, 4294901760
        %v1627 = vsub.f32 %v1625, %v1626
        %v1628 = vand.u32 %v1627, 4294901760
        %1629 = vmatpush1.xpose.msra.mxu0 %v1628
        %1630 = vmatprep.subr.mxu0 0.0
        %1631 = vmatpush2.xpose.msra.mxu0 0.0
        %1632 = vmatprep.subr.mxu0 0.0
        %1633 = vmatpush2.xpose.msra.mxu0 0.0
        %1634 = vmatprep.subr.mxu0 0.0
        %1635 = vmatpush2.xpose.msra.mxu0 0.0
        %1636 = vmatprep.subr.mxu0 0.0
        %1637 = vmatpush2.xpose.msra.mxu0 0.0
        %1638 = vmatprep.subr.mxu0 0.0
        %1639 = vmatpush2.xpose.msra.mxu0 0.0
        %1640 = vmatprep.subr.mxu0 0.0
        %1641 = vmatpush2.xpose.msra.mxu0 0.0
        %1642 = vmatprep.subr.mxu0 0.0
        %1643 = vmatpush2.xpose.msra.mxu0 0.0
        %1644 = vmatprep.subr.mxu0 0.0
        %1645 = vmatpush2.xpose.msra.mxu0 0.0
        %1646 = vmatprep.subr.mxu0 0.0
        %1647 = vmatpush2.xpose.msra.mxu0 0.0
        %1648 = vmatprep.subr.mxu0 0.0
        %1649 = vmatpush2.xpose.msra.mxu0 0.0
        %1650 = vmatprep.subr.mxu0 0.0
        %1651 = vmatpush2.xpose.msra.mxu0 0.0
        %1652 = vmatprep.subr.mxu0 0.0
        %1653 = vmatpush2.xpose.msra.mxu0 0.0
        %1654 = vmatprep.subr.mxu0 0.0
        %1655 = vmatpush2.xpose.msra.mxu0 0.0
        %1656 = vmatprep.subr.mxu0 0.0
        %1657 = vmatpush2.xpose.msra.mxu0 0.0
        %1658 = vmatprep.subr.mxu0 0.0
        %1659 = vmatpush2.xpose.msra.mxu0 0.0
        %1660 = vmatprep.subr.mxu0 0.0
        %1661 = vmatpush2.xpose.msra.mxu0 0.0
        %1662 = vmatprep.mubr.f32.mxu0 0.0
        %v1663 = vand.u32 %v1512, 4294901760
        %1664 = vmatmul.mubr.f32.gmra.mxu0 %v1663
        %v1665 = vpop.f32.mrf.mxu0
        %v1666 = vadd.f32 %v1590, %v1665
        %v1667 = vpop.f32.mrf.mxu0
        %1668 = vdwg.mxu0
        %1669 = vmatprep.subr.mxu0 0.0
        %1670 = vmatpush1.xpose.msra.mxu0 0.0
        %1671 = vmatprep.subr.mxu0 0.0
        %1672 = vmatpush1.xpose.msra.mxu0 0.0
        %1673 = vmatprep.subr.mxu0 0.0
        %1674 = vmatpush1.xpose.msra.mxu0 0.0
        %1675 = vmatprep.subr.mxu0 0.0
        %1676 = vmatpush1.xpose.msra.mxu0 0.0
        %1677 = vmatprep.subr.mxu0 0.0
        %1678 = vmatpush1.xpose.msra.mxu0 0.0
        %1679 = vmatprep.subr.mxu0 0.0
        %1680 = vmatpush1.xpose.msra.mxu0 0.0
        %1681 = vmatprep.subr.mxu0 0.0
        %1682 = vmatpush1.xpose.msra.mxu0 0.0
        %1683 = vmatprep.subr.mxu0 0.0
        %1684 = vmatpush1.xpose.msra.mxu0 0.0
        %1685 = vmatprep.subr.mxu0 0.0
        %1686 = vmatpush1.xpose.msra.mxu0 0.0
        %1687 = vmatprep.subr.mxu0 0.0
        %1688 = vmatpush1.xpose.msra.mxu0 0.0
        %1689 = vmatprep.subr.mxu0 0.0
        %1690 = vmatpush1.xpose.msra.mxu0 0.0
        %1691 = vmatprep.subr.mxu0 0.0
        %1692 = vmatpush1.xpose.msra.mxu0 0.0
        %1693 = vmatprep.subr.mxu0 0.0
        %1694 = vmatpush1.xpose.msra.mxu0 0.0
        %1695 = vmatprep.subr.mxu0 0.0
        %1696 = vmatpush1.xpose.msra.mxu0 0.0
        %1697 = vmatprep.subr.mxu0 0.0
        %1698 = vmatpush1.xpose.msra.mxu0 0.0
        %1699 = vmatprep.subr.mxu0 0.0
        %v1700 = vand.u32 %v1515, 4294901760
        %v1701 = vsub.f32 %v1515, %v1700
        %1702 = vmatpush1.xpose.msra.mxu0 %v1701
        %1703 = vmatprep.subr.mxu0 0.0
        %1704 = vmatpush2.xpose.msra.mxu0 0.0
        %1705 = vmatprep.subr.mxu0 0.0
        %1706 = vmatpush2.xpose.msra.mxu0 0.0
        %1707 = vmatprep.subr.mxu0 0.0
        %1708 = vmatpush2.xpose.msra.mxu0 0.0
        %1709 = vmatprep.subr.mxu0 0.0
        %1710 = vmatpush2.xpose.msra.mxu0 0.0
        %1711 = vmatprep.subr.mxu0 0.0
        %1712 = vmatpush2.xpose.msra.mxu0 0.0
        %1713 = vmatprep.subr.mxu0 0.0
        %1714 = vmatpush2.xpose.msra.mxu0 0.0
        %1715 = vmatprep.subr.mxu0 0.0
        %1716 = vmatpush2.xpose.msra.mxu0 0.0
        %1717 = vmatprep.subr.mxu0 0.0
        %1718 = vmatpush2.xpose.msra.mxu0 0.0
        %1719 = vmatprep.subr.mxu0 0.0
        %1720 = vmatpush2.xpose.msra.mxu0 0.0
        %1721 = vmatprep.subr.mxu0 0.0
        %1722 = vmatpush2.xpose.msra.mxu0 0.0
        %1723 = vmatprep.subr.mxu0 0.0
        %1724 = vmatpush2.xpose.msra.mxu0 0.0
        %1725 = vmatprep.subr.mxu0 0.0
        %1726 = vmatpush2.xpose.msra.mxu0 0.0
        %1727 = vmatprep.subr.mxu0 0.0
        %1728 = vmatpush2.xpose.msra.mxu0 0.0
        %1729 = vmatprep.subr.mxu0 0.0
        %1730 = vmatpush2.xpose.msra.mxu0 0.0
        %1731 = vmatprep.subr.mxu0 0.0
        %1732 = vmatpush2.xpose.msra.mxu0 0.0
        %1733 = vmatprep.subr.mxu0 0.0
        %1734 = vmatpush2.xpose.msra.mxu0 0.0
        %1735 = vmatprep.mubr.f32.mxu0 0.0
        %v1736 = vand.u32 %v1512, 4294901760
        %v1737 = vsub.f32 %v1512, %v1736
        %1738 = vmatmul.mubr.f32.gmra.mxu0 %v1737
        %v1739 = vpop.f32.mrf.mxu0
        %v1740 = vadd.f32 %v1666, %v1739
        %v1741 = vpop.f32.mrf.mxu0
        %1742 = vdwg.mxu0
        %1743 = vmatprep.subr.mxu0 0.0
        %1744 = vmatpush1.xpose.msra.mxu0 0.0
        %1745 = vmatprep.subr.mxu0 0.0
        %1746 = vmatpush1.xpose.msra.mxu0 0.0
        %1747 = vmatprep.subr.mxu0 0.0
        %1748 = vmatpush1.xpose.msra.mxu0 0.0
        %1749 = vmatprep.subr.mxu0 0.0
        %1750 = vmatpush1.xpose.msra.mxu0 0.0
        %1751 = vmatprep.subr.mxu0 0.0
        %1752 = vmatpush1.xpose.msra.mxu0 0.0
        %1753 = vmatprep.subr.mxu0 0.0
        %1754 = vmatpush1.xpose.msra.mxu0 0.0
        %1755 = vmatprep.subr.mxu0 0.0
        %1756 = vmatpush1.xpose.msra.mxu0 0.0
        %1757 = vmatprep.subr.mxu0 0.0
        %1758 = vmatpush1.xpose.msra.mxu0 0.0
        %1759 = vmatprep.subr.mxu0 0.0
        %1760 = vmatpush1.xpose.msra.mxu0 0.0
        %1761 = vmatprep.subr.mxu0 0.0
        %1762 = vmatpush1.xpose.msra.mxu0 0.0
        %1763 = vmatprep.subr.mxu0 0.0
        %1764 = vmatpush1.xpose.msra.mxu0 0.0
        %1765 = vmatprep.subr.mxu0 0.0
        %1766 = vmatpush1.xpose.msra.mxu0 0.0
        %1767 = vmatprep.subr.mxu0 0.0
        %1768 = vmatpush1.xpose.msra.mxu0 0.0
        %1769 = vmatprep.subr.mxu0 0.0
        %1770 = vmatpush1.xpose.msra.mxu0 0.0
        %1771 = vmatprep.subr.mxu0 0.0
        %1772 = vmatpush1.xpose.msra.mxu0 0.0
        %1773 = vmatprep.subr.mxu0 0.0
        %v1774 = vand.u32 %v1515, 4294901760
        %1775 = vmatpush1.xpose.msra.mxu0 %v1774
        %1776 = vmatprep.subr.mxu0 0.0
        %1777 = vmatpush2.xpose.msra.mxu0 0.0
        %1778 = vmatprep.subr.mxu0 0.0
        %1779 = vmatpush2.xpose.msra.mxu0 0.0
        %1780 = vmatprep.subr.mxu0 0.0
        %1781 = vmatpush2.xpose.msra.mxu0 0.0
        %1782 = vmatprep.subr.mxu0 0.0
        %1783 = vmatpush2.xpose.msra.mxu0 0.0
        %1784 = vmatprep.subr.mxu0 0.0
        %1785 = vmatpush2.xpose.msra.mxu0 0.0
        %1786 = vmatprep.subr.mxu0 0.0
        %1787 = vmatpush2.xpose.msra.mxu0 0.0
        %1788 = vmatprep.subr.mxu0 0.0
        %1789 = vmatpush2.xpose.msra.mxu0 0.0
        %1790 = vmatprep.subr.mxu0 0.0
        %1791 = vmatpush2.xpose.msra.mxu0 0.0
        %1792 = vmatprep.subr.mxu0 0.0
        %1793 = vmatpush2.xpose.msra.mxu0 0.0
        %1794 = vmatprep.subr.mxu0 0.0
        %1795 = vmatpush2.xpose.msra.mxu0 0.0
        %1796 = vmatprep.subr.mxu0 0.0
        %1797 = vmatpush2.xpose.msra.mxu0 0.0
        %1798 = vmatprep.subr.mxu0 0.0
        %1799 = vmatpush2.xpose.msra.mxu0 0.0
        %1800 = vmatprep.subr.mxu0 0.0
        %1801 = vmatpush2.xpose.msra.mxu0 0.0
        %1802 = vmatprep.subr.mxu0 0.0
        %1803 = vmatpush2.xpose.msra.mxu0 0.0
        %1804 = vmatprep.subr.mxu0 0.0
        %1805 = vmatpush2.xpose.msra.mxu0 0.0
        %1806 = vmatprep.subr.mxu0 0.0
        %1807 = vmatpush2.xpose.msra.mxu0 0.0
        %1808 = vmatprep.mubr.f32.mxu0 0.0
        %v1809 = vand.u32 %v1512, 4294901760
        %v1810 = vsub.f32 %v1512, %v1809
        %v1811 = vand.u32 %v1810, 4294901760
        %1812 = vmatmul.mubr.f32.gmra.mxu0 %v1811
        %v1813 = vpop.f32.mrf.mxu0
        %v1814 = vadd.f32 %v1740, %v1813
        %v1815 = vpop.f32.mrf.mxu0
        %1816 = vdwg.mxu0
        %1817 = vmatprep.subr.mxu0 0.0
        %1818 = vmatpush1.xpose.msra.mxu0 0.0
        %1819 = vmatprep.subr.mxu0 0.0
        %1820 = vmatpush1.xpose.msra.mxu0 0.0
        %1821 = vmatprep.subr.mxu0 0.0
        %1822 = vmatpush1.xpose.msra.mxu0 0.0
        %1823 = vmatprep.subr.mxu0 0.0
        %1824 = vmatpush1.xpose.msra.mxu0 0.0
        %1825 = vmatprep.subr.mxu0 0.0
        %1826 = vmatpush1.xpose.msra.mxu0 0.0
        %1827 = vmatprep.subr.mxu0 0.0
        %1828 = vmatpush1.xpose.msra.mxu0 0.0
        %1829 = vmatprep.subr.mxu0 0.0
        %1830 = vmatpush1.xpose.msra.mxu0 0.0
        %1831 = vmatprep.subr.mxu0 0.0
        %1832 = vmatpush1.xpose.msra.mxu0 0.0
        %1833 = vmatprep.subr.mxu0 0.0
        %1834 = vmatpush1.xpose.msra.mxu0 0.0
        %1835 = vmatprep.subr.mxu0 0.0
        %1836 = vmatpush1.xpose.msra.mxu0 0.0
        %1837 = vmatprep.subr.mxu0 0.0
        %1838 = vmatpush1.xpose.msra.mxu0 0.0
        %1839 = vmatprep.subr.mxu0 0.0
        %1840 = vmatpush1.xpose.msra.mxu0 0.0
        %1841 = vmatprep.subr.mxu0 0.0
        %1842 = vmatpush1.xpose.msra.mxu0 0.0
        %1843 = vmatprep.subr.mxu0 0.0
        %1844 = vmatpush1.xpose.msra.mxu0 0.0
        %1845 = vmatprep.subr.mxu0 0.0
        %1846 = vmatpush1.xpose.msra.mxu0 0.0
        %1847 = vmatprep.subr.mxu0 0.0
        %v1848 = vand.u32 %v1515, 4294901760
        %v1849 = vsub.f32 %v1515, %v1848
        %v1850 = vand.u32 %v1849, 4294901760
        %1851 = vmatpush1.xpose.msra.mxu0 %v1850
        %1852 = vmatprep.subr.mxu0 0.0
        %1853 = vmatpush2.xpose.msra.mxu0 0.0
        %1854 = vmatprep.subr.mxu0 0.0
        %1855 = vmatpush2.xpose.msra.mxu0 0.0
        %1856 = vmatprep.subr.mxu0 0.0
        %1857 = vmatpush2.xpose.msra.mxu0 0.0
        %1858 = vmatprep.subr.mxu0 0.0
        %1859 = vmatpush2.xpose.msra.mxu0 0.0
        %1860 = vmatprep.subr.mxu0 0.0
        %1861 = vmatpush2.xpose.msra.mxu0 0.0
        %1862 = vmatprep.subr.mxu0 0.0
        %1863 = vmatpush2.xpose.msra.mxu0 0.0
        %1864 = vmatprep.subr.mxu0 0.0
        %1865 = vmatpush2.xpose.msra.mxu0 0.0
        %1866 = vmatprep.subr.mxu0 0.0
        %1867 = vmatpush2.xpose.msra.mxu0 0.0
        %1868 = vmatprep.subr.mxu0 0.0
        %1869 = vmatpush2.xpose.msra.mxu0 0.0
        %1870 = vmatprep.subr.mxu0 0.0
        %1871 = vmatpush2.xpose.msra.mxu0 0.0
        %1872 = vmatprep.subr.mxu0 0.0
        %1873 = vmatpush2.xpose.msra.mxu0 0.0
        %1874 = vmatprep.subr.mxu0 0.0
        %1875 = vmatpush2.xpose.msra.mxu0 0.0
        %1876 = vmatprep.subr.mxu0 0.0
        %1877 = vmatpush2.xpose.msra.mxu0 0.0
        %1878 = vmatprep.subr.mxu0 0.0
        %1879 = vmatpush2.xpose.msra.mxu0 0.0
        %1880 = vmatprep.subr.mxu0 0.0
        %1881 = vmatpush2.xpose.msra.mxu0 0.0
        %1882 = vmatprep.subr.mxu0 0.0
        %1883 = vmatpush2.xpose.msra.mxu0 0.0
        %1884 = vmatprep.mubr.f32.mxu0 0.0
        %v1885 = vand.u32 %v1512, 4294901760
        %1886 = vmatmul.mubr.f32.gmra.mxu0 %v1885
        %v1887 = vpop.f32.mrf.mxu0
        %v1888 = vadd.f32 %v1814, %v1887
        %v1889 = vpop.f32.mrf.mxu0
        %1890 = vdwg.mxu0
        %1891 = vmatprep.subr.mxu0 0.0
        %1892 = vmatpush1.xpose.msra.mxu0 0.0
        %1893 = vmatprep.subr.mxu0 0.0
        %1894 = vmatpush1.xpose.msra.mxu0 0.0
        %1895 = vmatprep.subr.mxu0 0.0
        %1896 = vmatpush1.xpose.msra.mxu0 0.0
        %1897 = vmatprep.subr.mxu0 0.0
        %1898 = vmatpush1.xpose.msra.mxu0 0.0
        %1899 = vmatprep.subr.mxu0 0.0
        %1900 = vmatpush1.xpose.msra.mxu0 0.0
        %1901 = vmatprep.subr.mxu0 0.0
        %1902 = vmatpush1.xpose.msra.mxu0 0.0
        %1903 = vmatprep.subr.mxu0 0.0
        %1904 = vmatpush1.xpose.msra.mxu0 0.0
        %1905 = vmatprep.subr.mxu0 0.0
        %1906 = vmatpush1.xpose.msra.mxu0 0.0
        %1907 = vmatprep.subr.mxu0 0.0
        %1908 = vmatpush1.xpose.msra.mxu0 0.0
        %1909 = vmatprep.subr.mxu0 0.0
        %1910 = vmatpush1.xpose.msra.mxu0 0.0
        %1911 = vmatprep.subr.mxu0 0.0
        %1912 = vmatpush1.xpose.msra.mxu0 0.0
        %1913 = vmatprep.subr.mxu0 0.0
        %1914 = vmatpush1.xpose.msra.mxu0 0.0
        %1915 = vmatprep.subr.mxu0 0.0
        %1916 = vmatpush1.xpose.msra.mxu0 0.0
        %1917 = vmatprep.subr.mxu0 0.0
        %1918 = vmatpush1.xpose.msra.mxu0 0.0
        %1919 = vmatprep.subr.mxu0 0.0
        %1920 = vmatpush1.xpose.msra.mxu0 0.0
        %1921 = vmatprep.subr.mxu0 0.0
        %v1922 = vand.u32 %v1515, 4294901760
        %1923 = vmatpush1.xpose.msra.mxu0 %v1922
        %1924 = vmatprep.subr.mxu0 0.0
        %1925 = vmatpush2.xpose.msra.mxu0 0.0
        %1926 = vmatprep.subr.mxu0 0.0
        %1927 = vmatpush2.xpose.msra.mxu0 0.0
        %1928 = vmatprep.subr.mxu0 0.0
        %1929 = vmatpush2.xpose.msra.mxu0 0.0
        %1930 = vmatprep.subr.mxu0 0.0
        %1931 = vmatpush2.xpose.msra.mxu0 0.0
        %1932 = vmatprep.subr.mxu0 0.0
        %1933 = vmatpush2.xpose.msra.mxu0 0.0
        %1934 = vmatprep.subr.mxu0 0.0
        %1935 = vmatpush2.xpose.msra.mxu0 0.0
        %1936 = vmatprep.subr.mxu0 0.0
        %1937 = vmatpush2.xpose.msra.mxu0 0.0
        %1938 = vmatprep.subr.mxu0 0.0
        %1939 = vmatpush2.xpose.msra.mxu0 0.0
        %1940 = vmatprep.subr.mxu0 0.0
        %1941 = vmatpush2.xpose.msra.mxu0 0.0
        %1942 = vmatprep.subr.mxu0 0.0
        %1943 = vmatpush2.xpose.msra.mxu0 0.0
        %1944 = vmatprep.subr.mxu0 0.0
        %1945 = vmatpush2.xpose.msra.mxu0 0.0
        %1946 = vmatprep.subr.mxu0 0.0
        %1947 = vmatpush2.xpose.msra.mxu0 0.0
        %1948 = vmatprep.subr.mxu0 0.0
        %1949 = vmatpush2.xpose.msra.mxu0 0.0
        %1950 = vmatprep.subr.mxu0 0.0
        %1951 = vmatpush2.xpose.msra.mxu0 0.0
        %1952 = vmatprep.subr.mxu0 0.0
        %1953 = vmatpush2.xpose.msra.mxu0 0.0
        %1954 = vmatprep.subr.mxu0 0.0
        %1955 = vmatpush2.xpose.msra.mxu0 0.0
        %1956 = vmatprep.mubr.f32.mxu0 0.0
        %v1957 = vand.u32 %v1512, 4294901760
        %1958 = vmatmul.mubr.f32.gmra.mxu0 %v1957
        %v1959 = vpop.f32.mrf.mxu0
        %v1960 = vadd.f32 %v1888, %v1959
        %v1961 = vpop.f32.mrf.mxu0
        %1962 = vdwg.mxu0
        %v1964 = vlaneseq
        %v1965 = vshrl.u32 %v1964, 7
        %v1966 = vsub.s32 0, %v1965
        %v1967 = vrot.slane %v500, %v1966
        %v1969 = vadd.f32 %v1960, %v1967
        %v1970 = vsel %vm1510, %v1969, -inf
        %1971 = vmax.xlane.f32.xlu0 %v1970
        %v1972 = vpop.xlane.xlu0 %1971
        %v1973 = vsub.f32 %v1969, %v1972
        %v1974 = vmul.f32 %v1973, 1.442695
        %v1975 = vpow.pop %v1974
        %v1976 = vsel %vm1510, %v1975, 0.0
        %1977 = vadd.xlane.f32.xlu0 %v1976
        %v1978 = vpop.xlane.xlu0 %1977
        %v1979 = vrcp.pop %v1978
        %v1980 = vmul.f32 %v1975, %v1979
        %1981 = vrot.lane.b32.xlu0 %v1506, 96
        %v1982 = vpop.permute.xlu0 %1981
        %v1985 = vsel %vm1510, %v1980, 0
        %1987 = vmatprep.subr.mxu0 0.0
        %1988 = vmatpush1.msra.mxu0 0.0
        %1989 = vmatprep.subr.mxu0 0.0
        %1990 = vmatpush1.msra.mxu0 0.0
        %1991 = vmatprep.subr.mxu0 0.0
        %1992 = vmatpush1.msra.mxu0 0.0
        %1993 = vmatprep.subr.mxu0 0.0
        %1994 = vmatpush1.msra.mxu0 0.0
        %1995 = vmatprep.subr.mxu0 0.0
        %1996 = vmatpush1.msra.mxu0 0.0
        %1997 = vmatprep.subr.mxu0 0.0
        %1998 = vmatpush1.msra.mxu0 0.0
        %1999 = vmatprep.subr.mxu0 0.0
        %2000 = vmatpush1.msra.mxu0 0.0
        %2001 = vmatprep.subr.mxu0 0.0
        %2002 = vmatpush1.msra.mxu0 0.0
        %2003 = vmatprep.subr.mxu0 0.0
        %2004 = vmatpush1.msra.mxu0 0.0
        %2005 = vmatprep.subr.mxu0 0.0
        %2006 = vmatpush1.msra.mxu0 0.0
        %2007 = vmatprep.subr.mxu0 0.0
        %2008 = vmatpush1.msra.mxu0 0.0
        %2009 = vmatprep.subr.mxu0 0.0
        %2010 = vmatpush1.msra.mxu0 0.0
        %2011 = vmatprep.subr.mxu0 0.0
        %2012 = vmatpush1.msra.mxu0 0.0
        %2013 = vmatprep.subr.mxu0 0.0
        %2014 = vmatpush1.msra.mxu0 0.0
        %2015 = vmatprep.subr.mxu0 0.0
        %2016 = vmatpush1.msra.mxu0 0.0
        %2017 = vmatprep.subr.mxu0 0.0
        %v2018 = vand.u32 %v1982, 4294901760
        %2019 = vmatpush1.msra.mxu0 %v2018
        %2020 = vmatprep.subr.mxu0 0.0
        %2021 = vmatpush2.msra.mxu0 0.0
        %2022 = vmatprep.subr.mxu0 0.0
        %2023 = vmatpush2.msra.mxu0 0.0
        %2024 = vmatprep.subr.mxu0 0.0
        %2025 = vmatpush2.msra.mxu0 0.0
        %2026 = vmatprep.subr.mxu0 0.0
        %2027 = vmatpush2.msra.mxu0 0.0
        %2028 = vmatprep.subr.mxu0 0.0
        %2029 = vmatpush2.msra.mxu0 0.0
        %2030 = vmatprep.subr.mxu0 0.0
        %2031 = vmatpush2.msra.mxu0 0.0
        %2032 = vmatprep.subr.mxu0 0.0
        %2033 = vmatpush2.msra.mxu0 0.0
        %2034 = vmatprep.subr.mxu0 0.0
        %2035 = vmatpush2.msra.mxu0 0.0
        %2036 = vmatprep.subr.mxu0 0.0
        %2037 = vmatpush2.msra.mxu0 0.0
        %2038 = vmatprep.subr.mxu0 0.0
        %2039 = vmatpush2.msra.mxu0 0.0
        %2040 = vmatprep.subr.mxu0 0.0
        %2041 = vmatpush2.msra.mxu0 0.0
        %2042 = vmatprep.subr.mxu0 0.0
        %2043 = vmatpush2.msra.mxu0 0.0
        %2044 = vmatprep.subr.mxu0 0.0
        %2045 = vmatpush2.msra.mxu0 0.0
        %2046 = vmatprep.subr.mxu0 0.0
        %2047 = vmatpush2.msra.mxu0 0.0
        %2048 = vmatprep.subr.mxu0 0.0
        %2049 = vmatpush2.msra.mxu0 0.0
        %2050 = vmatprep.subr.mxu0 0.0
        %2051 = vmatpush2.msra.mxu0 0.0
        %2052 = vmatprep.mubr.f32.mxu0 0.0
        %v2053 = vand.u32 %v1985, 4294901760
        %v2054 = vsub.f32 %v1985, %v2053
        %v2055 = vand.u32 %v2054, 4294901760
        %v2056 = vsub.f32 %v2054, %v2055
        %v2057 = vand.u32 %v2056, 4294901760
        %2058 = vmatmul.mubr.f32.gmra.mxu0 %v2057
        %v2059 = vpop.f32.mrf.mxu0
        %v2060 = vadd.f32 0.0, %v2059
        %v2061 = vpop.f32.mrf.mxu0
        %2062 = vdwg.mxu0
        %2063 = vmatprep.subr.mxu0 0.0
        %2064 = vmatpush1.msra.mxu0 0.0
        %2065 = vmatprep.subr.mxu0 0.0
        %2066 = vmatpush1.msra.mxu0 0.0
        %2067 = vmatprep.subr.mxu0 0.0
        %2068 = vmatpush1.msra.mxu0 0.0
        %2069 = vmatprep.subr.mxu0 0.0
        %2070 = vmatpush1.msra.mxu0 0.0
        %2071 = vmatprep.subr.mxu0 0.0
        %2072 = vmatpush1.msra.mxu0 0.0
        %2073 = vmatprep.subr.mxu0 0.0
        %2074 = vmatpush1.msra.mxu0 0.0
        %2075 = vmatprep.subr.mxu0 0.0
        %2076 = vmatpush1.msra.mxu0 0.0
        %2077 = vmatprep.subr.mxu0 0.0
        %2078 = vmatpush1.msra.mxu0 0.0
        %2079 = vmatprep.subr.mxu0 0.0
        %2080 = vmatpush1.msra.mxu0 0.0
        %2081 = vmatprep.subr.mxu0 0.0
        %2082 = vmatpush1.msra.mxu0 0.0
        %2083 = vmatprep.subr.mxu0 0.0
        %2084 = vmatpush1.msra.mxu0 0.0
        %2085 = vmatprep.subr.mxu0 0.0
        %2086 = vmatpush1.msra.mxu0 0.0
        %2087 = vmatprep.subr.mxu0 0.0
        %2088 = vmatpush1.msra.mxu0 0.0
        %2089 = vmatprep.subr.mxu0 0.0
        %2090 = vmatpush1.msra.mxu0 0.0
        %2091 = vmatprep.subr.mxu0 0.0
        %2092 = vmatpush1.msra.mxu0 0.0
        %2093 = vmatprep.subr.mxu0 0.0
        %v2094 = vand.u32 %v1982, 4294901760
        %v2095 = vsub.f32 %v1982, %v2094
        %v2096 = vand.u32 %v2095, 4294901760
        %v2097 = vsub.f32 %v2095, %v2096
        %v2098 = vand.u32 %v2097, 4294901760
        %2099 = vmatpush1.msra.mxu0 %v2098
        %2100 = vmatprep.subr.mxu0 0.0
        %2101 = vmatpush2.msra.mxu0 0.0
        %2102 = vmatprep.subr.mxu0 0.0
        %2103 = vmatpush2.msra.mxu0 0.0
        %2104 = vmatprep.subr.mxu0 0.0
        %2105 = vmatpush2.msra.mxu0 0.0
        %2106 = vmatprep.subr.mxu0 0.0
        %2107 = vmatpush2.msra.mxu0 0.0
        %2108 = vmatprep.subr.mxu0 0.0
        %2109 = vmatpush2.msra.mxu0 0.0
        %2110 = vmatprep.subr.mxu0 0.0
        %2111 = vmatpush2.msra.mxu0 0.0
        %2112 = vmatprep.subr.mxu0 0.0
        %2113 = vmatpush2.msra.mxu0 0.0
        %2114 = vmatprep.subr.mxu0 0.0
        %2115 = vmatpush2.msra.mxu0 0.0
        %2116 = vmatprep.subr.mxu0 0.0
        %2117 = vmatpush2.msra.mxu0 0.0
        %2118 = vmatprep.subr.mxu0 0.0
        %2119 = vmatpush2.msra.mxu0 0.0
        %2120 = vmatprep.subr.mxu0 0.0
        %2121 = vmatpush2.msra.mxu0 0.0
        %2122 = vmatprep.subr.mxu0 0.0
        %2123 = vmatpush2.msra.mxu0 0.0
        %2124 = vmatprep.subr.mxu0 0.0
        %2125 = vmatpush2.msra.mxu0 0.0
        %2126 = vmatprep.subr.mxu0 0.0
        %2127 = vmatpush2.msra.mxu0 0.0
        %2128 = vmatprep.subr.mxu0 0.0
        %2129 = vmatpush2.msra.mxu0 0.0
        %2130 = vmatprep.subr.mxu0 0.0
        %2131 = vmatpush2.msra.mxu0 0.0
        %2132 = vmatprep.mubr.f32.mxu0 0.0
        %v2133 = vand.u32 %v1985, 4294901760
        %2134 = vmatmul.mubr.f32.gmra.mxu0 %v2133
        %v2135 = vpop.f32.mrf.mxu0
        %v2136 = vadd.f32 %v2060, %v2135
        %v2137 = vpop.f32.mrf.mxu0
        %2138 = vdwg.mxu0
        %2139 = vmatprep.subr.mxu0 0.0
        %2140 = vmatpush1.msra.mxu0 0.0
        %2141 = vmatprep.subr.mxu0 0.0
        %2142 = vmatpush1.msra.mxu0 0.0
        %2143 = vmatprep.subr.mxu0 0.0
        %2144 = vmatpush1.msra.mxu0 0.0
        %2145 = vmatprep.subr.mxu0 0.0
        %2146 = vmatpush1.msra.mxu0 0.0
        %2147 = vmatprep.subr.mxu0 0.0
        %2148 = vmatpush1.msra.mxu0 0.0
        %2149 = vmatprep.subr.mxu0 0.0
        %2150 = vmatpush1.msra.mxu0 0.0
        %2151 = vmatprep.subr.mxu0 0.0
        %2152 = vmatpush1.msra.mxu0 0.0
        %2153 = vmatprep.subr.mxu0 0.0
        %2154 = vmatpush1.msra.mxu0 0.0
        %2155 = vmatprep.subr.mxu0 0.0
        %2156 = vmatpush1.msra.mxu0 0.0
        %2157 = vmatprep.subr.mxu0 0.0
        %2158 = vmatpush1.msra.mxu0 0.0
        %2159 = vmatprep.subr.mxu0 0.0
        %2160 = vmatpush1.msra.mxu0 0.0
        %2161 = vmatprep.subr.mxu0 0.0
        %2162 = vmatpush1.msra.mxu0 0.0
        %2163 = vmatprep.subr.mxu0 0.0
        %2164 = vmatpush1.msra.mxu0 0.0
        %2165 = vmatprep.subr.mxu0 0.0
        %2166 = vmatpush1.msra.mxu0 0.0
        %2167 = vmatprep.subr.mxu0 0.0
        %2168 = vmatpush1.msra.mxu0 0.0
        %2169 = vmatprep.subr.mxu0 0.0
        %v2170 = vand.u32 %v1982, 4294901760
        %v2171 = vsub.f32 %v1982, %v2170
        %2172 = vmatpush1.msra.mxu0 %v2171
        %2173 = vmatprep.subr.mxu0 0.0
        %2174 = vmatpush2.msra.mxu0 0.0
        %2175 = vmatprep.subr.mxu0 0.0
        %2176 = vmatpush2.msra.mxu0 0.0
        %2177 = vmatprep.subr.mxu0 0.0
        %2178 = vmatpush2.msra.mxu0 0.0
        %2179 = vmatprep.subr.mxu0 0.0
        %2180 = vmatpush2.msra.mxu0 0.0
        %2181 = vmatprep.subr.mxu0 0.0
        %2182 = vmatpush2.msra.mxu0 0.0
        %2183 = vmatprep.subr.mxu0 0.0
        %2184 = vmatpush2.msra.mxu0 0.0
        %2185 = vmatprep.subr.mxu0 0.0
        %2186 = vmatpush2.msra.mxu0 0.0
        %2187 = vmatprep.subr.mxu0 0.0
        %2188 = vmatpush2.msra.mxu0 0.0
        %2189 = vmatprep.subr.mxu0 0.0
        %2190 = vmatpush2.msra.mxu0 0.0
        %2191 = vmatprep.subr.mxu0 0.0
        %2192 = vmatpush2.msra.mxu0 0.0
        %2193 = vmatprep.subr.mxu0 0.0
        %2194 = vmatpush2.msra.mxu0 0.0
        %2195 = vmatprep.subr.mxu0 0.0
        %2196 = vmatpush2.msra.mxu0 0.0
        %2197 = vmatprep.subr.mxu0 0.0
        %2198 = vmatpush2.msra.mxu0 0.0
        %2199 = vmatprep.subr.mxu0 0.0
        %2200 = vmatpush2.msra.mxu0 0.0
        %2201 = vmatprep.subr.mxu0 0.0
        %2202 = vmatpush2.msra.mxu0 0.0
        %2203 = vmatprep.subr.mxu0 0.0
        %2204 = vmatpush2.msra.mxu0 0.0
        %2205 = vmatprep.mubr.f32.mxu0 0.0
        %v2206 = vand.u32 %v1985, 4294901760
        %v2207 = vsub.f32 %v1985, %v2206
        %2208 = vmatmul.mubr.f32.gmra.mxu0 %v2207
        %v2209 = vpop.f32.mrf.mxu0
        %v2210 = vadd.f32 %v2136, %v2209
        %v2211 = vpop.f32.mrf.mxu0
        %2212 = vdwg.mxu0
        %2213 = vmatprep.subr.mxu0 0.0
        %2214 = vmatpush1.msra.mxu0 0.0
        %2215 = vmatprep.subr.mxu0 0.0
        %2216 = vmatpush1.msra.mxu0 0.0
        %2217 = vmatprep.subr.mxu0 0.0
        %2218 = vmatpush1.msra.mxu0 0.0
        %2219 = vmatprep.subr.mxu0 0.0
        %2220 = vmatpush1.msra.mxu0 0.0
        %2221 = vmatprep.subr.mxu0 0.0
        %2222 = vmatpush1.msra.mxu0 0.0
        %2223 = vmatprep.subr.mxu0 0.0
        %2224 = vmatpush1.msra.mxu0 0.0
        %2225 = vmatprep.subr.mxu0 0.0
        %2226 = vmatpush1.msra.mxu0 0.0
        %2227 = vmatprep.subr.mxu0 0.0
        %2228 = vmatpush1.msra.mxu0 0.0
        %2229 = vmatprep.subr.mxu0 0.0
        %2230 = vmatpush1.msra.mxu0 0.0
        %2231 = vmatprep.subr.mxu0 0.0
        %2232 = vmatpush1.msra.mxu0 0.0
        %2233 = vmatprep.subr.mxu0 0.0
        %2234 = vmatpush1.msra.mxu0 0.0
        %2235 = vmatprep.subr.mxu0 0.0
        %2236 = vmatpush1.msra.mxu0 0.0
        %2237 = vmatprep.subr.mxu0 0.0
        %2238 = vmatpush1.msra.mxu0 0.0
        %2239 = vmatprep.subr.mxu0 0.0
        %2240 = vmatpush1.msra.mxu0 0.0
        %2241 = vmatprep.subr.mxu0 0.0
        %2242 = vmatpush1.msra.mxu0 0.0
        %2243 = vmatprep.subr.mxu0 0.0
        %v2244 = vand.u32 %v1982, 4294901760
        %2245 = vmatpush1.msra.mxu0 %v2244
        %2246 = vmatprep.subr.mxu0 0.0
        %2247 = vmatpush2.msra.mxu0 0.0
        %2248 = vmatprep.subr.mxu0 0.0
        %2249 = vmatpush2.msra.mxu0 0.0
        %2250 = vmatprep.subr.mxu0 0.0
        %2251 = vmatpush2.msra.mxu0 0.0
        %2252 = vmatprep.subr.mxu0 0.0
        %2253 = vmatpush2.msra.mxu0 0.0
        %2254 = vmatprep.subr.mxu0 0.0
        %2255 = vmatpush2.msra.mxu0 0.0
        %2256 = vmatprep.subr.mxu0 0.0
        %2257 = vmatpush2.msra.mxu0 0.0
        %2258 = vmatprep.subr.mxu0 0.0
        %2259 = vmatpush2.msra.mxu0 0.0
        %2260 = vmatprep.subr.mxu0 0.0
        %2261 = vmatpush2.msra.mxu0 0.0
        %2262 = vmatprep.subr.mxu0 0.0
        %2263 = vmatpush2.msra.mxu0 0.0
        %2264 = vmatprep.subr.mxu0 0.0
        %2265 = vmatpush2.msra.mxu0 0.0
        %2266 = vmatprep.subr.mxu0 0.0
        %2267 = vmatpush2.msra.mxu0 0.0
        %2268 = vmatprep.subr.mxu0 0.0
        %2269 = vmatpush2.msra.mxu0 0.0
        %2270 = vmatprep.subr.mxu0 0.0
        %2271 = vmatpush2.msra.mxu0 0.0
        %2272 = vmatprep.subr.mxu0 0.0
        %2273 = vmatpush2.msra.mxu0 0.0
        %2274 = vmatprep.subr.mxu0 0.0
        %2275 = vmatpush2.msra.mxu0 0.0
        %2276 = vmatprep.subr.mxu0 0.0
        %2277 = vmatpush2.msra.mxu0 0.0
        %2278 = vmatprep.mubr.f32.mxu0 0.0
        %v2279 = vand.u32 %v1985, 4294901760
        %v2280 = vsub.f32 %v1985, %v2279
        %v2281 = vand.u32 %v2280, 4294901760
        %2282 = vmatmul.mubr.f32.gmra.mxu0 %v2281
        %v2283 = vpop.f32.mrf.mxu0
        %v2284 = vadd.f32 %v2210, %v2283
        %v2285 = vpop.f32.mrf.mxu0
        %2286 = vdwg.mxu0
        %2287 = vmatprep.subr.mxu0 0.0
        %2288 = vmatpush1.msra.mxu0 0.0
        %2289 = vmatprep.subr.mxu0 0.0
        %2290 = vmatpush1.msra.mxu0 0.0
        %2291 = vmatprep.subr.mxu0 0.0
        %2292 = vmatpush1.msra.mxu0 0.0
        %2293 = vmatprep.subr.mxu0 0.0
        %2294 = vmatpush1.msra.mxu0 0.0
        %2295 = vmatprep.subr.mxu0 0.0
        %2296 = vmatpush1.msra.mxu0 0.0
        %2297 = vmatprep.subr.mxu0 0.0
        %2298 = vmatpush1.msra.mxu0 0.0
        %2299 = vmatprep.subr.mxu0 0.0
        %2300 = vmatpush1.msra.mxu0 0.0
        %2301 = vmatprep.subr.mxu0 0.0
        %2302 = vmatpush1.msra.mxu0 0.0
        %2303 = vmatprep.subr.mxu0 0.0
        %2304 = vmatpush1.msra.mxu0 0.0
        %2305 = vmatprep.subr.mxu0 0.0
        %2306 = vmatpush1.msra.mxu0 0.0
        %2307 = vmatprep.subr.mxu0 0.0
        %2308 = vmatpush1.msra.mxu0 0.0
        %2309 = vmatprep.subr.mxu0 0.0
        %2310 = vmatpush1.msra.mxu0 0.0
        %2311 = vmatprep.subr.mxu0 0.0
        %2312 = vmatpush1.msra.mxu0 0.0
        %2313 = vmatprep.subr.mxu0 0.0
        %2314 = vmatpush1.msra.mxu0 0.0
        %2315 = vmatprep.subr.mxu0 0.0
        %2316 = vmatpush1.msra.mxu0 0.0
        %2317 = vmatprep.subr.mxu0 0.0
        %v2318 = vand.u32 %v1982, 4294901760
        %v2319 = vsub.f32 %v1982, %v2318
        %v2320 = vand.u32 %v2319, 4294901760
        %2321 = vmatpush1.msra.mxu0 %v2320
        %2322 = vmatprep.subr.mxu0 0.0
        %2323 = vmatpush2.msra.mxu0 0.0
        %2324 = vmatprep.subr.mxu0 0.0
        %2325 = vmatpush2.msra.mxu0 0.0
        %2326 = vmatprep.subr.mxu0 0.0
        %2327 = vmatpush2.msra.mxu0 0.0
        %2328 = vmatprep.subr.mxu0 0.0
        %2329 = vmatpush2.msra.mxu0 0.0
        %2330 = vmatprep.subr.mxu0 0.0
        %2331 = vmatpush2.msra.mxu0 0.0
        %2332 = vmatprep.subr.mxu0 0.0
        %2333 = vmatpush2.msra.mxu0 0.0
        %2334 = vmatprep.subr.mxu0 0.0
        %2335 = vmatpush2.msra.mxu0 0.0
        %2336 = vmatprep.subr.mxu0 0.0
        %2337 = vmatpush2.msra.mxu0 0.0
        %2338 = vmatprep.subr.mxu0 0.0
        %2339 = vmatpush2.msra.mxu0 0.0
        %2340 = vmatprep.subr.mxu0 0.0
        %2341 = vmatpush2.msra.mxu0 0.0
        %2342 = vmatprep.subr.mxu0 0.0
        %2343 = vmatpush2.msra.mxu0 0.0
        %2344 = vmatprep.subr.mxu0 0.0
        %2345 = vmatpush2.msra.mxu0 0.0
        %2346 = vmatprep.subr.mxu0 0.0
        %2347 = vmatpush2.msra.mxu0 0.0
        %2348 = vmatprep.subr.mxu0 0.0
        %2349 = vmatpush2.msra.mxu0 0.0
        %2350 = vmatprep.subr.mxu0 0.0
        %2351 = vmatpush2.msra.mxu0 0.0
        %2352 = vmatprep.subr.mxu0 0.0
        %2353 = vmatpush2.msra.mxu0 0.0
        %2354 = vmatprep.mubr.f32.mxu0 0.0
        %v2355 = vand.u32 %v1985, 4294901760
        %2356 = vmatmul.mubr.f32.gmra.mxu0 %v2355
        %v2357 = vpop.f32.mrf.mxu0
        %v2358 = vadd.f32 %v2284, %v2357
        %v2359 = vpop.f32.mrf.mxu0
        %2360 = vdwg.mxu0
        %2361 = vmatprep.subr.mxu0 0.0
        %2362 = vmatpush1.msra.mxu0 0.0
        %2363 = vmatprep.subr.mxu0 0.0
        %2364 = vmatpush1.msra.mxu0 0.0
        %2365 = vmatprep.subr.mxu0 0.0
        %2366 = vmatpush1.msra.mxu0 0.0
        %2367 = vmatprep.subr.mxu0 0.0
        %2368 = vmatpush1.msra.mxu0 0.0
        %2369 = vmatprep.subr.mxu0 0.0
        %2370 = vmatpush1.msra.mxu0 0.0
        %2371 = vmatprep.subr.mxu0 0.0
        %2372 = vmatpush1.msra.mxu0 0.0
        %2373 = vmatprep.subr.mxu0 0.0
        %2374 = vmatpush1.msra.mxu0 0.0
        %2375 = vmatprep.subr.mxu0 0.0
        %2376 = vmatpush1.msra.mxu0 0.0
        %2377 = vmatprep.subr.mxu0 0.0
        %2378 = vmatpush1.msra.mxu0 0.0
        %2379 = vmatprep.subr.mxu0 0.0
        %2380 = vmatpush1.msra.mxu0 0.0
        %2381 = vmatprep.subr.mxu0 0.0
        %2382 = vmatpush1.msra.mxu0 0.0
        %2383 = vmatprep.subr.mxu0 0.0
        %2384 = vmatpush1.msra.mxu0 0.0
        %2385 = vmatprep.subr.mxu0 0.0
        %2386 = vmatpush1.msra.mxu0 0.0
        %2387 = vmatprep.subr.mxu0 0.0
        %2388 = vmatpush1.msra.mxu0 0.0
        %2389 = vmatprep.subr.mxu0 0.0
        %2390 = vmatpush1.msra.mxu0 0.0
        %2391 = vmatprep.subr.mxu0 0.0
        %v2392 = vand.u32 %v1982, 4294901760
        %2393 = vmatpush1.msra.mxu0 %v2392
        %2394 = vmatprep.subr.mxu0 0.0
        %2395 = vmatpush2.msra.mxu0 0.0
        %2396 = vmatprep.subr.mxu0 0.0
        %2397 = vmatpush2.msra.mxu0 0.0
        %2398 = vmatprep.subr.mxu0 0.0
        %2399 = vmatpush2.msra.mxu0 0.0
        %2400 = vmatprep.subr.mxu0 0.0
        %2401 = vmatpush2.msra.mxu0 0.0
        %2402 = vmatprep.subr.mxu0 0.0
        %2403 = vmatpush2.msra.mxu0 0.0
        %2404 = vmatprep.subr.mxu0 0.0
        %2405 = vmatpush2.msra.mxu0 0.0
        %2406 = vmatprep.subr.mxu0 0.0
        %2407 = vmatpush2.msra.mxu0 0.0
        %2408 = vmatprep.subr.mxu0 0.0
        %2409 = vmatpush2.msra.mxu0 0.0
        %2410 = vmatprep.subr.mxu0 0.0
        %2411 = vmatpush2.msra.mxu0 0.0
        %2412 = vmatprep.subr.mxu0 0.0
        %2413 = vmatpush2.msra.mxu0 0.0
        %2414 = vmatprep.subr.mxu0 0.0
        %2415 = vmatpush2.msra.mxu0 0.0
        %2416 = vmatprep.subr.mxu0 0.0
        %2417 = vmatpush2.msra.mxu0 0.0
        %2418 = vmatprep.subr.mxu0 0.0
        %2419 = vmatpush2.msra.mxu0 0.0
        %2420 = vmatprep.subr.mxu0 0.0
        %2421 = vmatpush2.msra.mxu0 0.0
        %2422 = vmatprep.subr.mxu0 0.0
        %2423 = vmatpush2.msra.mxu0 0.0
        %2424 = vmatprep.subr.mxu0 0.0
        %2425 = vmatpush2.msra.mxu0 0.0
        %2426 = vmatprep.mubr.f32.mxu0 0.0
        %v2427 = vand.u32 %v1985, 4294901760
        %2428 = vmatmul.mubr.f32.gmra.mxu0 %v2427
        %v2429 = vpop.f32.mrf.mxu0
        %v2430 = vadd.f32 %v2358, %v2429
        %v2431 = vpop.f32.mrf.mxu0
        %2432 = vdwg.mxu0
        %s2433 = scalar_lea.vmem [#allocation7], 8
        %v2434 = vld [vmem:[%s2433] sm:$0xff]
        %2435 = vrot.lane.b32.xlu0 %v1014, 120
        %v2436 = vpop.permute.xlu0 %2435
        %2437 = vrot.lane.b32.xlu0 %v1506, 120
        %v2438 = vpop.permute.xlu0 %2437
        %v2439 = vsel %vm1510, %v2436, 0
        %v2441 = vsel %vm1510, %v2438, 0
        %2443 = vmatprep.subr.mxu0 0.0
        %2444 = vmatpush1.xpose.msra.mxu0 0.0
        %2445 = vmatprep.subr.mxu0 0.0
        %2446 = vmatpush1.xpose.msra.mxu0 0.0
        %2447 = vmatprep.subr.mxu0 0.0
        %2448 = vmatpush1.xpose.msra.mxu0 0.0
        %2449 = vmatprep.subr.mxu0 0.0
        %2450 = vmatpush1.xpose.msra.mxu0 0.0
        %2451 = vmatprep.subr.mxu0 0.0
        %2452 = vmatpush1.xpose.msra.mxu0 0.0
        %2453 = vmatprep.subr.mxu0 0.0
        %2454 = vmatpush1.xpose.msra.mxu0 0.0
        %2455 = vmatprep.subr.mxu0 0.0
        %2456 = vmatpush1.xpose.msra.mxu0 0.0
        %2457 = vmatprep.subr.mxu0 0.0
        %2458 = vmatpush1.xpose.msra.mxu0 0.0
        %2459 = vmatprep.subr.mxu0 0.0
        %2460 = vmatpush1.xpose.msra.mxu0 0.0
        %2461 = vmatprep.subr.mxu0 0.0
        %2462 = vmatpush1.xpose.msra.mxu0 0.0
        %2463 = vmatprep.subr.mxu0 0.0
        %2464 = vmatpush1.xpose.msra.mxu0 0.0
        %2465 = vmatprep.subr.mxu0 0.0
        %2466 = vmatpush1.xpose.msra.mxu0 0.0
        %2467 = vmatprep.subr.mxu0 0.0
        %2468 = vmatpush1.xpose.msra.mxu0 0.0
        %2469 = vmatprep.subr.mxu0 0.0
        %2470 = vmatpush1.xpose.msra.mxu0 0.0
        %2471 = vmatprep.subr.mxu0 0.0
        %2472 = vmatpush1.xpose.msra.mxu0 0.0
        %2473 = vmatprep.subr.mxu0 0.0
        %v2474 = vand.u32 %v2441, 4294901760
        %2475 = vmatpush1.xpose.msra.mxu0 %v2474
        %2476 = vmatprep.subr.mxu0 0.0
        %2477 = vmatpush2.xpose.msra.mxu0 0.0
        %2478 = vmatprep.subr.mxu0 0.0
        %2479 = vmatpush2.xpose.msra.mxu0 0.0
        %2480 = vmatprep.subr.mxu0 0.0
        %2481 = vmatpush2.xpose.msra.mxu0 0.0
        %2482 = vmatprep.subr.mxu0 0.0
        %2483 = vmatpush2.xpose.msra.mxu0 0.0
        %2484 = vmatprep.subr.mxu0 0.0
        %2485 = vmatpush2.xpose.msra.mxu0 0.0
        %2486 = vmatprep.subr.mxu0 0.0
        %2487 = vmatpush2.xpose.msra.mxu0 0.0
        %2488 = vmatprep.subr.mxu0 0.0
        %2489 = vmatpush2.xpose.msra.mxu0 0.0
        %2490 = vmatprep.subr.mxu0 0.0
        %2491 = vmatpush2.xpose.msra.mxu0 0.0
        %2492 = vmatprep.subr.mxu0 0.0
        %2493 = vmatpush2.xpose.msra.mxu0 0.0
        %2494 = vmatprep.subr.mxu0 0.0
        %2495 = vmatpush2.xpose.msra.mxu0 0.0
        %2496 = vmatprep.subr.mxu0 0.0
        %2497 = vmatpush2.xpose.msra.mxu0 0.0
        %2498 = vmatprep.subr.mxu0 0.0
        %2499 = vmatpush2.xpose.msra.mxu0 0.0
        %2500 = vmatprep.subr.mxu0 0.0
        %2501 = vmatpush2.xpose.msra.mxu0 0.0
        %2502 = vmatprep.subr.mxu0 0.0
        %2503 = vmatpush2.xpose.msra.mxu0 0.0
        %2504 = vmatprep.subr.mxu0 0.0
        %2505 = vmatpush2.xpose.msra.mxu0 0.0
        %2506 = vmatprep.subr.mxu0 0.0
        %2507 = vmatpush2.xpose.msra.mxu0 0.0
        %2508 = vmatprep.mubr.f32.mxu0 0.0
        %v2509 = vand.u32 %v2439, 4294901760
        %v2510 = vsub.f32 %v2439, %v2509
        %v2511 = vand.u32 %v2510, 4294901760
        %v2512 = vsub.f32 %v2510, %v2511
        %v2513 = vand.u32 %v2512, 4294901760
        %2514 = vmatmul.mubr.f32.gmra.mxu0 %v2513
        %v2515 = vpop.f32.mrf.mxu0
        %v2516 = vadd.f32 %v2434, %v2515
        %v2517 = vpop.f32.mrf.mxu0
        %2518 = vdwg.mxu0
        %2519 = vmatprep.subr.mxu0 0.0
        %2520 = vmatpush1.xpose.msra.mxu0 0.0
        %2521 = vmatprep.subr.mxu0 0.0
        %2522 = vmatpush1.xpose.msra.mxu0 0.0
        %2523 = vmatprep.subr.mxu0 0.0
        %2524 = vmatpush1.xpose.msra.mxu0 0.0
        %2525 = vmatprep.subr.mxu0 0.0
        %2526 = vmatpush1.xpose.msra.mxu0 0.0
        %2527 = vmatprep.subr.mxu0 0.0
        %2528 = vmatpush1.xpose.msra.mxu0 0.0
        %2529 = vmatprep.subr.mxu0 0.0
        %2530 = vmatpush1.xpose.msra.mxu0 0.0
        %2531 = vmatprep.subr.mxu0 0.0
        %2532 = vmatpush1.xpose.msra.mxu0 0.0
        %2533 = vmatprep.subr.mxu0 0.0
        %2534 = vmatpush1.xpose.msra.mxu0 0.0
        %2535 = vmatprep.subr.mxu0 0.0
        %2536 = vmatpush1.xpose.msra.mxu0 0.0
        %2537 = vmatprep.subr.mxu0 0.0
        %2538 = vmatpush1.xpose.msra.mxu0 0.0
        %2539 = vmatprep.subr.mxu0 0.0
        %2540 = vmatpush1.xpose.msra.mxu0 0.0
        %2541 = vmatprep.subr.mxu0 0.0
        %2542 = vmatpush1.xpose.msra.mxu0 0.0
        %2543 = vmatprep.subr.mxu0 0.0
        %2544 = vmatpush1.xpose.msra.mxu0 0.0
        %2545 = vmatprep.subr.mxu0 0.0
        %2546 = vmatpush1.xpose.msra.mxu0 0.0
        %2547 = vmatprep.subr.mxu0 0.0
        %2548 = vmatpush1.xpose.msra.mxu0 0.0
        %2549 = vmatprep.subr.mxu0 0.0
        %v2550 = vand.u32 %v2441, 4294901760
        %v2551 = vsub.f32 %v2441, %v2550
        %v2552 = vand.u32 %v2551, 4294901760
        %v2553 = vsub.f32 %v2551, %v2552
        %v2554 = vand.u32 %v2553, 4294901760
        %2555 = vmatpush1.xpose.msra.mxu0 %v2554
        %2556 = vmatprep.subr.mxu0 0.0
        %2557 = vmatpush2.xpose.msra.mxu0 0.0
        %2558 = vmatprep.subr.mxu0 0.0
        %2559 = vmatpush2.xpose.msra.mxu0 0.0
        %2560 = vmatprep.subr.mxu0 0.0
        %2561 = vmatpush2.xpose.msra.mxu0 0.0
        %2562 = vmatprep.subr.mxu0 0.0
        %2563 = vmatpush2.xpose.msra.mxu0 0.0
        %2564 = vmatprep.subr.mxu0 0.0
        %2565 = vmatpush2.xpose.msra.mxu0 0.0
        %2566 = vmatprep.subr.mxu0 0.0
        %2567 = vmatpush2.xpose.msra.mxu0 0.0
        %2568 = vmatprep.subr.mxu0 0.0
        %2569 = vmatpush2.xpose.msra.mxu0 0.0
        %2570 = vmatprep.subr.mxu0 0.0
        %2571 = vmatpush2.xpose.msra.mxu0 0.0
        %2572 = vmatprep.subr.mxu0 0.0
        %2573 = vmatpush2.xpose.msra.mxu0 0.0
        %2574 = vmatprep.subr.mxu0 0.0
        %2575 = vmatpush2.xpose.msra.mxu0 0.0
        %2576 = vmatprep.subr.mxu0 0.0
        %2577 = vmatpush2.xpose.msra.mxu0 0.0
        %2578 = vmatprep.subr.mxu0 0.0
        %2579 = vmatpush2.xpose.msra.mxu0 0.0
        %2580 = vmatprep.subr.mxu0 0.0
        %2581 = vmatpush2.xpose.msra.mxu0 0.0
        %2582 = vmatprep.subr.mxu0 0.0
        %2583 = vmatpush2.xpose.msra.mxu0 0.0
        %2584 = vmatprep.subr.mxu0 0.0
        %2585 = vmatpush2.xpose.msra.mxu0 0.0
        %2586 = vmatprep.subr.mxu0 0.0
        %2587 = vmatpush2.xpose.msra.mxu0 0.0
        %2588 = vmatprep.mubr.f32.mxu0 0.0
        %v2589 = vand.u32 %v2439, 4294901760
        %2590 = vmatmul.mubr.f32.gmra.mxu0 %v2589
        %v2591 = vpop.f32.mrf.mxu0
        %v2592 = vadd.f32 %v2516, %v2591
        %v2593 = vpop.f32.mrf.mxu0
        %2594 = vdwg.mxu0
        %2595 = vmatprep.subr.mxu0 0.0
        %2596 = vmatpush1.xpose.msra.mxu0 0.0
        %2597 = vmatprep.subr.mxu0 0.0
        %2598 = vmatpush1.xpose.msra.mxu0 0.0
        %2599 = vmatprep.subr.mxu0 0.0
        %2600 = vmatpush1.xpose.msra.mxu0 0.0
        %2601 = vmatprep.subr.mxu0 0.0
        %2602 = vmatpush1.xpose.msra.mxu0 0.0
        %2603 = vmatprep.subr.mxu0 0.0
        %2604 = vmatpush1.xpose.msra.mxu0 0.0
        %2605 = vmatprep.subr.mxu0 0.0
        %2606 = vmatpush1.xpose.msra.mxu0 0.0
        %2607 = vmatprep.subr.mxu0 0.0
        %2608 = vmatpush1.xpose.msra.mxu0 0.0
        %2609 = vmatprep.subr.mxu0 0.0
        %2610 = vmatpush1.xpose.msra.mxu0 0.0
        %2611 = vmatprep.subr.mxu0 0.0
        %2612 = vmatpush1.xpose.msra.mxu0 0.0
        %2613 = vmatprep.subr.mxu0 0.0
        %2614 = vmatpush1.xpose.msra.mxu0 0.0
        %2615 = vmatprep.subr.mxu0 0.0
        %2616 = vmatpush1.xpose.msra.mxu0 0.0
        %2617 = vmatprep.subr.mxu0 0.0
        %2618 = vmatpush1.xpose.msra.mxu0 0.0
        %2619 = vmatprep.subr.mxu0 0.0
        %2620 = vmatpush1.xpose.msra.mxu0 0.0
        %2621 = vmatprep.subr.mxu0 0.0
        %2622 = vmatpush1.xpose.msra.mxu0 0.0
        %2623 = vmatprep.subr.mxu0 0.0
        %2624 = vmatpush1.xpose.msra.mxu0 0.0
        %2625 = vmatprep.subr.mxu0 0.0
        %v2626 = vand.u32 %v2441, 4294901760
        %v2627 = vsub.f32 %v2441, %v2626
        %2628 = vmatpush1.xpose.msra.mxu0 %v2627
        %2629 = vmatprep.subr.mxu0 0.0
        %2630 = vmatpush2.xpose.msra.mxu0 0.0
        %2631 = vmatprep.subr.mxu0 0.0
        %2632 = vmatpush2.xpose.msra.mxu0 0.0
        %2633 = vmatprep.subr.mxu0 0.0
        %2634 = vmatpush2.xpose.msra.mxu0 0.0
        %2635 = vmatprep.subr.mxu0 0.0
        %2636 = vmatpush2.xpose.msra.mxu0 0.0
        %2637 = vmatprep.subr.mxu0 0.0
        %2638 = vmatpush2.xpose.msra.mxu0 0.0
        %2639 = vmatprep.subr.mxu0 0.0
        %2640 = vmatpush2.xpose.msra.mxu0 0.0
        %2641 = vmatprep.subr.mxu0 0.0
        %2642 = vmatpush2.xpose.msra.mxu0 0.0
        %2643 = vmatprep.subr.mxu0 0.0
        %2644 = vmatpush2.xpose.msra.mxu0 0.0
        %2645 = vmatprep.subr.mxu0 0.0
        %2646 = vmatpush2.xpose.msra.mxu0 0.0
        %2647 = vmatprep.subr.mxu0 0.0
        %2648 = vmatpush2.xpose.msra.mxu0 0.0
        %2649 = vmatprep.subr.mxu0 0.0
        %2650 = vmatpush2.xpose.msra.mxu0 0.0
        %2651 = vmatprep.subr.mxu0 0.0
        %2652 = vmatpush2.xpose.msra.mxu0 0.0
        %2653 = vmatprep.subr.mxu0 0.0
        %2654 = vmatpush2.xpose.msra.mxu0 0.0
        %2655 = vmatprep.subr.mxu0 0.0
        %2656 = vmatpush2.xpose.msra.mxu0 0.0
        %2657 = vmatprep.subr.mxu0 0.0
        %2658 = vmatpush2.xpose.msra.mxu0 0.0
        %2659 = vmatprep.subr.mxu0 0.0
        %2660 = vmatpush2.xpose.msra.mxu0 0.0
        %2661 = vmatprep.mubr.f32.mxu0 0.0
        %v2662 = vand.u32 %v2439, 4294901760
        %v2663 = vsub.f32 %v2439, %v2662
        %2664 = vmatmul.mubr.f32.gmra.mxu0 %v2663
        %v2665 = vpop.f32.mrf.mxu0
        %v2666 = vadd.f32 %v2592, %v2665
        %v2667 = vpop.f32.mrf.mxu0
        %2668 = vdwg.mxu0
        %2669 = vmatprep.subr.mxu0 0.0
        %2670 = vmatpush1.xpose.msra.mxu0 0.0
        %2671 = vmatprep.subr.mxu0 0.0
        %2672 = vmatpush1.xpose.msra.mxu0 0.0
        %2673 = vmatprep.subr.mxu0 0.0
        %2674 = vmatpush1.xpose.msra.mxu0 0.0
        %2675 = vmatprep.subr.mxu0 0.0
        %2676 = vmatpush1.xpose.msra.mxu0 0.0
        %2677 = vmatprep.subr.mxu0 0.0
        %2678 = vmatpush1.xpose.msra.mxu0 0.0
        %2679 = vmatprep.subr.mxu0 0.0
        %2680 = vmatpush1.xpose.msra.mxu0 0.0
        %2681 = vmatprep.subr.mxu0 0.0
        %2682 = vmatpush1.xpose.msra.mxu0 0.0
        %2683 = vmatprep.subr.mxu0 0.0
        %2684 = vmatpush1.xpose.msra.mxu0 0.0
        %2685 = vmatprep.subr.mxu0 0.0
        %2686 = vmatpush1.xpose.msra.mxu0 0.0
        %2687 = vmatprep.subr.mxu0 0.0
        %2688 = vmatpush1.xpose.msra.mxu0 0.0
        %2689 = vmatprep.subr.mxu0 0.0
        %2690 = vmatpush1.xpose.msra.mxu0 0.0
        %2691 = vmatprep.subr.mxu0 0.0
        %2692 = vmatpush1.xpose.msra.mxu0 0.0
        %2693 = vmatprep.subr.mxu0 0.0
        %2694 = vmatpush1.xpose.msra.mxu0 0.0
        %2695 = vmatprep.subr.mxu0 0.0
        %2696 = vmatpush1.xpose.msra.mxu0 0.0
        %2697 = vmatprep.subr.mxu0 0.0
        %2698 = vmatpush1.xpose.msra.mxu0 0.0
        %2699 = vmatprep.subr.mxu0 0.0
        %v2700 = vand.u32 %v2441, 4294901760
        %2701 = vmatpush1.xpose.msra.mxu0 %v2700
        %2702 = vmatprep.subr.mxu0 0.0
        %2703 = vmatpush2.xpose.msra.mxu0 0.0
        %2704 = vmatprep.subr.mxu0 0.0
        %2705 = vmatpush2.xpose.msra.mxu0 0.0
        %2706 = vmatprep.subr.mxu0 0.0
        %2707 = vmatpush2.xpose.msra.mxu0 0.0
        %2708 = vmatprep.subr.mxu0 0.0
        %2709 = vmatpush2.xpose.msra.mxu0 0.0
        %2710 = vmatprep.subr.mxu0 0.0
        %2711 = vmatpush2.xpose.msra.mxu0 0.0
        %2712 = vmatprep.subr.mxu0 0.0
        %2713 = vmatpush2.xpose.msra.mxu0 0.0
        %2714 = vmatprep.subr.mxu0 0.0
        %2715 = vmatpush2.xpose.msra.mxu0 0.0
        %2716 = vmatprep.subr.mxu0 0.0
        %2717 = vmatpush2.xpose.msra.mxu0 0.0
        %2718 = vmatprep.subr.mxu0 0.0
        %2719 = vmatpush2.xpose.msra.mxu0 0.0
        %2720 = vmatprep.subr.mxu0 0.0
        %2721 = vmatpush2.xpose.msra.mxu0 0.0
        %2722 = vmatprep.subr.mxu0 0.0
        %2723 = vmatpush2.xpose.msra.mxu0 0.0
        %2724 = vmatprep.subr.mxu0 0.0
        %2725 = vmatpush2.xpose.msra.mxu0 0.0
        %2726 = vmatprep.subr.mxu0 0.0
        %2727 = vmatpush2.xpose.msra.mxu0 0.0
        %2728 = vmatprep.subr.mxu0 0.0
        %2729 = vmatpush2.xpose.msra.mxu0 0.0
        %2730 = vmatprep.subr.mxu0 0.0
        %2731 = vmatpush2.xpose.msra.mxu0 0.0
        %2732 = vmatprep.subr.mxu0 0.0
        %2733 = vmatpush2.xpose.msra.mxu0 0.0
        %2734 = vmatprep.mubr.f32.mxu0 0.0
        %v2735 = vand.u32 %v2439, 4294901760
        %v2736 = vsub.f32 %v2439, %v2735
        %v2737 = vand.u32 %v2736, 4294901760
        %2738 = vmatmul.mubr.f32.gmra.mxu0 %v2737
        %v2739 = vpop.f32.mrf.mxu0
        %v2740 = vadd.f32 %v2666, %v2739
        %v2741 = vpop.f32.mrf.mxu0
        %2742 = vdwg.mxu0
        %2743 = vmatprep.subr.mxu0 0.0
        %2744 = vmatpush1.xpose.msra.mxu0 0.0
        %2745 = vmatprep.subr.mxu0 0.0
        %2746 = vmatpush1.xpose.msra.mxu0 0.0
        %2747 = vmatprep.subr.mxu0 0.0
        %2748 = vmatpush1.xpose.msra.mxu0 0.0
        %2749 = vmatprep.subr.mxu0 0.0
        %2750 = vmatpush1.xpose.msra.mxu0 0.0
        %2751 = vmatprep.subr.mxu0 0.0
        %2752 = vmatpush1.xpose.msra.mxu0 0.0
        %2753 = vmatprep.subr.mxu0 0.0
        %2754 = vmatpush1.xpose.msra.mxu0 0.0
        %2755 = vmatprep.subr.mxu0 0.0
        %2756 = vmatpush1.xpose.msra.mxu0 0.0
        %2757 = vmatprep.subr.mxu0 0.0
        %2758 = vmatpush1.xpose.msra.mxu0 0.0
        %2759 = vmatprep.subr.mxu0 0.0
        %2760 = vmatpush1.xpose.msra.mxu0 0.0
        %2761 = vmatprep.subr.mxu0 0.0
        %2762 = vmatpush1.xpose.msra.mxu0 0.0
        %2763 = vmatprep.subr.mxu0 0.0
        %2764 = vmatpush1.xpose.msra.mxu0 0.0
        %2765 = vmatprep.subr.mxu0 0.0
        %2766 = vmatpush1.xpose.msra.mxu0 0.0
        %2767 = vmatprep.subr.mxu0 0.0
        %2768 = vmatpush1.xpose.msra.mxu0 0.0
        %2769 = vmatprep.subr.mxu0 0.0
        %2770 = vmatpush1.xpose.msra.mxu0 0.0
        %2771 = vmatprep.subr.mxu0 0.0
        %2772 = vmatpush1.xpose.msra.mxu0 0.0
        %2773 = vmatprep.subr.mxu0 0.0
        %v2774 = vand.u32 %v2441, 4294901760
        %v2775 = vsub.f32 %v2441, %v2774
        %v2776 = vand.u32 %v2775, 4294901760
        %2777 = vmatpush1.xpose.msra.mxu0 %v2776
        %2778 = vmatprep.subr.mxu0 0.0
        %2779 = vmatpush2.xpose.msra.mxu0 0.0
        %2780 = vmatprep.subr.mxu0 0.0
        %2781 = vmatpush2.xpose.msra.mxu0 0.0
        %2782 = vmatprep.subr.mxu0 0.0
        %2783 = vmatpush2.xpose.msra.mxu0 0.0
        %2784 = vmatprep.subr.mxu0 0.0
        %2785 = vmatpush2.xpose.msra.mxu0 0.0
        %2786 = vmatprep.subr.mxu0 0.0
        %2787 = vmatpush2.xpose.msra.mxu0 0.0
        %2788 = vmatprep.subr.mxu0 0.0
        %2789 = vmatpush2.xpose.msra.mxu0 0.0
        %2790 = vmatprep.subr.mxu0 0.0
        %2791 = vmatpush2.xpose.msra.mxu0 0.0
        %2792 = vmatprep.subr.mxu0 0.0
        %2793 = vmatpush2.xpose.msra.mxu0 0.0
        %2794 = vmatprep.subr.mxu0 0.0
        %2795 = vmatpush2.xpose.msra.mxu0 0.0
        %2796 = vmatprep.subr.mxu0 0.0
        %2797 = vmatpush2.xpose.msra.mxu0 0.0
        %2798 = vmatprep.subr.mxu0 0.0
        %2799 = vmatpush2.xpose.msra.mxu0 0.0
        %2800 = vmatprep.subr.mxu0 0.0
        %2801 = vmatpush2.xpose.msra.mxu0 0.0
        %2802 = vmatprep.subr.mxu0 0.0
        %2803 = vmatpush2.xpose.msra.mxu0 0.0
        %2804 = vmatprep.subr.mxu0 0.0
        %2805 = vmatpush2.xpose.msra.mxu0 0.0
        %2806 = vmatprep.subr.mxu0 0.0
        %2807 = vmatpush2.xpose.msra.mxu0 0.0
        %2808 = vmatprep.subr.mxu0 0.0
        %2809 = vmatpush2.xpose.msra.mxu0 0.0
        %2810 = vmatprep.mubr.f32.mxu0 0.0
        %v2811 = vand.u32 %v2439, 4294901760
        %2812 = vmatmul.mubr.f32.gmra.mxu0 %v2811
        %v2813 = vpop.f32.mrf.mxu0
        %v2814 = vadd.f32 %v2740, %v2813
        %v2815 = vpop.f32.mrf.mxu0
        %2816 = vdwg.mxu0
        %2817 = vmatprep.subr.mxu0 0.0
        %2818 = vmatpush1.xpose.msra.mxu0 0.0
        %2819 = vmatprep.subr.mxu0 0.0
        %2820 = vmatpush1.xpose.msra.mxu0 0.0
        %2821 = vmatprep.subr.mxu0 0.0
        %2822 = vmatpush1.xpose.msra.mxu0 0.0
        %2823 = vmatprep.subr.mxu0 0.0
        %2824 = vmatpush1.xpose.msra.mxu0 0.0
        %2825 = vmatprep.subr.mxu0 0.0
        %2826 = vmatpush1.xpose.msra.mxu0 0.0
        %2827 = vmatprep.subr.mxu0 0.0
        %2828 = vmatpush1.xpose.msra.mxu0 0.0
        %2829 = vmatprep.subr.mxu0 0.0
        %2830 = vmatpush1.xpose.msra.mxu0 0.0
        %2831 = vmatprep.subr.mxu0 0.0
        %2832 = vmatpush1.xpose.msra.mxu0 0.0
        %2833 = vmatprep.subr.mxu0 0.0
        %2834 = vmatpush1.xpose.msra.mxu0 0.0
        %2835 = vmatprep.subr.mxu0 0.0
        %2836 = vmatpush1.xpose.msra.mxu0 0.0
        %2837 = vmatprep.subr.mxu0 0.0
        %2838 = vmatpush1.xpose.msra.mxu0 0.0
        %2839 = vmatprep.subr.mxu0 0.0
        %2840 = vmatpush1.xpose.msra.mxu0 0.0
        %2841 = vmatprep.subr.mxu0 0.0
        %2842 = vmatpush1.xpose.msra.mxu0 0.0
        %2843 = vmatprep.subr.mxu0 0.0
        %2844 = vmatpush1.xpose.msra.mxu0 0.0
        %2845 = vmatprep.subr.mxu0 0.0
        %2846 = vmatpush1.xpose.msra.mxu0 0.0
        %2847 = vmatprep.subr.mxu0 0.0
        %v2848 = vand.u32 %v2441, 4294901760
        %2849 = vmatpush1.xpose.msra.mxu0 %v2848
        %2850 = vmatprep.subr.mxu0 0.0
        %2851 = vmatpush2.xpose.msra.mxu0 0.0
        %2852 = vmatprep.subr.mxu0 0.0
        %2853 = vmatpush2.xpose.msra.mxu0 0.0
        %2854 = vmatprep.subr.mxu0 0.0
        %2855 = vmatpush2.xpose.msra.mxu0 0.0
        %2856 = vmatprep.subr.mxu0 0.0
        %2857 = vmatpush2.xpose.msra.mxu0 0.0
        %2858 = vmatprep.subr.mxu0 0.0
        %2859 = vmatpush2.xpose.msra.mxu0 0.0
        %2860 = vmatprep.subr.mxu0 0.0
        %2861 = vmatpush2.xpose.msra.mxu0 0.0
        %2862 = vmatprep.subr.mxu0 0.0
        %2863 = vmatpush2.xpose.msra.mxu0 0.0
        %2864 = vmatprep.subr.mxu0 0.0
        %2865 = vmatpush2.xpose.msra.mxu0 0.0
        %2866 = vmatprep.subr.mxu0 0.0
        %2867 = vmatpush2.xpose.msra.mxu0 0.0
        %2868 = vmatprep.subr.mxu0 0.0
        %2869 = vmatpush2.xpose.msra.mxu0 0.0
        %2870 = vmatprep.subr.mxu0 0.0
        %2871 = vmatpush2.xpose.msra.mxu0 0.0
        %2872 = vmatprep.subr.mxu0 0.0
        %2873 = vmatpush2.xpose.msra.mxu0 0.0
        %2874 = vmatprep.subr.mxu0 0.0
        %2875 = vmatpush2.xpose.msra.mxu0 0.0
        %2876 = vmatprep.subr.mxu0 0.0
        %2877 = vmatpush2.xpose.msra.mxu0 0.0
        %2878 = vmatprep.subr.mxu0 0.0
        %2879 = vmatpush2.xpose.msra.mxu0 0.0
        %2880 = vmatprep.subr.mxu0 0.0
        %2881 = vmatpush2.xpose.msra.mxu0 0.0
        %2882 = vmatprep.mubr.f32.mxu0 0.0
        %v2883 = vand.u32 %v2439, 4294901760
        %2884 = vmatmul.mubr.f32.gmra.mxu0 %v2883
        %v2885 = vpop.f32.mrf.mxu0
        %v2886 = vadd.f32 %v2814, %v2885
        %v2887 = vpop.f32.mrf.mxu0
        %2888 = vdwg.mxu0
        %v2889 = vadd.f32 %v2886, %v1967
        %v2890 = vsel %vm1510, %v2889, -inf
        %2891 = vmax.xlane.f32.xlu0 %v2890
        %v2892 = vpop.xlane.xlu0 %2891
        %v2893 = vsub.f32 %v2889, %v2892
        %v2894 = vmul.f32 %v2893, 1.442695
        %v2895 = vpow.pop %v2894
        %v2896 = vsel %vm1510, %v2895, 0.0
        %2897 = vadd.xlane.f32.xlu0 %v2896
        %v2898 = vpop.xlane.xlu0 %2897
        %v2899 = vrcp.pop %v2898
        %v2900 = vmul.f32 %v2895, %v2899
        %2901 = vrot.lane.b32.xlu0 %v1506, 88
        %v2902 = vpop.permute.xlu0 %2901
        %v2905 = vsel %vm1510, %v2900, 0
        %2907 = vmatprep.subr.mxu0 0.0
        %2908 = vmatpush1.msra.mxu0 0.0
        %2909 = vmatprep.subr.mxu0 0.0
        %2910 = vmatpush1.msra.mxu0 0.0
        %2911 = vmatprep.subr.mxu0 0.0
        %2912 = vmatpush1.msra.mxu0 0.0
        %2913 = vmatprep.subr.mxu0 0.0
        %2914 = vmatpush1.msra.mxu0 0.0
        %2915 = vmatprep.subr.mxu0 0.0
        %2916 = vmatpush1.msra.mxu0 0.0
        %2917 = vmatprep.subr.mxu0 0.0
        %2918 = vmatpush1.msra.mxu0 0.0
        %2919 = vmatprep.subr.mxu0 0.0
        %2920 = vmatpush1.msra.mxu0 0.0
        %2921 = vmatprep.subr.mxu0 0.0
        %2922 = vmatpush1.msra.mxu0 0.0
        %2923 = vmatprep.subr.mxu0 0.0
        %2924 = vmatpush1.msra.mxu0 0.0
        %2925 = vmatprep.subr.mxu0 0.0
        %2926 = vmatpush1.msra.mxu0 0.0
        %2927 = vmatprep.subr.mxu0 0.0
        %2928 = vmatpush1.msra.mxu0 0.0
        %2929 = vmatprep.subr.mxu0 0.0
        %2930 = vmatpush1.msra.mxu0 0.0
        %2931 = vmatprep.subr.mxu0 0.0
        %2932 = vmatpush1.msra.mxu0 0.0
        %2933 = vmatprep.subr.mxu0 0.0
        %2934 = vmatpush1.msra.mxu0 0.0
        %2935 = vmatprep.subr.mxu0 0.0
        %2936 = vmatpush1.msra.mxu0 0.0
        %2937 = vmatprep.subr.mxu0 0.0
        %v2938 = vand.u32 %v2902, 4294901760
        %2939 = vmatpush1.msra.mxu0 %v2938
        %2940 = vmatprep.subr.mxu0 0.0
        %2941 = vmatpush2.msra.mxu0 0.0
        %2942 = vmatprep.subr.mxu0 0.0
        %2943 = vmatpush2.msra.mxu0 0.0
        %2944 = vmatprep.subr.mxu0 0.0
        %2945 = vmatpush2.msra.mxu0 0.0
        %2946 = vmatprep.subr.mxu0 0.0
        %2947 = vmatpush2.msra.mxu0 0.0
        %2948 = vmatprep.subr.mxu0 0.0
        %2949 = vmatpush2.msra.mxu0 0.0
        %2950 = vmatprep.subr.mxu0 0.0
        %2951 = vmatpush2.msra.mxu0 0.0
        %2952 = vmatprep.subr.mxu0 0.0
        %2953 = vmatpush2.msra.mxu0 0.0
        %2954 = vmatprep.subr.mxu0 0.0
        %2955 = vmatpush2.msra.mxu0 0.0
        %2956 = vmatprep.subr.mxu0 0.0
        %2957 = vmatpush2.msra.mxu0 0.0
        %2958 = vmatprep.subr.mxu0 0.0
        %2959 = vmatpush2.msra.mxu0 0.0
        %2960 = vmatprep.subr.mxu0 0.0
        %2961 = vmatpush2.msra.mxu0 0.0
        %2962 = vmatprep.subr.mxu0 0.0
        %2963 = vmatpush2.msra.mxu0 0.0
        %2964 = vmatprep.subr.mxu0 0.0
        %2965 = vmatpush2.msra.mxu0 0.0
        %2966 = vmatprep.subr.mxu0 0.0
        %2967 = vmatpush2.msra.mxu0 0.0
        %2968 = vmatprep.subr.mxu0 0.0
        %2969 = vmatpush2.msra.mxu0 0.0
        %2970 = vmatprep.subr.mxu0 0.0
        %2971 = vmatpush2.msra.mxu0 0.0
        %2972 = vmatprep.mubr.f32.mxu0 0.0
        %v2973 = vand.u32 %v2905, 4294901760
        %v2974 = vsub.f32 %v2905, %v2973
        %v2975 = vand.u32 %v2974, 4294901760
        %v2976 = vsub.f32 %v2974, %v2975
        %v2977 = vand.u32 %v2976, 4294901760
        %2978 = vmatmul.mubr.f32.gmra.mxu0 %v2977
        %v2979 = vpop.f32.mrf.mxu0
        %v2980 = vadd.f32 0.0, %v2979
        %v2981 = vpop.f32.mrf.mxu0
        %2982 = vdwg.mxu0
        %2983 = vmatprep.subr.mxu0 0.0
        %2984 = vmatpush1.msra.mxu0 0.0
        %2985 = vmatprep.subr.mxu0 0.0
        %2986 = vmatpush1.msra.mxu0 0.0
        %2987 = vmatprep.subr.mxu0 0.0
        %2988 = vmatpush1.msra.mxu0 0.0
        %2989 = vmatprep.subr.mxu0 0.0
        %2990 = vmatpush1.msra.mxu0 0.0
        %2991 = vmatprep.subr.mxu0 0.0
        %2992 = vmatpush1.msra.mxu0 0.0
        %2993 = vmatprep.subr.mxu0 0.0
        %2994 = vmatpush1.msra.mxu0 0.0
        %2995 = vmatprep.subr.mxu0 0.0
        %2996 = vmatpush1.msra.mxu0 0.0
        %2997 = vmatprep.subr.mxu0 0.0
        %2998 = vmatpush1.msra.mxu0 0.0
        %2999 = vmatprep.subr.mxu0 0.0
        %3000 = vmatpush1.msra.mxu0 0.0
        %3001 = vmatprep.subr.mxu0 0.0
        %3002 = vmatpush1.msra.mxu0 0.0
        %3003 = vmatprep.subr.mxu0 0.0
        %3004 = vmatpush1.msra.mxu0 0.0
        %3005 = vmatprep.subr.mxu0 0.0
        %3006 = vmatpush1.msra.mxu0 0.0
        %3007 = vmatprep.subr.mxu0 0.0
        %3008 = vmatpush1.msra.mxu0 0.0
        %3009 = vmatprep.subr.mxu0 0.0
        %3010 = vmatpush1.msra.mxu0 0.0
        %3011 = vmatprep.subr.mxu0 0.0
        %3012 = vmatpush1.msra.mxu0 0.0
        %3013 = vmatprep.subr.mxu0 0.0
        %v3014 = vand.u32 %v2902, 4294901760
        %v3015 = vsub.f32 %v2902, %v3014
        %v3016 = vand.u32 %v3015, 4294901760
        %v3017 = vsub.f32 %v3015, %v3016
        %v3018 = vand.u32 %v3017, 4294901760
        %3019 = vmatpush1.msra.mxu0 %v3018
        %3020 = vmatprep.subr.mxu0 0.0
        %3021 = vmatpush2.msra.mxu0 0.0
        %3022 = vmatprep.subr.mxu0 0.0
        %3023 = vmatpush2.msra.mxu0 0.0
        %3024 = vmatprep.subr.mxu0 0.0
        %3025 = vmatpush2.msra.mxu0 0.0
        %3026 = vmatprep.subr.mxu0 0.0
        %3027 = vmatpush2.msra.mxu0 0.0
        %3028 = vmatprep.subr.mxu0 0.0
        %3029 = vmatpush2.msra.mxu0 0.0
        %3030 = vmatprep.subr.mxu0 0.0
        %3031 = vmatpush2.msra.mxu0 0.0
        %3032 = vmatprep.subr.mxu0 0.0
        %3033 = vmatpush2.msra.mxu0 0.0
        %3034 = vmatprep.subr.mxu0 0.0
        %3035 = vmatpush2.msra.mxu0 0.0
        %3036 = vmatprep.subr.mxu0 0.0
        %3037 = vmatpush2.msra.mxu0 0.0
        %3038 = vmatprep.subr.mxu0 0.0
        %3039 = vmatpush2.msra.mxu0 0.0
        %3040 = vmatprep.subr.mxu0 0.0
        %3041 = vmatpush2.msra.mxu0 0.0
        %3042 = vmatprep.subr.mxu0 0.0
        %3043 = vmatpush2.msra.mxu0 0.0
        %3044 = vmatprep.subr.mxu0 0.0
        %3045 = vmatpush2.msra.mxu0 0.0
        %3046 = vmatprep.subr.mxu0 0.0
        %3047 = vmatpush2.msra.mxu0 0.0
        %3048 = vmatprep.subr.mxu0 0.0
        %3049 = vmatpush2.msra.mxu0 0.0
        %3050 = vmatprep.subr.mxu0 0.0
        %3051 = vmatpush2.msra.mxu0 0.0
        %3052 = vmatprep.mubr.f32.mxu0 0.0
        %v3053 = vand.u32 %v2905, 4294901760
        %3054 = vmatmul.mubr.f32.gmra.mxu0 %v3053
        %v3055 = vpop.f32.mrf.mxu0
        %v3056 = vadd.f32 %v2980, %v3055
        %v3057 = vpop.f32.mrf.mxu0
        %3058 = vdwg.mxu0
        %3059 = vmatprep.subr.mxu0 0.0
        %3060 = vmatpush1.msra.mxu0 0.0
        %3061 = vmatprep.subr.mxu0 0.0
        %3062 = vmatpush1.msra.mxu0 0.0
        %3063 = vmatprep.subr.mxu0 0.0
        %3064 = vmatpush1.msra.mxu0 0.0
        %3065 = vmatprep.subr.mxu0 0.0
        %3066 = vmatpush1.msra.mxu0 0.0
        %3067 = vmatprep.subr.mxu0 0.0
        %3068 = vmatpush1.msra.mxu0 0.0
        %3069 = vmatprep.subr.mxu0 0.0
        %3070 = vmatpush1.msra.mxu0 0.0
        %3071 = vmatprep.subr.mxu0 0.0
        %3072 = vmatpush1.msra.mxu0 0.0
        %3073 = vmatprep.subr.mxu0 0.0
        %3074 = vmatpush1.msra.mxu0 0.0
        %3075 = vmatprep.subr.mxu0 0.0
        %3076 = vmatpush1.msra.mxu0 0.0
        %3077 = vmatprep.subr.mxu0 0.0
        %3078 = vmatpush1.msra.mxu0 0.0
        %3079 = vmatprep.subr.mxu0 0.0
        %3080 = vmatpush1.msra.mxu0 0.0
        %3081 = vmatprep.subr.mxu0 0.0
        %3082 = vmatpush1.msra.mxu0 0.0
        %3083 = vmatprep.subr.mxu0 0.0
        %3084 = vmatpush1.msra.mxu0 0.0
        %3085 = vmatprep.subr.mxu0 0.0
        %3086 = vmatpush1.msra.mxu0 0.0
        %3087 = vmatprep.subr.mxu0 0.0
        %3088 = vmatpush1.msra.mxu0 0.0
        %3089 = vmatprep.subr.mxu0 0.0
        %v3090 = vand.u32 %v2902, 4294901760
        %v3091 = vsub.f32 %v2902, %v3090
        %3092 = vmatpush1.msra.mxu0 %v3091
        %3093 = vmatprep.subr.mxu0 0.0
        %3094 = vmatpush2.msra.mxu0 0.0
        %3095 = vmatprep.subr.mxu0 0.0
        %3096 = vmatpush2.msra.mxu0 0.0
        %3097 = vmatprep.subr.mxu0 0.0
        %3098 = vmatpush2.msra.mxu0 0.0
        %3099 = vmatprep.subr.mxu0 0.0
        %3100 = vmatpush2.msra.mxu0 0.0
        %3101 = vmatprep.subr.mxu0 0.0
        %3102 = vmatpush2.msra.mxu0 0.0
        %3103 = vmatprep.subr.mxu0 0.0
        %3104 = vmatpush2.msra.mxu0 0.0
        %3105 = vmatprep.subr.mxu0 0.0
        %3106 = vmatpush2.msra.mxu0 0.0
        %3107 = vmatprep.subr.mxu0 0.0
        %3108 = vmatpush2.msra.mxu0 0.0
        %3109 = vmatprep.subr.mxu0 0.0
        %3110 = vmatpush2.msra.mxu0 0.0
        %3111 = vmatprep.subr.mxu0 0.0
        %3112 = vmatpush2.msra.mxu0 0.0
        %3113 = vmatprep.subr.mxu0 0.0
        %3114 = vmatpush2.msra.mxu0 0.0
        %3115 = vmatprep.subr.mxu0 0.0
        %3116 = vmatpush2.msra.mxu0 0.0
        %3117 = vmatprep.subr.mxu0 0.0
        %3118 = vmatpush2.msra.mxu0 0.0
        %3119 = vmatprep.subr.mxu0 0.0
        %3120 = vmatpush2.msra.mxu0 0.0
        %3121 = vmatprep.subr.mxu0 0.0
        %3122 = vmatpush2.msra.mxu0 0.0
        %3123 = vmatprep.subr.mxu0 0.0
        %3124 = vmatpush2.msra.mxu0 0.0
        %3125 = vmatprep.mubr.f32.mxu0 0.0
        %v3126 = vand.u32 %v2905, 4294901760
        %v3127 = vsub.f32 %v2905, %v3126
        %3128 = vmatmul.mubr.f32.gmra.mxu0 %v3127
        %v3129 = vpop.f32.mrf.mxu0
        %v3130 = vadd.f32 %v3056, %v3129
        %v3131 = vpop.f32.mrf.mxu0
        %3132 = vdwg.mxu0
        %3133 = vmatprep.subr.mxu0 0.0
        %3134 = vmatpush1.msra.mxu0 0.0
        %3135 = vmatprep.subr.mxu0 0.0
        %3136 = vmatpush1.msra.mxu0 0.0
        %3137 = vmatprep.subr.mxu0 0.0
        %3138 = vmatpush1.msra.mxu0 0.0
        %3139 = vmatprep.subr.mxu0 0.0
        %3140 = vmatpush1.msra.mxu0 0.0
        %3141 = vmatprep.subr.mxu0 0.0
        %3142 = vmatpush1.msra.mxu0 0.0
        %3143 = vmatprep.subr.mxu0 0.0
        %3144 = vmatpush1.msra.mxu0 0.0
        %3145 = vmatprep.subr.mxu0 0.0
        %3146 = vmatpush1.msra.mxu0 0.0
        %3147 = vmatprep.subr.mxu0 0.0
        %3148 = vmatpush1.msra.mxu0 0.0
        %3149 = vmatprep.subr.mxu0 0.0
        %3150 = vmatpush1.msra.mxu0 0.0
        %3151 = vmatprep.subr.mxu0 0.0
        %3152 = vmatpush1.msra.mxu0 0.0
        %3153 = vmatprep.subr.mxu0 0.0
        %3154 = vmatpush1.msra.mxu0 0.0
        %3155 = vmatprep.subr.mxu0 0.0
        %3156 = vmatpush1.msra.mxu0 0.0
        %3157 = vmatprep.subr.mxu0 0.0
        %3158 = vmatpush1.msra.mxu0 0.0
        %3159 = vmatprep.subr.mxu0 0.0
        %3160 = vmatpush1.msra.mxu0 0.0
        %3161 = vmatprep.subr.mxu0 0.0
        %3162 = vmatpush1.msra.mxu0 0.0
        %3163 = vmatprep.subr.mxu0 0.0
        %v3164 = vand.u32 %v2902, 4294901760
        %3165 = vmatpush1.msra.mxu0 %v3164
        %3166 = vmatprep.subr.mxu0 0.0
        %3167 = vmatpush2.msra.mxu0 0.0
        %3168 = vmatprep.subr.mxu0 0.0
        %3169 = vmatpush2.msra.mxu0 0.0
        %3170 = vmatprep.subr.mxu0 0.0
        %3171 = vmatpush2.msra.mxu0 0.0
        %3172 = vmatprep.subr.mxu0 0.0
        %3173 = vmatpush2.msra.mxu0 0.0
        %3174 = vmatprep.subr.mxu0 0.0
        %3175 = vmatpush2.msra.mxu0 0.0
        %3176 = vmatprep.subr.mxu0 0.0
        %3177 = vmatpush2.msra.mxu0 0.0
        %3178 = vmatprep.subr.mxu0 0.0
        %3179 = vmatpush2.msra.mxu0 0.0
        %3180 = vmatprep.subr.mxu0 0.0
        %3181 = vmatpush2.msra.mxu0 0.0
        %3182 = vmatprep.subr.mxu0 0.0
        %3183 = vmatpush2.msra.mxu0 0.0
        %3184 = vmatprep.subr.mxu0 0.0
        %3185 = vmatpush2.msra.mxu0 0.0
        %3186 = vmatprep.subr.mxu0 0.0
        %3187 = vmatpush2.msra.mxu0 0.0
        %3188 = vmatprep.subr.mxu0 0.0
        %3189 = vmatpush2.msra.mxu0 0.0
        %3190 = vmatprep.subr.mxu0 0.0
        %3191 = vmatpush2.msra.mxu0 0.0
        %3192 = vmatprep.subr.mxu0 0.0
        %3193 = vmatpush2.msra.mxu0 0.0
        %3194 = vmatprep.subr.mxu0 0.0
        %3195 = vmatpush2.msra.mxu0 0.0
        %3196 = vmatprep.subr.mxu0 0.0
        %3197 = vmatpush2.msra.mxu0 0.0
        %3198 = vmatprep.mubr.f32.mxu0 0.0
        %v3199 = vand.u32 %v2905, 4294901760
        %v3200 = vsub.f32 %v2905, %v3199
        %v3201 = vand.u32 %v3200, 4294901760
        %3202 = vmatmul.mubr.f32.gmra.mxu0 %v3201
        %v3203 = vpop.f32.mrf.mxu0
        %v3204 = vadd.f32 %v3130, %v3203
        %v3205 = vpop.f32.mrf.mxu0
        %3206 = vdwg.mxu0
        %3207 = vmatprep.subr.mxu0 0.0
        %3208 = vmatpush1.msra.mxu0 0.0
        %3209 = vmatprep.subr.mxu0 0.0
        %3210 = vmatpush1.msra.mxu0 0.0
        %3211 = vmatprep.subr.mxu0 0.0
        %3212 = vmatpush1.msra.mxu0 0.0
        %3213 = vmatprep.subr.mxu0 0.0
        %3214 = vmatpush1.msra.mxu0 0.0
        %3215 = vmatprep.subr.mxu0 0.0
        %3216 = vmatpush1.msra.mxu0 0.0
        %3217 = vmatprep.subr.mxu0 0.0
        %3218 = vmatpush1.msra.mxu0 0.0
        %3219 = vmatprep.subr.mxu0 0.0
        %3220 = vmatpush1.msra.mxu0 0.0
        %3221 = vmatprep.subr.mxu0 0.0
        %3222 = vmatpush1.msra.mxu0 0.0
        %3223 = vmatprep.subr.mxu0 0.0
        %3224 = vmatpush1.msra.mxu0 0.0
        %3225 = vmatprep.subr.mxu0 0.0
        %3226 = vmatpush1.msra.mxu0 0.0
        %3227 = vmatprep.subr.mxu0 0.0
        %3228 = vmatpush1.msra.mxu0 0.0
        %3229 = vmatprep.subr.mxu0 0.0
        %3230 = vmatpush1.msra.mxu0 0.0
        %3231 = vmatprep.subr.mxu0 0.0
        %3232 = vmatpush1.msra.mxu0 0.0
        %3233 = vmatprep.subr.mxu0 0.0
        %3234 = vmatpush1.msra.mxu0 0.0
        %3235 = vmatprep.subr.mxu0 0.0
        %3236 = vmatpush1.msra.mxu0 0.0
        %3237 = vmatprep.subr.mxu0 0.0
        %v3238 = vand.u32 %v2902, 4294901760
        %v3239 = vsub.f32 %v2902, %v3238
        %v3240 = vand.u32 %v3239, 4294901760
        %3241 = vmatpush1.msra.mxu0 %v3240
        %3242 = vmatprep.subr.mxu0 0.0
        %3243 = vmatpush2.msra.mxu0 0.0
        %3244 = vmatprep.subr.mxu0 0.0
        %3245 = vmatpush2.msra.mxu0 0.0
        %3246 = vmatprep.subr.mxu0 0.0
        %3247 = vmatpush2.msra.mxu0 0.0
        %3248 = vmatprep.subr.mxu0 0.0
        %3249 = vmatpush2.msra.mxu0 0.0
        %3250 = vmatprep.subr.mxu0 0.0
        %3251 = vmatpush2.msra.mxu0 0.0
        %3252 = vmatprep.subr.mxu0 0.0
        %3253 = vmatpush2.msra.mxu0 0.0
        %3254 = vmatprep.subr.mxu0 0.0
        %3255 = vmatpush2.msra.mxu0 0.0
        %3256 = vmatprep.subr.mxu0 0.0
        %3257 = vmatpush2.msra.mxu0 0.0
        %3258 = vmatprep.subr.mxu0 0.0
        %3259 = vmatpush2.msra.mxu0 0.0
        %3260 = vmatprep.subr.mxu0 0.0
        %3261 = vmatpush2.msra.mxu0 0.0
        %3262 = vmatprep.subr.mxu0 0.0
        %3263 = vmatpush2.msra.mxu0 0.0
        %3264 = vmatprep.subr.mxu0 0.0
        %3265 = vmatpush2.msra.mxu0 0.0
        %3266 = vmatprep.subr.mxu0 0.0
        %3267 = vmatpush2.msra.mxu0 0.0
        %3268 = vmatprep.subr.mxu0 0.0
        %3269 = vmatpush2.msra.mxu0 0.0
        %3270 = vmatprep.subr.mxu0 0.0
        %3271 = vmatpush2.msra.mxu0 0.0
        %3272 = vmatprep.subr.mxu0 0.0
        %3273 = vmatpush2.msra.mxu0 0.0
        %3274 = vmatprep.mubr.f32.mxu0 0.0
        %v3275 = vand.u32 %v2905, 4294901760
        %3276 = vmatmul.mubr.f32.gmra.mxu0 %v3275
        %v3277 = vpop.f32.mrf.mxu0
        %v3278 = vadd.f32 %v3204, %v3277
        %v3279 = vpop.f32.mrf.mxu0
        %3280 = vdwg.mxu0
        %3281 = vmatprep.subr.mxu0 0.0
        %3282 = vmatpush1.msra.mxu0 0.0
        %3283 = vmatprep.subr.mxu0 0.0
        %3284 = vmatpush1.msra.mxu0 0.0
        %3285 = vmatprep.subr.mxu0 0.0
        %3286 = vmatpush1.msra.mxu0 0.0
        %3287 = vmatprep.subr.mxu0 0.0
        %3288 = vmatpush1.msra.mxu0 0.0
        %3289 = vmatprep.subr.mxu0 0.0
        %3290 = vmatpush1.msra.mxu0 0.0
        %3291 = vmatprep.subr.mxu0 0.0
        %3292 = vmatpush1.msra.mxu0 0.0
        %3293 = vmatprep.subr.mxu0 0.0
        %3294 = vmatpush1.msra.mxu0 0.0
        %3295 = vmatprep.subr.mxu0 0.0
        %3296 = vmatpush1.msra.mxu0 0.0
        %3297 = vmatprep.subr.mxu0 0.0
        %3298 = vmatpush1.msra.mxu0 0.0
        %3299 = vmatprep.subr.mxu0 0.0
        %3300 = vmatpush1.msra.mxu0 0.0
        %3301 = vmatprep.subr.mxu0 0.0
        %3302 = vmatpush1.msra.mxu0 0.0
        %3303 = vmatprep.subr.mxu0 0.0
        %3304 = vmatpush1.msra.mxu0 0.0
        %3305 = vmatprep.subr.mxu0 0.0
        %3306 = vmatpush1.msra.mxu0 0.0
        %3307 = vmatprep.subr.mxu0 0.0
        %3308 = vmatpush1.msra.mxu0 0.0
        %3309 = vmatprep.subr.mxu0 0.0
        %3310 = vmatpush1.msra.mxu0 0.0
        %3311 = vmatprep.subr.mxu0 0.0
        %v3312 = vand.u32 %v2902, 4294901760
        %3313 = vmatpush1.msra.mxu0 %v3312
        %3314 = vmatprep.subr.mxu0 0.0
        %3315 = vmatpush2.msra.mxu0 0.0
        %3316 = vmatprep.subr.mxu0 0.0
        %3317 = vmatpush2.msra.mxu0 0.0
        %3318 = vmatprep.subr.mxu0 0.0
        %3319 = vmatpush2.msra.mxu0 0.0
        %3320 = vmatprep.subr.mxu0 0.0
        %3321 = vmatpush2.msra.mxu0 0.0
        %3322 = vmatprep.subr.mxu0 0.0
        %3323 = vmatpush2.msra.mxu0 0.0
        %3324 = vmatprep.subr.mxu0 0.0
        %3325 = vmatpush2.msra.mxu0 0.0
        %3326 = vmatprep.subr.mxu0 0.0
        %3327 = vmatpush2.msra.mxu0 0.0
        %3328 = vmatprep.subr.mxu0 0.0
        %3329 = vmatpush2.msra.mxu0 0.0
        %3330 = vmatprep.subr.mxu0 0.0
        %3331 = vmatpush2.msra.mxu0 0.0
        %3332 = vmatprep.subr.mxu0 0.0
        %3333 = vmatpush2.msra.mxu0 0.0
        %3334 = vmatprep.subr.mxu0 0.0
        %3335 = vmatpush2.msra.mxu0 0.0
        %3336 = vmatprep.subr.mxu0 0.0
        %3337 = vmatpush2.msra.mxu0 0.0
        %3338 = vmatprep.subr.mxu0 0.0
        %3339 = vmatpush2.msra.mxu0 0.0
        %3340 = vmatprep.subr.mxu0 0.0
        %3341 = vmatpush2.msra.mxu0 0.0
        %3342 = vmatprep.subr.mxu0 0.0
        %3343 = vmatpush2.msra.mxu0 0.0
        %3344 = vmatprep.subr.mxu0 0.0
        %3345 = vmatpush2.msra.mxu0 0.0
        %3346 = vmatprep.mubr.f32.mxu0 0.0
        %v3347 = vand.u32 %v2905, 4294901760
        %3348 = vmatmul.mubr.f32.gmra.mxu0 %v3347
        %v3349 = vpop.f32.mrf.mxu0
        %v3350 = vadd.f32 %v3278, %v3349
        %v3351 = vpop.f32.mrf.mxu0
        %3352 = vdwg.mxu0
        %s3353 = scalar_lea.vmem [#allocation7], 16
        %v3354 = vld [vmem:[%s3353] sm:$0xff]
        %3355 = vrot.lane.b32.xlu0 %v1014, 112
        %v3356 = vpop.permute.xlu0 %3355
        %3357 = vrot.lane.b32.xlu0 %v1506, 112
        %v3358 = vpop.permute.xlu0 %3357
        %v3359 = vsel %vm1510, %v3356, 0
        %v3361 = vsel %vm1510, %v3358, 0
        %3363 = vmatprep.subr.mxu0 0.0
        %3364 = vmatpush1.xpose.msra.mxu0 0.0
        %3365 = vmatprep.subr.mxu0 0.0
        %3366 = vmatpush1.xpose.msra.mxu0 0.0
        %3367 = vmatprep.subr.mxu0 0.0
        %3368 = vmatpush1.xpose.msra.mxu0 0.0
        %3369 = vmatprep.subr.mxu0 0.0
        %3370 = vmatpush1.xpose.msra.mxu0 0.0
        %3371 = vmatprep.subr.mxu0 0.0
        %3372 = vmatpush1.xpose.msra.mxu0 0.0
        %3373 = vmatprep.subr.mxu0 0.0
        %3374 = vmatpush1.xpose.msra.mxu0 0.0
        %3375 = vmatprep.subr.mxu0 0.0
        %3376 = vmatpush1.xpose.msra.mxu0 0.0
        %3377 = vmatprep.subr.mxu0 0.0
        %3378 = vmatpush1.xpose.msra.mxu0 0.0
        %3379 = vmatprep.subr.mxu0 0.0
        %3380 = vmatpush1.xpose.msra.mxu0 0.0
        %3381 = vmatprep.subr.mxu0 0.0
        %3382 = vmatpush1.xpose.msra.mxu0 0.0
        %3383 = vmatprep.subr.mxu0 0.0
        %3384 = vmatpush1.xpose.msra.mxu0 0.0
        %3385 = vmatprep.subr.mxu0 0.0
        %3386 = vmatpush1.xpose.msra.mxu0 0.0
        %3387 = vmatprep.subr.mxu0 0.0
        %3388 = vmatpush1.xpose.msra.mxu0 0.0
        %3389 = vmatprep.subr.mxu0 0.0
        %3390 = vmatpush1.xpose.msra.mxu0 0.0
        %3391 = vmatprep.subr.mxu0 0.0
        %3392 = vmatpush1.xpose.msra.mxu0 0.0
        %3393 = vmatprep.subr.mxu0 0.0
        %v3394 = vand.u32 %v3361, 4294901760
        %3395 = vmatpush1.xpose.msra.mxu0 %v3394
        %3396 = vmatprep.subr.mxu0 0.0
        %3397 = vmatpush2.xpose.msra.mxu0 0.0
        %3398 = vmatprep.subr.mxu0 0.0
        %3399 = vmatpush2.xpose.msra.mxu0 0.0
        %3400 = vmatprep.subr.mxu0 0.0
        %3401 = vmatpush2.xpose.msra.mxu0 0.0
        %3402 = vmatprep.subr.mxu0 0.0
        %3403 = vmatpush2.xpose.msra.mxu0 0.0
        %3404 = vmatprep.subr.mxu0 0.0
        %3405 = vmatpush2.xpose.msra.mxu0 0.0
        %3406 = vmatprep.subr.mxu0 0.0
        %3407 = vmatpush2.xpose.msra.mxu0 0.0
        %3408 = vmatprep.subr.mxu0 0.0
        %3409 = vmatpush2.xpose.msra.mxu0 0.0
        %3410 = vmatprep.subr.mxu0 0.0
        %3411 = vmatpush2.xpose.msra.mxu0 0.0
        %3412 = vmatprep.subr.mxu0 0.0
        %3413 = vmatpush2.xpose.msra.mxu0 0.0
        %3414 = vmatprep.subr.mxu0 0.0
        %3415 = vmatpush2.xpose.msra.mxu0 0.0
        %3416 = vmatprep.subr.mxu0 0.0
        %3417 = vmatpush2.xpose.msra.mxu0 0.0
        %3418 = vmatprep.subr.mxu0 0.0
        %3419 = vmatpush2.xpose.msra.mxu0 0.0
        %3420 = vmatprep.subr.mxu0 0.0
        %3421 = vmatpush2.xpose.msra.mxu0 0.0
        %3422 = vmatprep.subr.mxu0 0.0
        %3423 = vmatpush2.xpose.msra.mxu0 0.0
        %3424 = vmatprep.subr.mxu0 0.0
        %3425 = vmatpush2.xpose.msra.mxu0 0.0
        %3426 = vmatprep.subr.mxu0 0.0
        %3427 = vmatpush2.xpose.msra.mxu0 0.0
        %3428 = vmatprep.mubr.f32.mxu0 0.0
        %v3429 = vand.u32 %v3359, 4294901760
        %v3430 = vsub.f32 %v3359, %v3429
        %v3431 = vand.u32 %v3430, 4294901760
        %v3432 = vsub.f32 %v3430, %v3431
        %v3433 = vand.u32 %v3432, 4294901760
        %3434 = vmatmul.mubr.f32.gmra.mxu0 %v3433
        %v3435 = vpop.f32.mrf.mxu0
        %v3436 = vadd.f32 %v3354, %v3435
        %v3437 = vpop.f32.mrf.mxu0
        %3438 = vdwg.mxu0
        %3439 = vmatprep.subr.mxu0 0.0
        %3440 = vmatpush1.xpose.msra.mxu0 0.0
        %3441 = vmatprep.subr.mxu0 0.0
        %3442 = vmatpush1.xpose.msra.mxu0 0.0
        %3443 = vmatprep.subr.mxu0 0.0
        %3444 = vmatpush1.xpose.msra.mxu0 0.0
        %3445 = vmatprep.subr.mxu0 0.0
        %3446 = vmatpush1.xpose.msra.mxu0 0.0
        %3447 = vmatprep.subr.mxu0 0.0
        %3448 = vmatpush1.xpose.msra.mxu0 0.0
        %3449 = vmatprep.subr.mxu0 0.0
        %3450 = vmatpush1.xpose.msra.mxu0 0.0
        %3451 = vmatprep.subr.mxu0 0.0
        %3452 = vmatpush1.xpose.msra.mxu0 0.0
        %3453 = vmatprep.subr.mxu0 0.0
        %3454 = vmatpush1.xpose.msra.mxu0 0.0
        %3455 = vmatprep.subr.mxu0 0.0
        %3456 = vmatpush1.xpose.msra.mxu0 0.0
        %3457 = vmatprep.subr.mxu0 0.0
        %3458 = vmatpush1.xpose.msra.mxu0 0.0
        %3459 = vmatprep.subr.mxu0 0.0
        %3460 = vmatpush1.xpose.msra.mxu0 0.0
        %3461 = vmatprep.subr.mxu0 0.0
        %3462 = vmatpush1.xpose.msra.mxu0 0.0
        %3463 = vmatprep.subr.mxu0 0.0
        %3464 = vmatpush1.xpose.msra.mxu0 0.0
        %3465 = vmatprep.subr.mxu0 0.0
        %3466 = vmatpush1.xpose.msra.mxu0 0.0
        %3467 = vmatprep.subr.mxu0 0.0
        %3468 = vmatpush1.xpose.msra.mxu0 0.0
        %3469 = vmatprep.subr.mxu0 0.0
        %v3470 = vand.u32 %v3361, 4294901760
        %v3471 = vsub.f32 %v3361, %v3470
        %v3472 = vand.u32 %v3471, 4294901760
        %v3473 = vsub.f32 %v3471, %v3472
        %v3474 = vand.u32 %v3473, 4294901760
        %3475 = vmatpush1.xpose.msra.mxu0 %v3474
        %3476 = vmatprep.subr.mxu0 0.0
        %3477 = vmatpush2.xpose.msra.mxu0 0.0
        %3478 = vmatprep.subr.mxu0 0.0
        %3479 = vmatpush2.xpose.msra.mxu0 0.0
        %3480 = vmatprep.subr.mxu0 0.0
        %3481 = vmatpush2.xpose.msra.mxu0 0.0
        %3482 = vmatprep.subr.mxu0 0.0
        %3483 = vmatpush2.xpose.msra.mxu0 0.0
        %3484 = vmatprep.subr.mxu0 0.0
        %3485 = vmatpush2.xpose.msra.mxu0 0.0
        %3486 = vmatprep.subr.mxu0 0.0
        %3487 = vmatpush2.xpose.msra.mxu0 0.0
        %3488 = vmatprep.subr.mxu0 0.0
        %3489 = vmatpush2.xpose.msra.mxu0 0.0
        %3490 = vmatprep.subr.mxu0 0.0
        %3491 = vmatpush2.xpose.msra.mxu0 0.0
        %3492 = vmatprep.subr.mxu0 0.0
        %3493 = vmatpush2.xpose.msra.mxu0 0.0
        %3494 = vmatprep.subr.mxu0 0.0
        %3495 = vmatpush2.xpose.msra.mxu0 0.0
        %3496 = vmatprep.subr.mxu0 0.0
        %3497 = vmatpush2.xpose.msra.mxu0 0.0
        %3498 = vmatprep.subr.mxu0 0.0
        %3499 = vmatpush2.xpose.msra.mxu0 0.0
        %3500 = vmatprep.subr.mxu0 0.0
        %3501 = vmatpush2.xpose.msra.mxu0 0.0
        %3502 = vmatprep.subr.mxu0 0.0
        %3503 = vmatpush2.xpose.msra.mxu0 0.0
        %3504 = vmatprep.subr.mxu0 0.0
        %3505 = vmatpush2.xpose.msra.mxu0 0.0
        %3506 = vmatprep.subr.mxu0 0.0
        %3507 = vmatpush2.xpose.msra.mxu0 0.0
        %3508 = vmatprep.mubr.f32.mxu0 0.0
        %v3509 = vand.u32 %v3359, 4294901760
        %3510 = vmatmul.mubr.f32.gmra.mxu0 %v3509
        %v3511 = vpop.f32.mrf.mxu0
        %v3512 = vadd.f32 %v3436, %v3511
        %v3513 = vpop.f32.mrf.mxu0
        %3514 = vdwg.mxu0
        %3515 = vmatprep.subr.mxu0 0.0
        %3516 = vmatpush1.xpose.msra.mxu0 0.0
        %3517 = vmatprep.subr.mxu0 0.0
        %3518 = vmatpush1.xpose.msra.mxu0 0.0
        %3519 = vmatprep.subr.mxu0 0.0
        %3520 = vmatpush1.xpose.msra.mxu0 0.0
        %3521 = vmatprep.subr.mxu0 0.0
        %3522 = vmatpush1.xpose.msra.mxu0 0.0
        %3523 = vmatprep.subr.mxu0 0.0
        %3524 = vmatpush1.xpose.msra.mxu0 0.0
        %3525 = vmatprep.subr.mxu0 0.0
        %3526 = vmatpush1.xpose.msra.mxu0 0.0
        %3527 = vmatprep.subr.mxu0 0.0
        %3528 = vmatpush1.xpose.msra.mxu0 0.0
        %3529 = vmatprep.subr.mxu0 0.0
        %3530 = vmatpush1.xpose.msra.mxu0 0.0
        %3531 = vmatprep.subr.mxu0 0.0
        %3532 = vmatpush1.xpose.msra.mxu0 0.0
        %3533 = vmatprep.subr.mxu0 0.0
        %3534 = vmatpush1.xpose.msra.mxu0 0.0
        %3535 = vmatprep.subr.mxu0 0.0
        %3536 = vmatpush1.xpose.msra.mxu0 0.0
        %3537 = vmatprep.subr.mxu0 0.0
        %3538 = vmatpush1.xpose.msra.mxu0 0.0
        %3539 = vmatprep.subr.mxu0 0.0
        %3540 = vmatpush1.xpose.msra.mxu0 0.0
        %3541 = vmatprep.subr.mxu0 0.0
        %3542 = vmatpush1.xpose.msra.mxu0 0.0
        %3543 = vmatprep.subr.mxu0 0.0
        %3544 = vmatpush1.xpose.msra.mxu0 0.0
        %3545 = vmatprep.subr.mxu0 0.0
        %v3546 = vand.u32 %v3361, 4294901760
        %v3547 = vsub.f32 %v3361, %v3546
        %3548 = vmatpush1.xpose.msra.mxu0 %v3547
        %3549 = vmatprep.subr.mxu0 0.0
        %3550 = vmatpush2.xpose.msra.mxu0 0.0
        %3551 = vmatprep.subr.mxu0 0.0
        %3552 = vmatpush2.xpose.msra.mxu0 0.0
        %3553 = vmatprep.subr.mxu0 0.0
        %3554 = vmatpush2.xpose.msra.mxu0 0.0
        %3555 = vmatprep.subr.mxu0 0.0
        %3556 = vmatpush2.xpose.msra.mxu0 0.0
        %3557 = vmatprep.subr.mxu0 0.0
        %3558 = vmatpush2.xpose.msra.mxu0 0.0
        %3559 = vmatprep.subr.mxu0 0.0
        %3560 = vmatpush2.xpose.msra.mxu0 0.0
        %3561 = vmatprep.subr.mxu0 0.0
        %3562 = vmatpush2.xpose.msra.mxu0 0.0
        %3563 = vmatprep.subr.mxu0 0.0
        %3564 = vmatpush2.xpose.msra.mxu0 0.0
        %3565 = vmatprep.subr.mxu0 0.0
        %3566 = vmatpush2.xpose.msra.mxu0 0.0
        %3567 = vmatprep.subr.mxu0 0.0
        %3568 = vmatpush2.xpose.msra.mxu0 0.0
        %3569 = vmatprep.subr.mxu0 0.0
        %3570 = vmatpush2.xpose.msra.mxu0 0.0
        %3571 = vmatprep.subr.mxu0 0.0
        %3572 = vmatpush2.xpose.msra.mxu0 0.0
        %3573 = vmatprep.subr.mxu0 0.0
        %3574 = vmatpush2.xpose.msra.mxu0 0.0
        %3575 = vmatprep.subr.mxu0 0.0
        %3576 = vmatpush2.xpose.msra.mxu0 0.0
        %3577 = vmatprep.subr.mxu0 0.0
        %3578 = vmatpush2.xpose.msra.mxu0 0.0
        %3579 = vmatprep.subr.mxu0 0.0
        %3580 = vmatpush2.xpose.msra.mxu0 0.0
        %3581 = vmatprep.mubr.f32.mxu0 0.0
        %v3582 = vand.u32 %v3359, 4294901760
        %v3583 = vsub.f32 %v3359, %v3582
        %3584 = vmatmul.mubr.f32.gmra.mxu0 %v3583
        %v3585 = vpop.f32.mrf.mxu0
        %v3586 = vadd.f32 %v3512, %v3585
        %v3587 = vpop.f32.mrf.mxu0
        %3588 = vdwg.mxu0
        %3589 = vmatprep.subr.mxu0 0.0
        %3590 = vmatpush1.xpose.msra.mxu0 0.0
        %3591 = vmatprep.subr.mxu0 0.0
        %3592 = vmatpush1.xpose.msra.mxu0 0.0
        %3593 = vmatprep.subr.mxu0 0.0
        %3594 = vmatpush1.xpose.msra.mxu0 0.0
        %3595 = vmatprep.subr.mxu0 0.0
        %3596 = vmatpush1.xpose.msra.mxu0 0.0
        %3597 = vmatprep.subr.mxu0 0.0
        %3598 = vmatpush1.xpose.msra.mxu0 0.0
        %3599 = vmatprep.subr.mxu0 0.0
        %3600 = vmatpush1.xpose.msra.mxu0 0.0
        %3601 = vmatprep.subr.mxu0 0.0
        %3602 = vmatpush1.xpose.msra.mxu0 0.0
        %3603 = vmatprep.subr.mxu0 0.0
        %3604 = vmatpush1.xpose.msra.mxu0 0.0
        %3605 = vmatprep.subr.mxu0 0.0
        %3606 = vmatpush1.xpose.msra.mxu0 0.0
        %3607 = vmatprep.subr.mxu0 0.0
        %3608 = vmatpush1.xpose.msra.mxu0 0.0
        %3609 = vmatprep.subr.mxu0 0.0
        %3610 = vmatpush1.xpose.msra.mxu0 0.0
        %3611 = vmatprep.subr.mxu0 0.0
        %3612 = vmatpush1.xpose.msra.mxu0 0.0
        %3613 = vmatprep.subr.mxu0 0.0
        %3614 = vmatpush1.xpose.msra.mxu0 0.0
        %3615 = vmatprep.subr.mxu0 0.0
        %3616 = vmatpush1.xpose.msra.mxu0 0.0
        %3617 = vmatprep.subr.mxu0 0.0
        %3618 = vmatpush1.xpose.msra.mxu0 0.0
        %3619 = vmatprep.subr.mxu0 0.0
        %v3620 = vand.u32 %v3361, 4294901760
        %3621 = vmatpush1.xpose.msra.mxu0 %v3620
        %3622 = vmatprep.subr.mxu0 0.0
        %3623 = vmatpush2.xpose.msra.mxu0 0.0
        %3624 = vmatprep.subr.mxu0 0.0
        %3625 = vmatpush2.xpose.msra.mxu0 0.0
        %3626 = vmatprep.subr.mxu0 0.0
        %3627 = vmatpush2.xpose.msra.mxu0 0.0
        %3628 = vmatprep.subr.mxu0 0.0
        %3629 = vmatpush2.xpose.msra.mxu0 0.0
        %3630 = vmatprep.subr.mxu0 0.0
        %3631 = vmatpush2.xpose.msra.mxu0 0.0
        %3632 = vmatprep.subr.mxu0 0.0
        %3633 = vmatpush2.xpose.msra.mxu0 0.0
        %3634 = vmatprep.subr.mxu0 0.0
        %3635 = vmatpush2.xpose.msra.mxu0 0.0
        %3636 = vmatprep.subr.mxu0 0.0
        %3637 = vmatpush2.xpose.msra.mxu0 0.0
        %3638 = vmatprep.subr.mxu0 0.0
        %3639 = vmatpush2.xpose.msra.mxu0 0.0
        %3640 = vmatprep.subr.mxu0 0.0
        %3641 = vmatpush2.xpose.msra.mxu0 0.0
        %3642 = vmatprep.subr.mxu0 0.0
        %3643 = vmatpush2.xpose.msra.mxu0 0.0
        %3644 = vmatprep.subr.mxu0 0.0
        %3645 = vmatpush2.xpose.msra.mxu0 0.0
        %3646 = vmatprep.subr.mxu0 0.0
        %3647 = vmatpush2.xpose.msra.mxu0 0.0
        %3648 = vmatprep.subr.mxu0 0.0
        %3649 = vmatpush2.xpose.msra.mxu0 0.0
        %3650 = vmatprep.subr.mxu0 0.0
        %3651 = vmatpush2.xpose.msra.mxu0 0.0
        %3652 = vmatprep.subr.mxu0 0.0
        %3653 = vmatpush2.xpose.msra.mxu0 0.0
        %3654 = vmatprep.mubr.f32.mxu0 0.0
        %v3655 = vand.u32 %v3359, 4294901760
        %v3656 = vsub.f32 %v3359, %v3655
        %v3657 = vand.u32 %v3656, 4294901760
        %3658 = vmatmul.mubr.f32.gmra.mxu0 %v3657
        %v3659 = vpop.f32.mrf.mxu0
        %v3660 = vadd.f32 %v3586, %v3659
        %v3661 = vpop.f32.mrf.mxu0
        %3662 = vdwg.mxu0
        %3663 = vmatprep.subr.mxu0 0.0
        %3664 = vmatpush1.xpose.msra.mxu0 0.0
        %3665 = vmatprep.subr.mxu0 0.0
        %3666 = vmatpush1.xpose.msra.mxu0 0.0
        %3667 = vmatprep.subr.mxu0 0.0
        %3668 = vmatpush1.xpose.msra.mxu0 0.0
        %3669 = vmatprep.subr.mxu0 0.0
        %3670 = vmatpush1.xpose.msra.mxu0 0.0
        %3671 = vmatprep.subr.mxu0 0.0
        %3672 = vmatpush1.xpose.msra.mxu0 0.0
        %3673 = vmatprep.subr.mxu0 0.0
        %3674 = vmatpush1.xpose.msra.mxu0 0.0
        %3675 = vmatprep.subr.mxu0 0.0
        %3676 = vmatpush1.xpose.msra.mxu0 0.0
        %3677 = vmatprep.subr.mxu0 0.0
        %3678 = vmatpush1.xpose.msra.mxu0 0.0
        %3679 = vmatprep.subr.mxu0 0.0
        %3680 = vmatpush1.xpose.msra.mxu0 0.0
        %3681 = vmatprep.subr.mxu0 0.0
        %3682 = vmatpush1.xpose.msra.mxu0 0.0
        %3683 = vmatprep.subr.mxu0 0.0
        %3684 = vmatpush1.xpose.msra.mxu0 0.0
        %3685 = vmatprep.subr.mxu0 0.0
        %3686 = vmatpush1.xpose.msra.mxu0 0.0
        %3687 = vmatprep.subr.mxu0 0.0
        %3688 = vmatpush1.xpose.msra.mxu0 0.0
        %3689 = vmatprep.subr.mxu0 0.0
        %3690 = vmatpush1.xpose.msra.mxu0 0.0
        %3691 = vmatprep.subr.mxu0 0.0
        %3692 = vmatpush1.xpose.msra.mxu0 0.0
        %3693 = vmatprep.subr.mxu0 0.0
        %v3694 = vand.u32 %v3361, 4294901760
        %v3695 = vsub.f32 %v3361, %v3694
        %v3696 = vand.u32 %v3695, 4294901760
        %3697 = vmatpush1.xpose.msra.mxu0 %v3696
        %3698 = vmatprep.subr.mxu0 0.0
        %3699 = vmatpush2.xpose.msra.mxu0 0.0
        %3700 = vmatprep.subr.mxu0 0.0
        %3701 = vmatpush2.xpose.msra.mxu0 0.0
        %3702 = vmatprep.subr.mxu0 0.0
        %3703 = vmatpush2.xpose.msra.mxu0 0.0
        %3704 = vmatprep.subr.mxu0 0.0
        %3705 = vmatpush2.xpose.msra.mxu0 0.0
        %3706 = vmatprep.subr.mxu0 0.0
        %3707 = vmatpush2.xpose.msra.mxu0 0.0
        %3708 = vmatprep.subr.mxu0 0.0
        %3709 = vmatpush2.xpose.msra.mxu0 0.0
        %3710 = vmatprep.subr.mxu0 0.0
        %3711 = vmatpush2.xpose.msra.mxu0 0.0
        %3712 = vmatprep.subr.mxu0 0.0
        %3713 = vmatpush2.xpose.msra.mxu0 0.0
        %3714 = vmatprep.subr.mxu0 0.0
        %3715 = vmatpush2.xpose.msra.mxu0 0.0
        %3716 = vmatprep.subr.mxu0 0.0
        %3717 = vmatpush2.xpose.msra.mxu0 0.0
        %3718 = vmatprep.subr.mxu0 0.0
        %3719 = vmatpush2.xpose.msra.mxu0 0.0
        %3720 = vmatprep.subr.mxu0 0.0
        %3721 = vmatpush2.xpose.msra.mxu0 0.0
        %3722 = vmatprep.subr.mxu0 0.0
        %3723 = vmatpush2.xpose.msra.mxu0 0.0
        %3724 = vmatprep.subr.mxu0 0.0
        %3725 = vmatpush2.xpose.msra.mxu0 0.0
        %3726 = vmatprep.subr.mxu0 0.0
        %3727 = vmatpush2.xpose.msra.mxu0 0.0
        %3728 = vmatprep.subr.mxu0 0.0
        %3729 = vmatpush2.xpose.msra.mxu0 0.0
        %3730 = vmatprep.mubr.f32.mxu0 0.0
        %v3731 = vand.u32 %v3359, 4294901760
        %3732 = vmatmul.mubr.f32.gmra.mxu0 %v3731
        %v3733 = vpop.f32.mrf.mxu0
        %v3734 = vadd.f32 %v3660, %v3733
        %v3735 = vpop.f32.mrf.mxu0
        %3736 = vdwg.mxu0
        %3737 = vmatprep.subr.mxu0 0.0
        %3738 = vmatpush1.xpose.msra.mxu0 0.0
        %3739 = vmatprep.subr.mxu0 0.0
        %3740 = vmatpush1.xpose.msra.mxu0 0.0
        %3741 = vmatprep.subr.mxu0 0.0
        %3742 = vmatpush1.xpose.msra.mxu0 0.0
        %3743 = vmatprep.subr.mxu0 0.0
        %3744 = vmatpush1.xpose.msra.mxu0 0.0
        %3745 = vmatprep.subr.mxu0 0.0
        %3746 = vmatpush1.xpose.msra.mxu0 0.0
        %3747 = vmatprep.subr.mxu0 0.0
        %3748 = vmatpush1.xpose.msra.mxu0 0.0
        %3749 = vmatprep.subr.mxu0 0.0
        %3750 = vmatpush1.xpose.msra.mxu0 0.0
        %3751 = vmatprep.subr.mxu0 0.0
        %3752 = vmatpush1.xpose.msra.mxu0 0.0
        %3753 = vmatprep.subr.mxu0 0.0
        %3754 = vmatpush1.xpose.msra.mxu0 0.0
        %3755 = vmatprep.subr.mxu0 0.0
        %3756 = vmatpush1.xpose.msra.mxu0 0.0
        %3757 = vmatprep.subr.mxu0 0.0
        %3758 = vmatpush1.xpose.msra.mxu0 0.0
        %3759 = vmatprep.subr.mxu0 0.0
        %3760 = vmatpush1.xpose.msra.mxu0 0.0
        %3761 = vmatprep.subr.mxu0 0.0
        %3762 = vmatpush1.xpose.msra.mxu0 0.0
        %3763 = vmatprep.subr.mxu0 0.0
        %3764 = vmatpush1.xpose.msra.mxu0 0.0
        %3765 = vmatprep.subr.mxu0 0.0
        %3766 = vmatpush1.xpose.msra.mxu0 0.0
        %3767 = vmatprep.subr.mxu0 0.0
        %v3768 = vand.u32 %v3361, 4294901760
        %3769 = vmatpush1.xpose.msra.mxu0 %v3768
        %3770 = vmatprep.subr.mxu0 0.0
        %3771 = vmatpush2.xpose.msra.mxu0 0.0
        %3772 = vmatprep.subr.mxu0 0.0
        %3773 = vmatpush2.xpose.msra.mxu0 0.0
        %3774 = vmatprep.subr.mxu0 0.0
        %3775 = vmatpush2.xpose.msra.mxu0 0.0
        %3776 = vmatprep.subr.mxu0 0.0
        %3777 = vmatpush2.xpose.msra.mxu0 0.0
        %3778 = vmatprep.subr.mxu0 0.0
        %3779 = vmatpush2.xpose.msra.mxu0 0.0
        %3780 = vmatprep.subr.mxu0 0.0
        %3781 = vmatpush2.xpose.msra.mxu0 0.0
        %3782 = vmatprep.subr.mxu0 0.0
        %3783 = vmatpush2.xpose.msra.mxu0 0.0
        %3784 = vmatprep.subr.mxu0 0.0
        %3785 = vmatpush2.xpose.msra.mxu0 0.0
        %3786 = vmatprep.subr.mxu0 0.0
        %3787 = vmatpush2.xpose.msra.mxu0 0.0
        %3788 = vmatprep.subr.mxu0 0.0
        %3789 = vmatpush2.xpose.msra.mxu0 0.0
        %3790 = vmatprep.subr.mxu0 0.0
        %3791 = vmatpush2.xpose.msra.mxu0 0.0
        %3792 = vmatprep.subr.mxu0 0.0
        %3793 = vmatpush2.xpose.msra.mxu0 0.0
        %3794 = vmatprep.subr.mxu0 0.0
        %3795 = vmatpush2.xpose.msra.mxu0 0.0
        %3796 = vmatprep.subr.mxu0 0.0
        %3797 = vmatpush2.xpose.msra.mxu0 0.0
        %3798 = vmatprep.subr.mxu0 0.0
        %3799 = vmatpush2.xpose.msra.mxu0 0.0
        %3800 = vmatprep.subr.mxu0 0.0
        %3801 = vmatpush2.xpose.msra.mxu0 0.0
        %3802 = vmatprep.mubr.f32.mxu0 0.0
        %v3803 = vand.u32 %v3359, 4294901760
        %3804 = vmatmul.mubr.f32.gmra.mxu0 %v3803
        %v3805 = vpop.f32.mrf.mxu0
        %v3806 = vadd.f32 %v3734, %v3805
        %v3807 = vpop.f32.mrf.mxu0
        %3808 = vdwg.mxu0
        %v3809 = vadd.f32 %v3806, %v1967
        %v3810 = vsel %vm1510, %v3809, -inf
        %3811 = vmax.xlane.f32.xlu0 %v3810
        %v3812 = vpop.xlane.xlu0 %3811
        %v3813 = vsub.f32 %v3809, %v3812
        %v3814 = vmul.f32 %v3813, 1.442695
        %v3815 = vpow.pop %v3814
        %v3816 = vsel %vm1510, %v3815, 0.0
        %3817 = vadd.xlane.f32.xlu0 %v3816
        %v3818 = vpop.xlane.xlu0 %3817
        %v3819 = vrcp.pop %v3818
        %v3820 = vmul.f32 %v3815, %v3819
        %3821 = vrot.lane.b32.xlu0 %v1506, 80
        %v3822 = vpop.permute.xlu0 %3821
        %v3825 = vsel %vm1510, %v3820, 0
        %3827 = vmatprep.subr.mxu0 0.0
        %3828 = vmatpush1.msra.mxu0 0.0
        %3829 = vmatprep.subr.mxu0 0.0
        %3830 = vmatpush1.msra.mxu0 0.0
        %3831 = vmatprep.subr.mxu0 0.0
        %3832 = vmatpush1.msra.mxu0 0.0
        %3833 = vmatprep.subr.mxu0 0.0
        %3834 = vmatpush1.msra.mxu0 0.0
        %3835 = vmatprep.subr.mxu0 0.0
        %3836 = vmatpush1.msra.mxu0 0.0
        %3837 = vmatprep.subr.mxu0 0.0
        %3838 = vmatpush1.msra.mxu0 0.0
        %3839 = vmatprep.subr.mxu0 0.0
        %3840 = vmatpush1.msra.mxu0 0.0
        %3841 = vmatprep.subr.mxu0 0.0
        %3842 = vmatpush1.msra.mxu0 0.0
        %3843 = vmatprep.subr.mxu0 0.0
        %3844 = vmatpush1.msra.mxu0 0.0
        %3845 = vmatprep.subr.mxu0 0.0
        %3846 = vmatpush1.msra.mxu0 0.0
        %3847 = vmatprep.subr.mxu0 0.0
        %3848 = vmatpush1.msra.mxu0 0.0
        %3849 = vmatprep.subr.mxu0 0.0
        %3850 = vmatpush1.msra.mxu0 0.0
        %3851 = vmatprep.subr.mxu0 0.0
        %3852 = vmatpush1.msra.mxu0 0.0
        %3853 = vmatprep.subr.mxu0 0.0
        %3854 = vmatpush1.msra.mxu0 0.0
        %3855 = vmatprep.subr.mxu0 0.0
        %3856 = vmatpush1.msra.mxu0 0.0
        %3857 = vmatprep.subr.mxu0 0.0
        %v3858 = vand.u32 %v3822, 4294901760
        %3859 = vmatpush1.msra.mxu0 %v3858
        %3860 = vmatprep.subr.mxu0 0.0
        %3861 = vmatpush2.msra.mxu0 0.0
        %3862 = vmatprep.subr.mxu0 0.0
        %3863 = vmatpush2.msra.mxu0 0.0
        %3864 = vmatprep.subr.mxu0 0.0
        %3865 = vmatpush2.msra.mxu0 0.0
        %3866 = vmatprep.subr.mxu0 0.0
        %3867 = vmatpush2.msra.mxu0 0.0
        %3868 = vmatprep.subr.mxu0 0.0
        %3869 = vmatpush2.msra.mxu0 0.0
        %3870 = vmatprep.subr.mxu0 0.0
        %3871 = vmatpush2.msra.mxu0 0.0
        %3872 = vmatprep.subr.mxu0 0.0
        %3873 = vmatpush2.msra.mxu0 0.0
        %3874 = vmatprep.subr.mxu0 0.0
        %3875 = vmatpush2.msra.mxu0 0.0
        %3876 = vmatprep.subr.mxu0 0.0
        %3877 = vmatpush2.msra.mxu0 0.0
        %3878 = vmatprep.subr.mxu0 0.0
        %3879 = vmatpush2.msra.mxu0 0.0
        %3880 = vmatprep.subr.mxu0 0.0
        %3881 = vmatpush2.msra.mxu0 0.0
        %3882 = vmatprep.subr.mxu0 0.0
        %3883 = vmatpush2.msra.mxu0 0.0
        %3884 = vmatprep.subr.mxu0 0.0
        %3885 = vmatpush2.msra.mxu0 0.0
        %3886 = vmatprep.subr.mxu0 0.0
        %3887 = vmatpush2.msra.mxu0 0.0
        %3888 = vmatprep.subr.mxu0 0.0
        %3889 = vmatpush2.msra.mxu0 0.0
        %3890 = vmatprep.subr.mxu0 0.0
        %3891 = vmatpush2.msra.mxu0 0.0
        %3892 = vmatprep.mubr.f32.mxu0 0.0
        %v3893 = vand.u32 %v3825, 4294901760
        %v3894 = vsub.f32 %v3825, %v3893
        %v3895 = vand.u32 %v3894, 4294901760
        %v3896 = vsub.f32 %v3894, %v3895
        %v3897 = vand.u32 %v3896, 4294901760
        %3898 = vmatmul.mubr.f32.gmra.mxu0 %v3897
        %v3899 = vpop.f32.mrf.mxu0
        %v3900 = vadd.f32 0.0, %v3899
        %v3901 = vpop.f32.mrf.mxu0
        %3902 = vdwg.mxu0
        %3903 = vmatprep.subr.mxu0 0.0
        %3904 = vmatpush1.msra.mxu0 0.0
        %3905 = vmatprep.subr.mxu0 0.0
        %3906 = vmatpush1.msra.mxu0 0.0
        %3907 = vmatprep.subr.mxu0 0.0
        %3908 = vmatpush1.msra.mxu0 0.0
        %3909 = vmatprep.subr.mxu0 0.0
        %3910 = vmatpush1.msra.mxu0 0.0
        %3911 = vmatprep.subr.mxu0 0.0
        %3912 = vmatpush1.msra.mxu0 0.0
        %3913 = vmatprep.subr.mxu0 0.0
        %3914 = vmatpush1.msra.mxu0 0.0
        %3915 = vmatprep.subr.mxu0 0.0
        %3916 = vmatpush1.msra.mxu0 0.0
        %3917 = vmatprep.subr.mxu0 0.0
        %3918 = vmatpush1.msra.mxu0 0.0
        %3919 = vmatprep.subr.mxu0 0.0
        %3920 = vmatpush1.msra.mxu0 0.0
        %3921 = vmatprep.subr.mxu0 0.0
        %3922 = vmatpush1.msra.mxu0 0.0
        %3923 = vmatprep.subr.mxu0 0.0
        %3924 = vmatpush1.msra.mxu0 0.0
        %3925 = vmatprep.subr.mxu0 0.0
        %3926 = vmatpush1.msra.mxu0 0.0
        %3927 = vmatprep.subr.mxu0 0.0
        %3928 = vmatpush1.msra.mxu0 0.0
        %3929 = vmatprep.subr.mxu0 0.0
        %3930 = vmatpush1.msra.mxu0 0.0
        %3931 = vmatprep.subr.mxu0 0.0
        %3932 = vmatpush1.msra.mxu0 0.0
        %3933 = vmatprep.subr.mxu0 0.0
        %v3934 = vand.u32 %v3822, 4294901760
        %v3935 = vsub.f32 %v3822, %v3934
        %v3936 = vand.u32 %v3935, 4294901760
        %v3937 = vsub.f32 %v3935, %v3936
        %v3938 = vand.u32 %v3937, 4294901760
        %3939 = vmatpush1.msra.mxu0 %v3938
        %3940 = vmatprep.subr.mxu0 0.0
        %3941 = vmatpush2.msra.mxu0 0.0
        %3942 = vmatprep.subr.mxu0 0.0
        %3943 = vmatpush2.msra.mxu0 0.0
        %3944 = vmatprep.subr.mxu0 0.0
        %3945 = vmatpush2.msra.mxu0 0.0
        %3946 = vmatprep.subr.mxu0 0.0
        %3947 = vmatpush2.msra.mxu0 0.0
        %3948 = vmatprep.subr.mxu0 0.0
        %3949 = vmatpush2.msra.mxu0 0.0
        %3950 = vmatprep.subr.mxu0 0.0
        %3951 = vmatpush2.msra.mxu0 0.0
        %3952 = vmatprep.subr.mxu0 0.0
        %3953 = vmatpush2.msra.mxu0 0.0
        %3954 = vmatprep.subr.mxu0 0.0
        %3955 = vmatpush2.msra.mxu0 0.0
        %3956 = vmatprep.subr.mxu0 0.0
        %3957 = vmatpush2.msra.mxu0 0.0
        %3958 = vmatprep.subr.mxu0 0.0
        %3959 = vmatpush2.msra.mxu0 0.0
        %3960 = vmatprep.subr.mxu0 0.0
        %3961 = vmatpush2.msra.mxu0 0.0
        %3962 = vmatprep.subr.mxu0 0.0
        %3963 = vmatpush2.msra.mxu0 0.0
        %3964 = vmatprep.subr.mxu0 0.0
        %3965 = vmatpush2.msra.mxu0 0.0
        %3966 = vmatprep.subr.mxu0 0.0
        %3967 = vmatpush2.msra.mxu0 0.0
        %3968 = vmatprep.subr.mxu0 0.0
        %3969 = vmatpush2.msra.mxu0 0.0
        %3970 = vmatprep.subr.mxu0 0.0
        %3971 = vmatpush2.msra.mxu0 0.0
        %3972 = vmatprep.mubr.f32.mxu0 0.0
        %v3973 = vand.u32 %v3825, 4294901760
        %3974 = vmatmul.mubr.f32.gmra.mxu0 %v3973
        %v3975 = vpop.f32.mrf.mxu0
        %v3976 = vadd.f32 %v3900, %v3975
        %v3977 = vpop.f32.mrf.mxu0
        %3978 = vdwg.mxu0
        %3979 = vmatprep.subr.mxu0 0.0
        %3980 = vmatpush1.msra.mxu0 0.0
        %3981 = vmatprep.subr.mxu0 0.0
        %3982 = vmatpush1.msra.mxu0 0.0
        %3983 = vmatprep.subr.mxu0 0.0
        %3984 = vmatpush1.msra.mxu0 0.0
        %3985 = vmatprep.subr.mxu0 0.0
        %3986 = vmatpush1.msra.mxu0 0.0
        %3987 = vmatprep.subr.mxu0 0.0
        %3988 = vmatpush1.msra.mxu0 0.0
        %3989 = vmatprep.subr.mxu0 0.0
        %3990 = vmatpush1.msra.mxu0 0.0
        %3991 = vmatprep.subr.mxu0 0.0
        %3992 = vmatpush1.msra.mxu0 0.0
        %3993 = vmatprep.subr.mxu0 0.0
        %3994 = vmatpush1.msra.mxu0 0.0
        %3995 = vmatprep.subr.mxu0 0.0
        %3996 = vmatpush1.msra.mxu0 0.0
        %3997 = vmatprep.subr.mxu0 0.0
        %3998 = vmatpush1.msra.mxu0 0.0
        %3999 = vmatprep.subr.mxu0 0.0
        %4000 = vmatpush1.msra.mxu0 0.0
        %4001 = vmatprep.subr.mxu0 0.0
        %4002 = vmatpush1.msra.mxu0 0.0
        %4003 = vmatprep.subr.mxu0 0.0
        %4004 = vmatpush1.msra.mxu0 0.0
        %4005 = vmatprep.subr.mxu0 0.0
        %4006 = vmatpush1.msra.mxu0 0.0
        %4007 = vmatprep.subr.mxu0 0.0
        %4008 = vmatpush1.msra.mxu0 0.0
        %4009 = vmatprep.subr.mxu0 0.0
        %v4010 = vand.u32 %v3822, 4294901760
        %v4011 = vsub.f32 %v3822, %v4010
        %4012 = vmatpush1.msra.mxu0 %v4011
        %4013 = vmatprep.subr.mxu0 0.0
        %4014 = vmatpush2.msra.mxu0 0.0
        %4015 = vmatprep.subr.mxu0 0.0
        %4016 = vmatpush2.msra.mxu0 0.0
        %4017 = vmatprep.subr.mxu0 0.0
        %4018 = vmatpush2.msra.mxu0 0.0
        %4019 = vmatprep.subr.mxu0 0.0
        %4020 = vmatpush2.msra.mxu0 0.0
        %4021 = vmatprep.subr.mxu0 0.0
        %4022 = vmatpush2.msra.mxu0 0.0
        %4023 = vmatprep.subr.mxu0 0.0
        %4024 = vmatpush2.msra.mxu0 0.0
        %4025 = vmatprep.subr.mxu0 0.0
        %4026 = vmatpush2.msra.mxu0 0.0
        %4027 = vmatprep.subr.mxu0 0.0
        %4028 = vmatpush2.msra.mxu0 0.0
        %4029 = vmatprep.subr.mxu0 0.0
        %4030 = vmatpush2.msra.mxu0 0.0
        %4031 = vmatprep.subr.mxu0 0.0
        %4032 = vmatpush2.msra.mxu0 0.0
        %4033 = vmatprep.subr.mxu0 0.0
        %4034 = vmatpush2.msra.mxu0 0.0
        %4035 = vmatprep.subr.mxu0 0.0
        %4036 = vmatpush2.msra.mxu0 0.0
        %4037 = vmatprep.subr.mxu0 0.0
        %4038 = vmatpush2.msra.mxu0 0.0
        %4039 = vmatprep.subr.mxu0 0.0
        %4040 = vmatpush2.msra.mxu0 0.0
        %4041 = vmatprep.subr.mxu0 0.0
        %4042 = vmatpush2.msra.mxu0 0.0
        %4043 = vmatprep.subr.mxu0 0.0
        %4044 = vmatpush2.msra.mxu0 0.0
        %4045 = vmatprep.mubr.f32.mxu0 0.0
        %v4046 = vand.u32 %v3825, 4294901760
        %v4047 = vsub.f32 %v3825, %v4046
        %4048 = vmatmul.mubr.f32.gmra.mxu0 %v4047
        %v4049 = vpop.f32.mrf.mxu0
        %v4050 = vadd.f32 %v3976, %v4049
        %v4051 = vpop.f32.mrf.mxu0
        %4052 = vdwg.mxu0
        %4053 = vmatprep.subr.mxu0 0.0
        %4054 = vmatpush1.msra.mxu0 0.0
        %4055 = vmatprep.subr.mxu0 0.0
        %4056 = vmatpush1.msra.mxu0 0.0
        %4057 = vmatprep.subr.mxu0 0.0
        %4058 = vmatpush1.msra.mxu0 0.0
        %4059 = vmatprep.subr.mxu0 0.0
        %4060 = vmatpush1.msra.mxu0 0.0
        %4061 = vmatprep.subr.mxu0 0.0
        %4062 = vmatpush1.msra.mxu0 0.0
        %4063 = vmatprep.subr.mxu0 0.0
        %4064 = vmatpush1.msra.mxu0 0.0
        %4065 = vmatprep.subr.mxu0 0.0
        %4066 = vmatpush1.msra.mxu0 0.0
        %4067 = vmatprep.subr.mxu0 0.0
        %4068 = vmatpush1.msra.mxu0 0.0
        %4069 = vmatprep.subr.mxu0 0.0
        %4070 = vmatpush1.msra.mxu0 0.0
        %4071 = vmatprep.subr.mxu0 0.0
        %4072 = vmatpush1.msra.mxu0 0.0
        %4073 = vmatprep.subr.mxu0 0.0
        %4074 = vmatpush1.msra.mxu0 0.0
        %4075 = vmatprep.subr.mxu0 0.0
        %4076 = vmatpush1.msra.mxu0 0.0
        %4077 = vmatprep.subr.mxu0 0.0
        %4078 = vmatpush1.msra.mxu0 0.0
        %4079 = vmatprep.subr.mxu0 0.0
        %4080 = vmatpush1.msra.mxu0 0.0
        %4081 = vmatprep.subr.mxu0 0.0
        %4082 = vmatpush1.msra.mxu0 0.0
        %4083 = vmatprep.subr.mxu0 0.0
        %v4084 = vand.u32 %v3822, 4294901760
        %4085 = vmatpush1.msra.mxu0 %v4084
        %4086 = vmatprep.subr.mxu0 0.0
        %4087 = vmatpush2.msra.mxu0 0.0
        %4088 = vmatprep.subr.mxu0 0.0
        %4089 = vmatpush2.msra.mxu0 0.0
        %4090 = vmatprep.subr.mxu0 0.0
        %4091 = vmatpush2.msra.mxu0 0.0
        %4092 = vmatprep.subr.mxu0 0.0
        %4093 = vmatpush2.msra.mxu0 0.0
        %4094 = vmatprep.subr.mxu0 0.0
        %4095 = vmatpush2.msra.mxu0 0.0
        %4096 = vmatprep.subr.mxu0 0.0
        %4097 = vmatpush2.msra.mxu0 0.0
        %4098 = vmatprep.subr.mxu0 0.0
        %4099 = vmatpush2.msra.mxu0 0.0
        %4100 = vmatprep.subr.mxu0 0.0
        %4101 = vmatpush2.msra.mxu0 0.0
        %4102 = vmatprep.subr.mxu0 0.0
        %4103 = vmatpush2.msra.mxu0 0.0
        %4104 = vmatprep.subr.mxu0 0.0
        %4105 = vmatpush2.msra.mxu0 0.0
        %4106 = vmatprep.subr.mxu0 0.0
        %4107 = vmatpush2.msra.mxu0 0.0
        %4108 = vmatprep.subr.mxu0 0.0
        %4109 = vmatpush2.msra.mxu0 0.0
        %4110 = vmatprep.subr.mxu0 0.0
        %4111 = vmatpush2.msra.mxu0 0.0
        %4112 = vmatprep.subr.mxu0 0.0
        %4113 = vmatpush2.msra.mxu0 0.0
        %4114 = vmatprep.subr.mxu0 0.0
        %4115 = vmatpush2.msra.mxu0 0.0
        %4116 = vmatprep.subr.mxu0 0.0
        %4117 = vmatpush2.msra.mxu0 0.0
        %4118 = vmatprep.mubr.f32.mxu0 0.0
        %v4119 = vand.u32 %v3825, 4294901760
        %v4120 = vsub.f32 %v3825, %v4119
        %v4121 = vand.u32 %v4120, 4294901760
        %4122 = vmatmul.mubr.f32.gmra.mxu0 %v4121
        %v4123 = vpop.f32.mrf.mxu0
        %v4124 = vadd.f32 %v4050, %v4123
        %v4125 = vpop.f32.mrf.mxu0
        %4126 = vdwg.mxu0
        %4127 = vmatprep.subr.mxu0 0.0
        %4128 = vmatpush1.msra.mxu0 0.0
        %4129 = vmatprep.subr.mxu0 0.0
        %4130 = vmatpush1.msra.mxu0 0.0
        %4131 = vmatprep.subr.mxu0 0.0
        %4132 = vmatpush1.msra.mxu0 0.0
        %4133 = vmatprep.subr.mxu0 0.0
        %4134 = vmatpush1.msra.mxu0 0.0
        %4135 = vmatprep.subr.mxu0 0.0
        %4136 = vmatpush1.msra.mxu0 0.0
        %4137 = vmatprep.subr.mxu0 0.0
        %4138 = vmatpush1.msra.mxu0 0.0
        %4139 = vmatprep.subr.mxu0 0.0
        %4140 = vmatpush1.msra.mxu0 0.0
        %4141 = vmatprep.subr.mxu0 0.0
        %4142 = vmatpush1.msra.mxu0 0.0
        %4143 = vmatprep.subr.mxu0 0.0
        %4144 = vmatpush1.msra.mxu0 0.0
        %4145 = vmatprep.subr.mxu0 0.0
        %4146 = vmatpush1.msra.mxu0 0.0
        %4147 = vmatprep.subr.mxu0 0.0
        %4148 = vmatpush1.msra.mxu0 0.0
        %4149 = vmatprep.subr.mxu0 0.0
        %4150 = vmatpush1.msra.mxu0 0.0
        %4151 = vmatprep.subr.mxu0 0.0
        %4152 = vmatpush1.msra.mxu0 0.0
        %4153 = vmatprep.subr.mxu0 0.0
        %4154 = vmatpush1.msra.mxu0 0.0
        %4155 = vmatprep.subr.mxu0 0.0
        %4156 = vmatpush1.msra.mxu0 0.0
        %4157 = vmatprep.subr.mxu0 0.0
        %v4158 = vand.u32 %v3822, 4294901760
        %v4159 = vsub.f32 %v3822, %v4158
        %v4160 = vand.u32 %v4159, 4294901760
        %4161 = vmatpush1.msra.mxu0 %v4160
        %4162 = vmatprep.subr.mxu0 0.0
        %4163 = vmatpush2.msra.mxu0 0.0
        %4164 = vmatprep.subr.mxu0 0.0
        %4165 = vmatpush2.msra.mxu0 0.0
        %4166 = vmatprep.subr.mxu0 0.0
        %4167 = vmatpush2.msra.mxu0 0.0
        %4168 = vmatprep.subr.mxu0 0.0
        %4169 = vmatpush2.msra.mxu0 0.0
        %4170 = vmatprep.subr.mxu0 0.0
        %4171 = vmatpush2.msra.mxu0 0.0
        %4172 = vmatprep.subr.mxu0 0.0
        %4173 = vmatpush2.msra.mxu0 0.0
        %4174 = vmatprep.subr.mxu0 0.0
        %4175 = vmatpush2.msra.mxu0 0.0
        %4176 = vmatprep.subr.mxu0 0.0
        %4177 = vmatpush2.msra.mxu0 0.0
        %4178 = vmatprep.subr.mxu0 0.0
        %4179 = vmatpush2.msra.mxu0 0.0
        %4180 = vmatprep.subr.mxu0 0.0
        %4181 = vmatpush2.msra.mxu0 0.0
        %4182 = vmatprep.subr.mxu0 0.0
        %4183 = vmatpush2.msra.mxu0 0.0
        %4184 = vmatprep.subr.mxu0 0.0
        %4185 = vmatpush2.msra.mxu0 0.0
        %4186 = vmatprep.subr.mxu0 0.0
        %4187 = vmatpush2.msra.mxu0 0.0
        %4188 = vmatprep.subr.mxu0 0.0
        %4189 = vmatpush2.msra.mxu0 0.0
        %4190 = vmatprep.subr.mxu0 0.0
        %4191 = vmatpush2.msra.mxu0 0.0
        %4192 = vmatprep.subr.mxu0 0.0
        %4193 = vmatpush2.msra.mxu0 0.0
        %4194 = vmatprep.mubr.f32.mxu0 0.0
        %v4195 = vand.u32 %v3825, 4294901760
        %4196 = vmatmul.mubr.f32.gmra.mxu0 %v4195
        %v4197 = vpop.f32.mrf.mxu0
        %v4198 = vadd.f32 %v4124, %v4197
        %v4199 = vpop.f32.mrf.mxu0
        %4200 = vdwg.mxu0
        %4201 = vmatprep.subr.mxu0 0.0
        %4202 = vmatpush1.msra.mxu0 0.0
        %4203 = vmatprep.subr.mxu0 0.0
        %4204 = vmatpush1.msra.mxu0 0.0
        %4205 = vmatprep.subr.mxu0 0.0
        %4206 = vmatpush1.msra.mxu0 0.0
        %4207 = vmatprep.subr.mxu0 0.0
        %4208 = vmatpush1.msra.mxu0 0.0
        %4209 = vmatprep.subr.mxu0 0.0
        %4210 = vmatpush1.msra.mxu0 0.0
        %4211 = vmatprep.subr.mxu0 0.0
        %4212 = vmatpush1.msra.mxu0 0.0
        %4213 = vmatprep.subr.mxu0 0.0
        %4214 = vmatpush1.msra.mxu0 0.0
        %4215 = vmatprep.subr.mxu0 0.0
        %4216 = vmatpush1.msra.mxu0 0.0
        %4217 = vmatprep.subr.mxu0 0.0
        %4218 = vmatpush1.msra.mxu0 0.0
        %4219 = vmatprep.subr.mxu0 0.0
        %4220 = vmatpush1.msra.mxu0 0.0
        %4221 = vmatprep.subr.mxu0 0.0
        %4222 = vmatpush1.msra.mxu0 0.0
        %4223 = vmatprep.subr.mxu0 0.0
        %4224 = vmatpush1.msra.mxu0 0.0
        %4225 = vmatprep.subr.mxu0 0.0
        %4226 = vmatpush1.msra.mxu0 0.0
        %4227 = vmatprep.subr.mxu0 0.0
        %4228 = vmatpush1.msra.mxu0 0.0
        %4229 = vmatprep.subr.mxu0 0.0
        %4230 = vmatpush1.msra.mxu0 0.0
        %4231 = vmatprep.subr.mxu0 0.0
        %v4232 = vand.u32 %v3822, 4294901760
        %4233 = vmatpush1.msra.mxu0 %v4232
        %4234 = vmatprep.subr.mxu0 0.0
        %4235 = vmatpush2.msra.mxu0 0.0
        %4236 = vmatprep.subr.mxu0 0.0
        %4237 = vmatpush2.msra.mxu0 0.0
        %4238 = vmatprep.subr.mxu0 0.0
        %4239 = vmatpush2.msra.mxu0 0.0
        %4240 = vmatprep.subr.mxu0 0.0
        %4241 = vmatpush2.msra.mxu0 0.0
        %4242 = vmatprep.subr.mxu0 0.0
        %4243 = vmatpush2.msra.mxu0 0.0
        %4244 = vmatprep.subr.mxu0 0.0
        %4245 = vmatpush2.msra.mxu0 0.0
        %4246 = vmatprep.subr.mxu0 0.0
        %4247 = vmatpush2.msra.mxu0 0.0
        %4248 = vmatprep.subr.mxu0 0.0
        %4249 = vmatpush2.msra.mxu0 0.0
        %4250 = vmatprep.subr.mxu0 0.0
        %4251 = vmatpush2.msra.mxu0 0.0
        %4252 = vmatprep.subr.mxu0 0.0
        %4253 = vmatpush2.msra.mxu0 0.0
        %4254 = vmatprep.subr.mxu0 0.0
        %4255 = vmatpush2.msra.mxu0 0.0
        %4256 = vmatprep.subr.mxu0 0.0
        %4257 = vmatpush2.msra.mxu0 0.0
        %4258 = vmatprep.subr.mxu0 0.0
        %4259 = vmatpush2.msra.mxu0 0.0
        %4260 = vmatprep.subr.mxu0 0.0
        %4261 = vmatpush2.msra.mxu0 0.0
        %4262 = vmatprep.subr.mxu0 0.0
        %4263 = vmatpush2.msra.mxu0 0.0
        %4264 = vmatprep.subr.mxu0 0.0
        %4265 = vmatpush2.msra.mxu0 0.0
        %4266 = vmatprep.mubr.f32.mxu0 0.0
        %v4267 = vand.u32 %v3825, 4294901760
        %4268 = vmatmul.mubr.f32.gmra.mxu0 %v4267
        %v4269 = vpop.f32.mrf.mxu0
        %v4270 = vadd.f32 %v4198, %v4269
        %v4271 = vpop.f32.mrf.mxu0
        %4272 = vdwg.mxu0
        %s4273 = scalar_lea.vmem [#allocation7], 24
        %v4274 = vld [vmem:[%s4273] sm:$0xff]
        %4275 = vrot.lane.b32.xlu0 %v1014, 104
        %v4276 = vpop.permute.xlu0 %4275
        %4277 = vrot.lane.b32.xlu0 %v1506, 104
        %v4278 = vpop.permute.xlu0 %4277
        %v4279 = vsel %vm1510, %v4276, 0
        %v4281 = vsel %vm1510, %v4278, 0
        %4283 = vmatprep.subr.mxu0 0.0
        %4284 = vmatpush1.xpose.msra.mxu0 0.0
        %4285 = vmatprep.subr.mxu0 0.0
        %4286 = vmatpush1.xpose.msra.mxu0 0.0
        %4287 = vmatprep.subr.mxu0 0.0
        %4288 = vmatpush1.xpose.msra.mxu0 0.0
        %4289 = vmatprep.subr.mxu0 0.0
        %4290 = vmatpush1.xpose.msra.mxu0 0.0
        %4291 = vmatprep.subr.mxu0 0.0
        %4292 = vmatpush1.xpose.msra.mxu0 0.0
        %4293 = vmatprep.subr.mxu0 0.0
        %4294 = vmatpush1.xpose.msra.mxu0 0.0
        %4295 = vmatprep.subr.mxu0 0.0
        %4296 = vmatpush1.xpose.msra.mxu0 0.0
        %4297 = vmatprep.subr.mxu0 0.0
        %4298 = vmatpush1.xpose.msra.mxu0 0.0
        %4299 = vmatprep.subr.mxu0 0.0
        %4300 = vmatpush1.xpose.msra.mxu0 0.0
        %4301 = vmatprep.subr.mxu0 0.0
        %4302 = vmatpush1.xpose.msra.mxu0 0.0
        %4303 = vmatprep.subr.mxu0 0.0
        %4304 = vmatpush1.xpose.msra.mxu0 0.0
        %4305 = vmatprep.subr.mxu0 0.0
        %4306 = vmatpush1.xpose.msra.mxu0 0.0
        %4307 = vmatprep.subr.mxu0 0.0
        %4308 = vmatpush1.xpose.msra.mxu0 0.0
        %4309 = vmatprep.subr.mxu0 0.0
        %4310 = vmatpush1.xpose.msra.mxu0 0.0
        %4311 = vmatprep.subr.mxu0 0.0
        %4312 = vmatpush1.xpose.msra.mxu0 0.0
        %4313 = vmatprep.subr.mxu0 0.0
        %v4314 = vand.u32 %v4281, 4294901760
        %4315 = vmatpush1.xpose.msra.mxu0 %v4314
        %4316 = vmatprep.subr.mxu0 0.0
        %4317 = vmatpush2.xpose.msra.mxu0 0.0
        %4318 = vmatprep.subr.mxu0 0.0
        %4319 = vmatpush2.xpose.msra.mxu0 0.0
        %4320 = vmatprep.subr.mxu0 0.0
        %4321 = vmatpush2.xpose.msra.mxu0 0.0
        %4322 = vmatprep.subr.mxu0 0.0
        %4323 = vmatpush2.xpose.msra.mxu0 0.0
        %4324 = vmatprep.subr.mxu0 0.0
        %4325 = vmatpush2.xpose.msra.mxu0 0.0
        %4326 = vmatprep.subr.mxu0 0.0
        %4327 = vmatpush2.xpose.msra.mxu0 0.0
        %4328 = vmatprep.subr.mxu0 0.0
        %4329 = vmatpush2.xpose.msra.mxu0 0.0
        %4330 = vmatprep.subr.mxu0 0.0
        %4331 = vmatpush2.xpose.msra.mxu0 0.0
        %4332 = vmatprep.subr.mxu0 0.0
        %4333 = vmatpush2.xpose.msra.mxu0 0.0
        %4334 = vmatprep.subr.mxu0 0.0
        %4335 = vmatpush2.xpose.msra.mxu0 0.0
        %4336 = vmatprep.subr.mxu0 0.0
        %4337 = vmatpush2.xpose.msra.mxu0 0.0
        %4338 = vmatprep.subr.mxu0 0.0
        %4339 = vmatpush2.xpose.msra.mxu0 0.0
        %4340 = vmatprep.subr.mxu0 0.0
        %4341 = vmatpush2.xpose.msra.mxu0 0.0
        %4342 = vmatprep.subr.mxu0 0.0
        %4343 = vmatpush2.xpose.msra.mxu0 0.0
        %4344 = vmatprep.subr.mxu0 0.0
        %4345 = vmatpush2.xpose.msra.mxu0 0.0
        %4346 = vmatprep.subr.mxu0 0.0
        %4347 = vmatpush2.xpose.msra.mxu0 0.0
        %4348 = vmatprep.mubr.f32.mxu0 0.0
        %v4349 = vand.u32 %v4279, 4294901760
        %v4350 = vsub.f32 %v4279, %v4349
        %v4351 = vand.u32 %v4350, 4294901760
        %v4352 = vsub.f32 %v4350, %v4351
        %v4353 = vand.u32 %v4352, 4294901760
        %4354 = vmatmul.mubr.f32.gmra.mxu0 %v4353
        %v4355 = vpop.f32.mrf.mxu0
        %v4356 = vadd.f32 %v4274, %v4355
        %v4357 = vpop.f32.mrf.mxu0
        %4358 = vdwg.mxu0
        %4359 = vmatprep.subr.mxu0 0.0
        %4360 = vmatpush1.xpose.msra.mxu0 0.0
        %4361 = vmatprep.subr.mxu0 0.0
        %4362 = vmatpush1.xpose.msra.mxu0 0.0
        %4363 = vmatprep.subr.mxu0 0.0
        %4364 = vmatpush1.xpose.msra.mxu0 0.0
        %4365 = vmatprep.subr.mxu0 0.0
        %4366 = vmatpush1.xpose.msra.mxu0 0.0
        %4367 = vmatprep.subr.mxu0 0.0
        %4368 = vmatpush1.xpose.msra.mxu0 0.0
        %4369 = vmatprep.subr.mxu0 0.0
        %4370 = vmatpush1.xpose.msra.mxu0 0.0
        %4371 = vmatprep.subr.mxu0 0.0
        %4372 = vmatpush1.xpose.msra.mxu0 0.0
        %4373 = vmatprep.subr.mxu0 0.0
        %4374 = vmatpush1.xpose.msra.mxu0 0.0
        %4375 = vmatprep.subr.mxu0 0.0
        %4376 = vmatpush1.xpose.msra.mxu0 0.0
        %4377 = vmatprep.subr.mxu0 0.0
        %4378 = vmatpush1.xpose.msra.mxu0 0.0
        %4379 = vmatprep.subr.mxu0 0.0
        %4380 = vmatpush1.xpose.msra.mxu0 0.0
        %4381 = vmatprep.subr.mxu0 0.0
        %4382 = vmatpush1.xpose.msra.mxu0 0.0
        %4383 = vmatprep.subr.mxu0 0.0
        %4384 = vmatpush1.xpose.msra.mxu0 0.0
        %4385 = vmatprep.subr.mxu0 0.0
        %4386 = vmatpush1.xpose.msra.mxu0 0.0
        %4387 = vmatprep.subr.mxu0 0.0
        %4388 = vmatpush1.xpose.msra.mxu0 0.0
        %4389 = vmatprep.subr.mxu0 0.0
        %v4390 = vand.u32 %v4281, 4294901760
        %v4391 = vsub.f32 %v4281, %v4390
        %v4392 = vand.u32 %v4391, 4294901760
        %v4393 = vsub.f32 %v4391, %v4392
        %v4394 = vand.u32 %v4393, 4294901760
        %4395 = vmatpush1.xpose.msra.mxu0 %v4394
        %4396 = vmatprep.subr.mxu0 0.0
        %4397 = vmatpush2.xpose.msra.mxu0 0.0
        %4398 = vmatprep.subr.mxu0 0.0
        %4399 = vmatpush2.xpose.msra.mxu0 0.0
        %4400 = vmatprep.subr.mxu0 0.0
        %4401 = vmatpush2.xpose.msra.mxu0 0.0
        %4402 = vmatprep.subr.mxu0 0.0
        %4403 = vmatpush2.xpose.msra.mxu0 0.0
        %4404 = vmatprep.subr.mxu0 0.0
        %4405 = vmatpush2.xpose.msra.mxu0 0.0
        %4406 = vmatprep.subr.mxu0 0.0
        %4407 = vmatpush2.xpose.msra.mxu0 0.0
        %4408 = vmatprep.subr.mxu0 0.0
        %4409 = vmatpush2.xpose.msra.mxu0 0.0
        %4410 = vmatprep.subr.mxu0 0.0
        %4411 = vmatpush2.xpose.msra.mxu0 0.0
        %4412 = vmatprep.subr.mxu0 0.0
        %4413 = vmatpush2.xpose.msra.mxu0 0.0
        %4414 = vmatprep.subr.mxu0 0.0
        %4415 = vmatpush2.xpose.msra.mxu0 0.0
        %4416 = vmatprep.subr.mxu0 0.0
        %4417 = vmatpush2.xpose.msra.mxu0 0.0
        %4418 = vmatprep.subr.mxu0 0.0
        %4419 = vmatpush2.xpose.msra.mxu0 0.0
        %4420 = vmatprep.subr.mxu0 0.0
        %4421 = vmatpush2.xpose.msra.mxu0 0.0
        %4422 = vmatprep.subr.mxu0 0.0
        %4423 = vmatpush2.xpose.msra.mxu0 0.0
        %4424 = vmatprep.subr.mxu0 0.0
        %4425 = vmatpush2.xpose.msra.mxu0 0.0
        %4426 = vmatprep.subr.mxu0 0.0
        %4427 = vmatpush2.xpose.msra.mxu0 0.0
        %4428 = vmatprep.mubr.f32.mxu0 0.0
        %v4429 = vand.u32 %v4279, 4294901760
        %4430 = vmatmul.mubr.f32.gmra.mxu0 %v4429
        %v4431 = vpop.f32.mrf.mxu0
        %v4432 = vadd.f32 %v4356, %v4431
        %v4433 = vpop.f32.mrf.mxu0
        %4434 = vdwg.mxu0
        %4435 = vmatprep.subr.mxu0 0.0
        %4436 = vmatpush1.xpose.msra.mxu0 0.0
        %4437 = vmatprep.subr.mxu0 0.0
        %4438 = vmatpush1.xpose.msra.mxu0 0.0
        %4439 = vmatprep.subr.mxu0 0.0
        %4440 = vmatpush1.xpose.msra.mxu0 0.0
        %4441 = vmatprep.subr.mxu0 0.0
        %4442 = vmatpush1.xpose.msra.mxu0 0.0
        %4443 = vmatprep.subr.mxu0 0.0
        %4444 = vmatpush1.xpose.msra.mxu0 0.0
        %4445 = vmatprep.subr.mxu0 0.0
        %4446 = vmatpush1.xpose.msra.mxu0 0.0
        %4447 = vmatprep.subr.mxu0 0.0
        %4448 = vmatpush1.xpose.msra.mxu0 0.0
        %4449 = vmatprep.subr.mxu0 0.0
        %4450 = vmatpush1.xpose.msra.mxu0 0.0
        %4451 = vmatprep.subr.mxu0 0.0
        %4452 = vmatpush1.xpose.msra.mxu0 0.0
        %4453 = vmatprep.subr.mxu0 0.0
        %4454 = vmatpush1.xpose.msra.mxu0 0.0
        %4455 = vmatprep.subr.mxu0 0.0
        %4456 = vmatpush1.xpose.msra.mxu0 0.0
        %4457 = vmatprep.subr.mxu0 0.0
        %4458 = vmatpush1.xpose.msra.mxu0 0.0
        %4459 = vmatprep.subr.mxu0 0.0
        %4460 = vmatpush1.xpose.msra.mxu0 0.0
        %4461 = vmatprep.subr.mxu0 0.0
        %4462 = vmatpush1.xpose.msra.mxu0 0.0
        %4463 = vmatprep.subr.mxu0 0.0
        %4464 = vmatpush1.xpose.msra.mxu0 0.0
        %4465 = vmatprep.subr.mxu0 0.0
        %v4466 = vand.u32 %v4281, 4294901760
        %v4467 = vsub.f32 %v4281, %v4466
        %4468 = vmatpush1.xpose.msra.mxu0 %v4467
        %4469 = vmatprep.subr.mxu0 0.0
        %4470 = vmatpush2.xpose.msra.mxu0 0.0
        %4471 = vmatprep.subr.mxu0 0.0
        %4472 = vmatpush2.xpose.msra.mxu0 0.0
        %4473 = vmatprep.subr.mxu0 0.0
        %4474 = vmatpush2.xpose.msra.mxu0 0.0
        %4475 = vmatprep.subr.mxu0 0.0
        %4476 = vmatpush2.xpose.msra.mxu0 0.0
        %4477 = vmatprep.subr.mxu0 0.0
        %4478 = vmatpush2.xpose.msra.mxu0 0.0
        %4479 = vmatprep.subr.mxu0 0.0
        %4480 = vmatpush2.xpose.msra.mxu0 0.0
        %4481 = vmatprep.subr.mxu0 0.0
        %4482 = vmatpush2.xpose.msra.mxu0 0.0
        %4483 = vmatprep.subr.mxu0 0.0
        %4484 = vmatpush2.xpose.msra.mxu0 0.0
        %4485 = vmatprep.subr.mxu0 0.0
        %4486 = vmatpush2.xpose.msra.mxu0 0.0
        %4487 = vmatprep.subr.mxu0 0.0
        %4488 = vmatpush2.xpose.msra.mxu0 0.0
        %4489 = vmatprep.subr.mxu0 0.0
        %4490 = vmatpush2.xpose.msra.mxu0 0.0
        %4491 = vmatprep.subr.mxu0 0.0
        %4492 = vmatpush2.xpose.msra.mxu0 0.0
        %4493 = vmatprep.subr.mxu0 0.0
        %4494 = vmatpush2.xpose.msra.mxu0 0.0
        %4495 = vmatprep.subr.mxu0 0.0
        %4496 = vmatpush2.xpose.msra.mxu0 0.0
        %4497 = vmatprep.subr.mxu0 0.0
        %4498 = vmatpush2.xpose.msra.mxu0 0.0
        %4499 = vmatprep.subr.mxu0 0.0
        %4500 = vmatpush2.xpose.msra.mxu0 0.0
        %4501 = vmatprep.mubr.f32.mxu0 0.0
        %v4502 = vand.u32 %v4279, 4294901760
        %v4503 = vsub.f32 %v4279, %v4502
        %4504 = vmatmul.mubr.f32.gmra.mxu0 %v4503
        %v4505 = vpop.f32.mrf.mxu0
        %v4506 = vadd.f32 %v4432, %v4505
        %v4507 = vpop.f32.mrf.mxu0
        %4508 = vdwg.mxu0
        %4509 = vmatprep.subr.mxu0 0.0
        %4510 = vmatpush1.xpose.msra.mxu0 0.0
        %4511 = vmatprep.subr.mxu0 0.0
        %4512 = vmatpush1.xpose.msra.mxu0 0.0
        %4513 = vmatprep.subr.mxu0 0.0
        %4514 = vmatpush1.xpose.msra.mxu0 0.0
        %4515 = vmatprep.subr.mxu0 0.0
        %4516 = vmatpush1.xpose.msra.mxu0 0.0
        %4517 = vmatprep.subr.mxu0 0.0
        %4518 = vmatpush1.xpose.msra.mxu0 0.0
        %4519 = vmatprep.subr.mxu0 0.0
        %4520 = vmatpush1.xpose.msra.mxu0 0.0
        %4521 = vmatprep.subr.mxu0 0.0
        %4522 = vmatpush1.xpose.msra.mxu0 0.0
        %4523 = vmatprep.subr.mxu0 0.0
        %4524 = vmatpush1.xpose.msra.mxu0 0.0
        %4525 = vmatprep.subr.mxu0 0.0
        %4526 = vmatpush1.xpose.msra.mxu0 0.0
        %4527 = vmatprep.subr.mxu0 0.0
        %4528 = vmatpush1.xpose.msra.mxu0 0.0
        %4529 = vmatprep.subr.mxu0 0.0
        %4530 = vmatpush1.xpose.msra.mxu0 0.0
        %4531 = vmatprep.subr.mxu0 0.0
        %4532 = vmatpush1.xpose.msra.mxu0 0.0
        %4533 = vmatprep.subr.mxu0 0.0
        %4534 = vmatpush1.xpose.msra.mxu0 0.0
        %4535 = vmatprep.subr.mxu0 0.0
        %4536 = vmatpush1.xpose.msra.mxu0 0.0
        %4537 = vmatprep.subr.mxu0 0.0
        %4538 = vmatpush1.xpose.msra.mxu0 0.0
        %4539 = vmatprep.subr.mxu0 0.0
        %v4540 = vand.u32 %v4281, 4294901760
        %4541 = vmatpush1.xpose.msra.mxu0 %v4540
        %4542 = vmatprep.subr.mxu0 0.0
        %4543 = vmatpush2.xpose.msra.mxu0 0.0
        %4544 = vmatprep.subr.mxu0 0.0
        %4545 = vmatpush2.xpose.msra.mxu0 0.0
        %4546 = vmatprep.subr.mxu0 0.0
        %4547 = vmatpush2.xpose.msra.mxu0 0.0
        %4548 = vmatprep.subr.mxu0 0.0
        %4549 = vmatpush2.xpose.msra.mxu0 0.0
        %4550 = vmatprep.subr.mxu0 0.0
        %4551 = vmatpush2.xpose.msra.mxu0 0.0
        %4552 = vmatprep.subr.mxu0 0.0
        %4553 = vmatpush2.xpose.msra.mxu0 0.0
        %4554 = vmatprep.subr.mxu0 0.0
        %4555 = vmatpush2.xpose.msra.mxu0 0.0
        %4556 = vmatprep.subr.mxu0 0.0
        %4557 = vmatpush2.xpose.msra.mxu0 0.0
        %4558 = vmatprep.subr.mxu0 0.0
        %4559 = vmatpush2.xpose.msra.mxu0 0.0
        %4560 = vmatprep.subr.mxu0 0.0
        %4561 = vmatpush2.xpose.msra.mxu0 0.0
        %4562 = vmatprep.subr.mxu0 0.0
        %4563 = vmatpush2.xpose.msra.mxu0 0.0
        %4564 = vmatprep.subr.mxu0 0.0
        %4565 = vmatpush2.xpose.msra.mxu0 0.0
        %4566 = vmatprep.subr.mxu0 0.0
        %4567 = vmatpush2.xpose.msra.mxu0 0.0
        %4568 = vmatprep.subr.mxu0 0.0
        %4569 = vmatpush2.xpose.msra.mxu0 0.0
        %4570 = vmatprep.subr.mxu0 0.0
        %4571 = vmatpush2.xpose.msra.mxu0 0.0
        %4572 = vmatprep.subr.mxu0 0.0
        %4573 = vmatpush2.xpose.msra.mxu0 0.0
        %4574 = vmatprep.mubr.f32.mxu0 0.0
        %v4575 = vand.u32 %v4279, 4294901760
        %v4576 = vsub.f32 %v4279, %v4575
        %v4577 = vand.u32 %v4576, 4294901760
        %4578 = vmatmul.mubr.f32.gmra.mxu0 %v4577
        %v4579 = vpop.f32.mrf.mxu0
        %v4580 = vadd.f32 %v4506, %v4579
        %v4581 = vpop.f32.mrf.mxu0
        %4582 = vdwg.mxu0
        %4583 = vmatprep.subr.mxu0 0.0
        %4584 = vmatpush1.xpose.msra.mxu0 0.0
        %4585 = vmatprep.subr.mxu0 0.0
        %4586 = vmatpush1.xpose.msra.mxu0 0.0
        %4587 = vmatprep.subr.mxu0 0.0
        %4588 = vmatpush1.xpose.msra.mxu0 0.0
        %4589 = vmatprep.subr.mxu0 0.0
        %4590 = vmatpush1.xpose.msra.mxu0 0.0
        %4591 = vmatprep.subr.mxu0 0.0
        %4592 = vmatpush1.xpose.msra.mxu0 0.0
        %4593 = vmatprep.subr.mxu0 0.0
        %4594 = vmatpush1.xpose.msra.mxu0 0.0
        %4595 = vmatprep.subr.mxu0 0.0
        %4596 = vmatpush1.xpose.msra.mxu0 0.0
        %4597 = vmatprep.subr.mxu0 0.0
        %4598 = vmatpush1.xpose.msra.mxu0 0.0
        %4599 = vmatprep.subr.mxu0 0.0
        %4600 = vmatpush1.xpose.msra.mxu0 0.0
        %4601 = vmatprep.subr.mxu0 0.0
        %4602 = vmatpush1.xpose.msra.mxu0 0.0
        %4603 = vmatprep.subr.mxu0 0.0
        %4604 = vmatpush1.xpose.msra.mxu0 0.0
        %4605 = vmatprep.subr.mxu0 0.0
        %4606 = vmatpush1.xpose.msra.mxu0 0.0
        %4607 = vmatprep.subr.mxu0 0.0
        %4608 = vmatpush1.xpose.msra.mxu0 0.0
        %4609 = vmatprep.subr.mxu0 0.0
        %4610 = vmatpush1.xpose.msra.mxu0 0.0
        %4611 = vmatprep.subr.mxu0 0.0
        %4612 = vmatpush1.xpose.msra.mxu0 0.0
        %4613 = vmatprep.subr.mxu0 0.0
        %v4614 = vand.u32 %v4281, 4294901760
        %v4615 = vsub.f32 %v4281, %v4614
        %v4616 = vand.u32 %v4615, 4294901760
        %4617 = vmatpush1.xpose.msra.mxu0 %v4616
        %4618 = vmatprep.subr.mxu0 0.0
        %4619 = vmatpush2.xpose.msra.mxu0 0.0
        %4620 = vmatprep.subr.mxu0 0.0
        %4621 = vmatpush2.xpose.msra.mxu0 0.0
        %4622 = vmatprep.subr.mxu0 0.0
        %4623 = vmatpush2.xpose.msra.mxu0 0.0
        %4624 = vmatprep.subr.mxu0 0.0
        %4625 = vmatpush2.xpose.msra.mxu0 0.0
        %4626 = vmatprep.subr.mxu0 0.0
        %4627 = vmatpush2.xpose.msra.mxu0 0.0
        %4628 = vmatprep.subr.mxu0 0.0
        %4629 = vmatpush2.xpose.msra.mxu0 0.0
        %4630 = vmatprep.subr.mxu0 0.0
        %4631 = vmatpush2.xpose.msra.mxu0 0.0
        %4632 = vmatprep.subr.mxu0 0.0
        %4633 = vmatpush2.xpose.msra.mxu0 0.0
        %4634 = vmatprep.subr.mxu0 0.0
        %4635 = vmatpush2.xpose.msra.mxu0 0.0
        %4636 = vmatprep.subr.mxu0 0.0
        %4637 = vmatpush2.xpose.msra.mxu0 0.0
        %4638 = vmatprep.subr.mxu0 0.0
        %4639 = vmatpush2.xpose.msra.mxu0 0.0
        %4640 = vmatprep.subr.mxu0 0.0
        %4641 = vmatpush2.xpose.msra.mxu0 0.0
        %4642 = vmatprep.subr.mxu0 0.0
        %4643 = vmatpush2.xpose.msra.mxu0 0.0
        %4644 = vmatprep.subr.mxu0 0.0
        %4645 = vmatpush2.xpose.msra.mxu0 0.0
        %4646 = vmatprep.subr.mxu0 0.0
        %4647 = vmatpush2.xpose.msra.mxu0 0.0
        %4648 = vmatprep.subr.mxu0 0.0
        %4649 = vmatpush2.xpose.msra.mxu0 0.0
        %4650 = vmatprep.mubr.f32.mxu0 0.0
        %v4651 = vand.u32 %v4279, 4294901760
        %4652 = vmatmul.mubr.f32.gmra.mxu0 %v4651
        %v4653 = vpop.f32.mrf.mxu0
        %v4654 = vadd.f32 %v4580, %v4653
        %v4655 = vpop.f32.mrf.mxu0
        %4656 = vdwg.mxu0
        %4657 = vmatprep.subr.mxu0 0.0
        %4658 = vmatpush1.xpose.msra.mxu0 0.0
        %4659 = vmatprep.subr.mxu0 0.0
        %4660 = vmatpush1.xpose.msra.mxu0 0.0
        %4661 = vmatprep.subr.mxu0 0.0
        %4662 = vmatpush1.xpose.msra.mxu0 0.0
        %4663 = vmatprep.subr.mxu0 0.0
        %4664 = vmatpush1.xpose.msra.mxu0 0.0
        %4665 = vmatprep.subr.mxu0 0.0
        %4666 = vmatpush1.xpose.msra.mxu0 0.0
        %4667 = vmatprep.subr.mxu0 0.0
        %4668 = vmatpush1.xpose.msra.mxu0 0.0
        %4669 = vmatprep.subr.mxu0 0.0
        %4670 = vmatpush1.xpose.msra.mxu0 0.0
        %4671 = vmatprep.subr.mxu0 0.0
        %4672 = vmatpush1.xpose.msra.mxu0 0.0
        %4673 = vmatprep.subr.mxu0 0.0
        %4674 = vmatpush1.xpose.msra.mxu0 0.0
        %4675 = vmatprep.subr.mxu0 0.0
        %4676 = vmatpush1.xpose.msra.mxu0 0.0
        %4677 = vmatprep.subr.mxu0 0.0
        %4678 = vmatpush1.xpose.msra.mxu0 0.0
        %4679 = vmatprep.subr.mxu0 0.0
        %4680 = vmatpush1.xpose.msra.mxu0 0.0
        %4681 = vmatprep.subr.mxu0 0.0
        %4682 = vmatpush1.xpose.msra.mxu0 0.0
        %4683 = vmatprep.subr.mxu0 0.0
        %4684 = vmatpush1.xpose.msra.mxu0 0.0
        %4685 = vmatprep.subr.mxu0 0.0
        %4686 = vmatpush1.xpose.msra.mxu0 0.0
        %4687 = vmatprep.subr.mxu0 0.0
        %v4688 = vand.u32 %v4281, 4294901760
        %4689 = vmatpush1.xpose.msra.mxu0 %v4688
        %4690 = vmatprep.subr.mxu0 0.0
        %4691 = vmatpush2.xpose.msra.mxu0 0.0
        %4692 = vmatprep.subr.mxu0 0.0
        %4693 = vmatpush2.xpose.msra.mxu0 0.0
        %4694 = vmatprep.subr.mxu0 0.0
        %4695 = vmatpush2.xpose.msra.mxu0 0.0
        %4696 = vmatprep.subr.mxu0 0.0
        %4697 = vmatpush2.xpose.msra.mxu0 0.0
        %4698 = vmatprep.subr.mxu0 0.0
        %4699 = vmatpush2.xpose.msra.mxu0 0.0
        %4700 = vmatprep.subr.mxu0 0.0
        %4701 = vmatpush2.xpose.msra.mxu0 0.0
        %4702 = vmatprep.subr.mxu0 0.0
        %4703 = vmatpush2.xpose.msra.mxu0 0.0
        %4704 = vmatprep.subr.mxu0 0.0
        %4705 = vmatpush2.xpose.msra.mxu0 0.0
        %4706 = vmatprep.subr.mxu0 0.0
        %4707 = vmatpush2.xpose.msra.mxu0 0.0
        %4708 = vmatprep.subr.mxu0 0.0
        %4709 = vmatpush2.xpose.msra.mxu0 0.0
        %4710 = vmatprep.subr.mxu0 0.0
        %4711 = vmatpush2.xpose.msra.mxu0 0.0
        %4712 = vmatprep.subr.mxu0 0.0
        %4713 = vmatpush2.xpose.msra.mxu0 0.0
        %4714 = vmatprep.subr.mxu0 0.0
        %4715 = vmatpush2.xpose.msra.mxu0 0.0
        %4716 = vmatprep.subr.mxu0 0.0
        %4717 = vmatpush2.xpose.msra.mxu0 0.0
        %4718 = vmatprep.subr.mxu0 0.0
        %4719 = vmatpush2.xpose.msra.mxu0 0.0
        %4720 = vmatprep.subr.mxu0 0.0
        %4721 = vmatpush2.xpose.msra.mxu0 0.0
        %4722 = vmatprep.mubr.f32.mxu0 0.0
        %v4723 = vand.u32 %v4279, 4294901760
        %4724 = vmatmul.mubr.f32.gmra.mxu0 %v4723
        %v4725 = vpop.f32.mrf.mxu0
        %v4726 = vadd.f32 %v4654, %v4725
        %v4727 = vpop.f32.mrf.mxu0
        %4728 = vdwg.mxu0
        %v4729 = vadd.f32 %v4726, %v1967
        %v4730 = vsel %vm1510, %v4729, -inf
        %4731 = vmax.xlane.f32.xlu0 %v4730
        %v4732 = vpop.xlane.xlu0 %4731
        %v4733 = vsub.f32 %v4729, %v4732
        %v4734 = vmul.f32 %v4733, 1.442695
        %v4735 = vpow.pop %v4734
        %v4736 = vsel %vm1510, %v4735, 0.0
        %4737 = vadd.xlane.f32.xlu0 %v4736
        %v4738 = vpop.xlane.xlu0 %4737
        %v4739 = vrcp.pop %v4738
        %v4740 = vmul.f32 %v4735, %v4739
        %4741 = vrot.lane.b32.xlu0 %v1506, 72
        %v4742 = vpop.permute.xlu0 %4741
        %v4745 = vsel %vm1510, %v4740, 0
        %4747 = vmatprep.subr.mxu0 0.0
        %4748 = vmatpush1.msra.mxu0 0.0
        %4749 = vmatprep.subr.mxu0 0.0
        %4750 = vmatpush1.msra.mxu0 0.0
        %4751 = vmatprep.subr.mxu0 0.0
        %4752 = vmatpush1.msra.mxu0 0.0
        %4753 = vmatprep.subr.mxu0 0.0
        %4754 = vmatpush1.msra.mxu0 0.0
        %4755 = vmatprep.subr.mxu0 0.0
        %4756 = vmatpush1.msra.mxu0 0.0
        %4757 = vmatprep.subr.mxu0 0.0
        %4758 = vmatpush1.msra.mxu0 0.0
        %4759 = vmatprep.subr.mxu0 0.0
        %4760 = vmatpush1.msra.mxu0 0.0
        %4761 = vmatprep.subr.mxu0 0.0
        %4762 = vmatpush1.msra.mxu0 0.0
        %4763 = vmatprep.subr.mxu0 0.0
        %4764 = vmatpush1.msra.mxu0 0.0
        %4765 = vmatprep.subr.mxu0 0.0
        %4766 = vmatpush1.msra.mxu0 0.0
        %4767 = vmatprep.subr.mxu0 0.0
        %4768 = vmatpush1.msra.mxu0 0.0
        %4769 = vmatprep.subr.mxu0 0.0
        %4770 = vmatpush1.msra.mxu0 0.0
        %4771 = vmatprep.subr.mxu0 0.0
        %4772 = vmatpush1.msra.mxu0 0.0
        %4773 = vmatprep.subr.mxu0 0.0
        %4774 = vmatpush1.msra.mxu0 0.0
        %4775 = vmatprep.subr.mxu0 0.0
        %4776 = vmatpush1.msra.mxu0 0.0
        %4777 = vmatprep.subr.mxu0 0.0
        %v4778 = vand.u32 %v4742, 4294901760
        %4779 = vmatpush1.msra.mxu0 %v4778
        %4780 = vmatprep.subr.mxu0 0.0
        %4781 = vmatpush2.msra.mxu0 0.0
        %4782 = vmatprep.subr.mxu0 0.0
        %4783 = vmatpush2.msra.mxu0 0.0
        %4784 = vmatprep.subr.mxu0 0.0
        %4785 = vmatpush2.msra.mxu0 0.0
        %4786 = vmatprep.subr.mxu0 0.0
        %4787 = vmatpush2.msra.mxu0 0.0
        %4788 = vmatprep.subr.mxu0 0.0
        %4789 = vmatpush2.msra.mxu0 0.0
        %4790 = vmatprep.subr.mxu0 0.0
        %4791 = vmatpush2.msra.mxu0 0.0
        %4792 = vmatprep.subr.mxu0 0.0
        %4793 = vmatpush2.msra.mxu0 0.0
        %4794 = vmatprep.subr.mxu0 0.0
        %4795 = vmatpush2.msra.mxu0 0.0
        %4796 = vmatprep.subr.mxu0 0.0
        %4797 = vmatpush2.msra.mxu0 0.0
        %4798 = vmatprep.subr.mxu0 0.0
        %4799 = vmatpush2.msra.mxu0 0.0
        %4800 = vmatprep.subr.mxu0 0.0
        %4801 = vmatpush2.msra.mxu0 0.0
        %4802 = vmatprep.subr.mxu0 0.0
        %4803 = vmatpush2.msra.mxu0 0.0
        %4804 = vmatprep.subr.mxu0 0.0
        %4805 = vmatpush2.msra.mxu0 0.0
        %4806 = vmatprep.subr.mxu0 0.0
        %4807 = vmatpush2.msra.mxu0 0.0
        %4808 = vmatprep.subr.mxu0 0.0
        %4809 = vmatpush2.msra.mxu0 0.0
        %4810 = vmatprep.subr.mxu0 0.0
        %4811 = vmatpush2.msra.mxu0 0.0
        %4812 = vmatprep.mubr.f32.mxu0 0.0
        %v4813 = vand.u32 %v4745, 4294901760
        %v4814 = vsub.f32 %v4745, %v4813
        %v4815 = vand.u32 %v4814, 4294901760
        %v4816 = vsub.f32 %v4814, %v4815
        %v4817 = vand.u32 %v4816, 4294901760
        %4818 = vmatmul.mubr.f32.gmra.mxu0 %v4817
        %v4819 = vpop.f32.mrf.mxu0
        %v4820 = vadd.f32 0.0, %v4819
        %v4821 = vpop.f32.mrf.mxu0
        %4822 = vdwg.mxu0
        %4823 = vmatprep.subr.mxu0 0.0
        %4824 = vmatpush1.msra.mxu0 0.0
        %4825 = vmatprep.subr.mxu0 0.0
        %4826 = vmatpush1.msra.mxu0 0.0
        %4827 = vmatprep.subr.mxu0 0.0
        %4828 = vmatpush1.msra.mxu0 0.0
        %4829 = vmatprep.subr.mxu0 0.0
        %4830 = vmatpush1.msra.mxu0 0.0
        %4831 = vmatprep.subr.mxu0 0.0
        %4832 = vmatpush1.msra.mxu0 0.0
        %4833 = vmatprep.subr.mxu0 0.0
        %4834 = vmatpush1.msra.mxu0 0.0
        %4835 = vmatprep.subr.mxu0 0.0
        %4836 = vmatpush1.msra.mxu0 0.0
        %4837 = vmatprep.subr.mxu0 0.0
        %4838 = vmatpush1.msra.mxu0 0.0
        %4839 = vmatprep.subr.mxu0 0.0
        %4840 = vmatpush1.msra.mxu0 0.0
        %4841 = vmatprep.subr.mxu0 0.0
        %4842 = vmatpush1.msra.mxu0 0.0
        %4843 = vmatprep.subr.mxu0 0.0
        %4844 = vmatpush1.msra.mxu0 0.0
        %4845 = vmatprep.subr.mxu0 0.0
        %4846 = vmatpush1.msra.mxu0 0.0
        %4847 = vmatprep.subr.mxu0 0.0
        %4848 = vmatpush1.msra.mxu0 0.0
        %4849 = vmatprep.subr.mxu0 0.0
        %4850 = vmatpush1.msra.mxu0 0.0
        %4851 = vmatprep.subr.mxu0 0.0
        %4852 = vmatpush1.msra.mxu0 0.0
        %4853 = vmatprep.subr.mxu0 0.0
        %v4854 = vand.u32 %v4742, 4294901760
        %v4855 = vsub.f32 %v4742, %v4854
        %v4856 = vand.u32 %v4855, 4294901760
        %v4857 = vsub.f32 %v4855, %v4856
        %v4858 = vand.u32 %v4857, 4294901760
        %4859 = vmatpush1.msra.mxu0 %v4858
        %4860 = vmatprep.subr.mxu0 0.0
        %4861 = vmatpush2.msra.mxu0 0.0
        %4862 = vmatprep.subr.mxu0 0.0
        %4863 = vmatpush2.msra.mxu0 0.0
        %4864 = vmatprep.subr.mxu0 0.0
        %4865 = vmatpush2.msra.mxu0 0.0
        %4866 = vmatprep.subr.mxu0 0.0
        %4867 = vmatpush2.msra.mxu0 0.0
        %4868 = vmatprep.subr.mxu0 0.0
        %4869 = vmatpush2.msra.mxu0 0.0
        %4870 = vmatprep.subr.mxu0 0.0
        %4871 = vmatpush2.msra.mxu0 0.0
        %4872 = vmatprep.subr.mxu0 0.0
        %4873 = vmatpush2.msra.mxu0 0.0
        %4874 = vmatprep.subr.mxu0 0.0
        %4875 = vmatpush2.msra.mxu0 0.0
        %4876 = vmatprep.subr.mxu0 0.0
        %4877 = vmatpush2.msra.mxu0 0.0
        %4878 = vmatprep.subr.mxu0 0.0
        %4879 = vmatpush2.msra.mxu0 0.0
        %4880 = vmatprep.subr.mxu0 0.0
        %4881 = vmatpush2.msra.mxu0 0.0
        %4882 = vmatprep.subr.mxu0 0.0
        %4883 = vmatpush2.msra.mxu0 0.0
        %4884 = vmatprep.subr.mxu0 0.0
        %4885 = vmatpush2.msra.mxu0 0.0
        %4886 = vmatprep.subr.mxu0 0.0
        %4887 = vmatpush2.msra.mxu0 0.0
        %4888 = vmatprep.subr.mxu0 0.0
        %4889 = vmatpush2.msra.mxu0 0.0
        %4890 = vmatprep.subr.mxu0 0.0
        %4891 = vmatpush2.msra.mxu0 0.0
        %4892 = vmatprep.mubr.f32.mxu0 0.0
        %v4893 = vand.u32 %v4745, 4294901760
        %4894 = vmatmul.mubr.f32.gmra.mxu0 %v4893
        %v4895 = vpop.f32.mrf.mxu0
        %v4896 = vadd.f32 %v4820, %v4895
        %v4897 = vpop.f32.mrf.mxu0
        %4898 = vdwg.mxu0
        %4899 = vmatprep.subr.mxu0 0.0
        %4900 = vmatpush1.msra.mxu0 0.0
        %4901 = vmatprep.subr.mxu0 0.0
        %4902 = vmatpush1.msra.mxu0 0.0
        %4903 = vmatprep.subr.mxu0 0.0
        %4904 = vmatpush1.msra.mxu0 0.0
        %4905 = vmatprep.subr.mxu0 0.0
        %4906 = vmatpush1.msra.mxu0 0.0
        %4907 = vmatprep.subr.mxu0 0.0
        %4908 = vmatpush1.msra.mxu0 0.0
        %4909 = vmatprep.subr.mxu0 0.0
        %4910 = vmatpush1.msra.mxu0 0.0
        %4911 = vmatprep.subr.mxu0 0.0
        %4912 = vmatpush1.msra.mxu0 0.0
        %4913 = vmatprep.subr.mxu0 0.0
        %4914 = vmatpush1.msra.mxu0 0.0
        %4915 = vmatprep.subr.mxu0 0.0
        %4916 = vmatpush1.msra.mxu0 0.0
        %4917 = vmatprep.subr.mxu0 0.0
        %4918 = vmatpush1.msra.mxu0 0.0
        %4919 = vmatprep.subr.mxu0 0.0
        %4920 = vmatpush1.msra.mxu0 0.0
        %4921 = vmatprep.subr.mxu0 0.0
        %4922 = vmatpush1.msra.mxu0 0.0
        %4923 = vmatprep.subr.mxu0 0.0
        %4924 = vmatpush1.msra.mxu0 0.0
        %4925 = vmatprep.subr.mxu0 0.0
        %4926 = vmatpush1.msra.mxu0 0.0
        %4927 = vmatprep.subr.mxu0 0.0
        %4928 = vmatpush1.msra.mxu0 0.0
        %4929 = vmatprep.subr.mxu0 0.0
        %v4930 = vand.u32 %v4742, 4294901760
        %v4931 = vsub.f32 %v4742, %v4930
        %4932 = vmatpush1.msra.mxu0 %v4931
        %4933 = vmatprep.subr.mxu0 0.0
        %4934 = vmatpush2.msra.mxu0 0.0
        %4935 = vmatprep.subr.mxu0 0.0
        %4936 = vmatpush2.msra.mxu0 0.0
        %4937 = vmatprep.subr.mxu0 0.0
        %4938 = vmatpush2.msra.mxu0 0.0
        %4939 = vmatprep.subr.mxu0 0.0
        %4940 = vmatpush2.msra.mxu0 0.0
        %4941 = vmatprep.subr.mxu0 0.0
        %4942 = vmatpush2.msra.mxu0 0.0
        %4943 = vmatprep.subr.mxu0 0.0
        %4944 = vmatpush2.msra.mxu0 0.0
        %4945 = vmatprep.subr.mxu0 0.0
        %4946 = vmatpush2.msra.mxu0 0.0
        %4947 = vmatprep.subr.mxu0 0.0
        %4948 = vmatpush2.msra.mxu0 0.0
        %4949 = vmatprep.subr.mxu0 0.0
        %4950 = vmatpush2.msra.mxu0 0.0
        %4951 = vmatprep.subr.mxu0 0.0
        %4952 = vmatpush2.msra.mxu0 0.0
        %4953 = vmatprep.subr.mxu0 0.0
        %4954 = vmatpush2.msra.mxu0 0.0
        %4955 = vmatprep.subr.mxu0 0.0
        %4956 = vmatpush2.msra.mxu0 0.0
        %4957 = vmatprep.subr.mxu0 0.0
        %4958 = vmatpush2.msra.mxu0 0.0
        %4959 = vmatprep.subr.mxu0 0.0
        %4960 = vmatpush2.msra.mxu0 0.0
        %4961 = vmatprep.subr.mxu0 0.0
        %4962 = vmatpush2.msra.mxu0 0.0
        %4963 = vmatprep.subr.mxu0 0.0
        %4964 = vmatpush2.msra.mxu0 0.0
        %4965 = vmatprep.mubr.f32.mxu0 0.0
        %v4966 = vand.u32 %v4745, 4294901760
        %v4967 = vsub.f32 %v4745, %v4966
        %4968 = vmatmul.mubr.f32.gmra.mxu0 %v4967
        %v4969 = vpop.f32.mrf.mxu0
        %v4970 = vadd.f32 %v4896, %v4969
        %v4971 = vpop.f32.mrf.mxu0
        %4972 = vdwg.mxu0
        %4973 = vmatprep.subr.mxu0 0.0
        %4974 = vmatpush1.msra.mxu0 0.0
        %4975 = vmatprep.subr.mxu0 0.0
        %4976 = vmatpush1.msra.mxu0 0.0
        %4977 = vmatprep.subr.mxu0 0.0
        %4978 = vmatpush1.msra.mxu0 0.0
        %4979 = vmatprep.subr.mxu0 0.0
        %4980 = vmatpush1.msra.mxu0 0.0
        %4981 = vmatprep.subr.mxu0 0.0
        %4982 = vmatpush1.msra.mxu0 0.0
        %4983 = vmatprep.subr.mxu0 0.0
        %4984 = vmatpush1.msra.mxu0 0.0
        %4985 = vmatprep.subr.mxu0 0.0
        %4986 = vmatpush1.msra.mxu0 0.0
        %4987 = vmatprep.subr.mxu0 0.0
        %4988 = vmatpush1.msra.mxu0 0.0
        %4989 = vmatprep.subr.mxu0 0.0
        %4990 = vmatpush1.msra.mxu0 0.0
        %4991 = vmatprep.subr.mxu0 0.0
        %4992 = vmatpush1.msra.mxu0 0.0
        %4993 = vmatprep.subr.mxu0 0.0
        %4994 = vmatpush1.msra.mxu0 0.0
        %4995 = vmatprep.subr.mxu0 0.0
        %4996 = vmatpush1.msra.mxu0 0.0
        %4997 = vmatprep.subr.mxu0 0.0
        %4998 = vmatpush1.msra.mxu0 0.0
        %4999 = vmatprep.subr.mxu0 0.0
        %5000 = vmatpush1.msra.mxu0 0.0
        %5001 = vmatprep.subr.mxu0 0.0
        %5002 = vmatpush1.msra.mxu0 0.0
        %5003 = vmatprep.subr.mxu0 0.0
        %v5004 = vand.u32 %v4742, 4294901760
        %5005 = vmatpush1.msra.mxu0 %v5004
        %5006 = vmatprep.subr.mxu0 0.0
        %5007 = vmatpush2.msra.mxu0 0.0
        %5008 = vmatprep.subr.mxu0 0.0
        %5009 = vmatpush2.msra.mxu0 0.0
        %5010 = vmatprep.subr.mxu0 0.0
        %5011 = vmatpush2.msra.mxu0 0.0
        %5012 = vmatprep.subr.mxu0 0.0
        %5013 = vmatpush2.msra.mxu0 0.0
        %5014 = vmatprep.subr.mxu0 0.0
        %5015 = vmatpush2.msra.mxu0 0.0
        %5016 = vmatprep.subr.mxu0 0.0
        %5017 = vmatpush2.msra.mxu0 0.0
        %5018 = vmatprep.subr.mxu0 0.0
        %5019 = vmatpush2.msra.mxu0 0.0
        %5020 = vmatprep.subr.mxu0 0.0
        %5021 = vmatpush2.msra.mxu0 0.0
        %5022 = vmatprep.subr.mxu0 0.0
        %5023 = vmatpush2.msra.mxu0 0.0
        %5024 = vmatprep.subr.mxu0 0.0
        %5025 = vmatpush2.msra.mxu0 0.0
        %5026 = vmatprep.subr.mxu0 0.0
        %5027 = vmatpush2.msra.mxu0 0.0
        %5028 = vmatprep.subr.mxu0 0.0
        %5029 = vmatpush2.msra.mxu0 0.0
        %5030 = vmatprep.subr.mxu0 0.0
        %5031 = vmatpush2.msra.mxu0 0.0
        %5032 = vmatprep.subr.mxu0 0.0
        %5033 = vmatpush2.msra.mxu0 0.0
        %5034 = vmatprep.subr.mxu0 0.0
        %5035 = vmatpush2.msra.mxu0 0.0
        %5036 = vmatprep.subr.mxu0 0.0
        %5037 = vmatpush2.msra.mxu0 0.0
        %5038 = vmatprep.mubr.f32.mxu0 0.0
        %v5039 = vand.u32 %v4745, 4294901760
        %v5040 = vsub.f32 %v4745, %v5039
        %v5041 = vand.u32 %v5040, 4294901760
        %5042 = vmatmul.mubr.f32.gmra.mxu0 %v5041
        %v5043 = vpop.f32.mrf.mxu0
        %v5044 = vadd.f32 %v4970, %v5043
        %v5045 = vpop.f32.mrf.mxu0
        %5046 = vdwg.mxu0
        %5047 = vmatprep.subr.mxu0 0.0
        %5048 = vmatpush1.msra.mxu0 0.0
        %5049 = vmatprep.subr.mxu0 0.0
        %5050 = vmatpush1.msra.mxu0 0.0
        %5051 = vmatprep.subr.mxu0 0.0
        %5052 = vmatpush1.msra.mxu0 0.0
        %5053 = vmatprep.subr.mxu0 0.0
        %5054 = vmatpush1.msra.mxu0 0.0
        %5055 = vmatprep.subr.mxu0 0.0
        %5056 = vmatpush1.msra.mxu0 0.0
        %5057 = vmatprep.subr.mxu0 0.0
        %5058 = vmatpush1.msra.mxu0 0.0
        %5059 = vmatprep.subr.mxu0 0.0
        %5060 = vmatpush1.msra.mxu0 0.0
        %5061 = vmatprep.subr.mxu0 0.0
        %5062 = vmatpush1.msra.mxu0 0.0
        %5063 = vmatprep.subr.mxu0 0.0
        %5064 = vmatpush1.msra.mxu0 0.0
        %5065 = vmatprep.subr.mxu0 0.0
        %5066 = vmatpush1.msra.mxu0 0.0
        %5067 = vmatprep.subr.mxu0 0.0
        %5068 = vmatpush1.msra.mxu0 0.0
        %5069 = vmatprep.subr.mxu0 0.0
        %5070 = vmatpush1.msra.mxu0 0.0
        %5071 = vmatprep.subr.mxu0 0.0
        %5072 = vmatpush1.msra.mxu0 0.0
        %5073 = vmatprep.subr.mxu0 0.0
        %5074 = vmatpush1.msra.mxu0 0.0
        %5075 = vmatprep.subr.mxu0 0.0
        %5076 = vmatpush1.msra.mxu0 0.0
        %5077 = vmatprep.subr.mxu0 0.0
        %v5078 = vand.u32 %v4742, 4294901760
        %v5079 = vsub.f32 %v4742, %v5078
        %v5080 = vand.u32 %v5079, 4294901760
        %5081 = vmatpush1.msra.mxu0 %v5080
        %5082 = vmatprep.subr.mxu0 0.0
        %5083 = vmatpush2.msra.mxu0 0.0
        %5084 = vmatprep.subr.mxu0 0.0
        %5085 = vmatpush2.msra.mxu0 0.0
        %5086 = vmatprep.subr.mxu0 0.0
        %5087 = vmatpush2.msra.mxu0 0.0
        %5088 = vmatprep.subr.mxu0 0.0
        %5089 = vmatpush2.msra.mxu0 0.0
        %5090 = vmatprep.subr.mxu0 0.0
        %5091 = vmatpush2.msra.mxu0 0.0
        %5092 = vmatprep.subr.mxu0 0.0
        %5093 = vmatpush2.msra.mxu0 0.0
        %5094 = vmatprep.subr.mxu0 0.0
        %5095 = vmatpush2.msra.mxu0 0.0
        %5096 = vmatprep.subr.mxu0 0.0
        %5097 = vmatpush2.msra.mxu0 0.0
        %5098 = vmatprep.subr.mxu0 0.0
        %5099 = vmatpush2.msra.mxu0 0.0
        %5100 = vmatprep.subr.mxu0 0.0
        %5101 = vmatpush2.msra.mxu0 0.0
        %5102 = vmatprep.subr.mxu0 0.0
        %5103 = vmatpush2.msra.mxu0 0.0
        %5104 = vmatprep.subr.mxu0 0.0
        %5105 = vmatpush2.msra.mxu0 0.0
        %5106 = vmatprep.subr.mxu0 0.0
        %5107 = vmatpush2.msra.mxu0 0.0
        %5108 = vmatprep.subr.mxu0 0.0
        %5109 = vmatpush2.msra.mxu0 0.0
        %5110 = vmatprep.subr.mxu0 0.0
        %5111 = vmatpush2.msra.mxu0 0.0
        %5112 = vmatprep.subr.mxu0 0.0
        %5113 = vmatpush2.msra.mxu0 0.0
        %5114 = vmatprep.mubr.f32.mxu0 0.0
        %v5115 = vand.u32 %v4745, 4294901760
        %5116 = vmatmul.mubr.f32.gmra.mxu0 %v5115
        %v5117 = vpop.f32.mrf.mxu0
        %v5118 = vadd.f32 %v5044, %v5117
        %v5119 = vpop.f32.mrf.mxu0
        %5120 = vdwg.mxu0
        %5121 = vmatprep.subr.mxu0 0.0
        %5122 = vmatpush1.msra.mxu0 0.0
        %5123 = vmatprep.subr.mxu0 0.0
        %5124 = vmatpush1.msra.mxu0 0.0
        %5125 = vmatprep.subr.mxu0 0.0
        %5126 = vmatpush1.msra.mxu0 0.0
        %5127 = vmatprep.subr.mxu0 0.0
        %5128 = vmatpush1.msra.mxu0 0.0
        %5129 = vmatprep.subr.mxu0 0.0
        %5130 = vmatpush1.msra.mxu0 0.0
        %5131 = vmatprep.subr.mxu0 0.0
        %5132 = vmatpush1.msra.mxu0 0.0
        %5133 = vmatprep.subr.mxu0 0.0
        %5134 = vmatpush1.msra.mxu0 0.0
        %5135 = vmatprep.subr.mxu0 0.0
        %5136 = vmatpush1.msra.mxu0 0.0
        %5137 = vmatprep.subr.mxu0 0.0
        %5138 = vmatpush1.msra.mxu0 0.0
        %5139 = vmatprep.subr.mxu0 0.0
        %5140 = vmatpush1.msra.mxu0 0.0
        %5141 = vmatprep.subr.mxu0 0.0
        %5142 = vmatpush1.msra.mxu0 0.0
        %5143 = vmatprep.subr.mxu0 0.0
        %5144 = vmatpush1.msra.mxu0 0.0
        %5145 = vmatprep.subr.mxu0 0.0
        %5146 = vmatpush1.msra.mxu0 0.0
        %5147 = vmatprep.subr.mxu0 0.0
        %5148 = vmatpush1.msra.mxu0 0.0
        %5149 = vmatprep.subr.mxu0 0.0
        %5150 = vmatpush1.msra.mxu0 0.0
        %5151 = vmatprep.subr.mxu0 0.0
        %v5152 = vand.u32 %v4742, 4294901760
        %5153 = vmatpush1.msra.mxu0 %v5152
        %5154 = vmatprep.subr.mxu0 0.0
        %5155 = vmatpush2.msra.mxu0 0.0
        %5156 = vmatprep.subr.mxu0 0.0
        %5157 = vmatpush2.msra.mxu0 0.0
        %5158 = vmatprep.subr.mxu0 0.0
        %5159 = vmatpush2.msra.mxu0 0.0
        %5160 = vmatprep.subr.mxu0 0.0
        %5161 = vmatpush2.msra.mxu0 0.0
        %5162 = vmatprep.subr.mxu0 0.0
        %5163 = vmatpush2.msra.mxu0 0.0
        %5164 = vmatprep.subr.mxu0 0.0
        %5165 = vmatpush2.msra.mxu0 0.0
        %5166 = vmatprep.subr.mxu0 0.0
        %5167 = vmatpush2.msra.mxu0 0.0
        %5168 = vmatprep.subr.mxu0 0.0
        %5169 = vmatpush2.msra.mxu0 0.0
        %5170 = vmatprep.subr.mxu0 0.0
        %5171 = vmatpush2.msra.mxu0 0.0
        %5172 = vmatprep.subr.mxu0 0.0
        %5173 = vmatpush2.msra.mxu0 0.0
        %5174 = vmatprep.subr.mxu0 0.0
        %5175 = vmatpush2.msra.mxu0 0.0
        %5176 = vmatprep.subr.mxu0 0.0
        %5177 = vmatpush2.msra.mxu0 0.0
        %5178 = vmatprep.subr.mxu0 0.0
        %5179 = vmatpush2.msra.mxu0 0.0
        %5180 = vmatprep.subr.mxu0 0.0
        %5181 = vmatpush2.msra.mxu0 0.0
        %5182 = vmatprep.subr.mxu0 0.0
        %5183 = vmatpush2.msra.mxu0 0.0
        %5184 = vmatprep.subr.mxu0 0.0
        %5185 = vmatpush2.msra.mxu0 0.0
        %5186 = vmatprep.mubr.f32.mxu0 0.0
        %v5187 = vand.u32 %v4745, 4294901760
        %5188 = vmatmul.mubr.f32.gmra.mxu0 %v5187
        %v5189 = vpop.f32.mrf.mxu0
        %v5190 = vadd.f32 %v5118, %v5189
        %v5191 = vpop.f32.mrf.mxu0
        %5192 = vdwg.mxu0
        %5194 = vrot.lane.b32.xlu0 %v3350, 8
        %v5195 = vpop.permute.xlu0 %5194
        %5198 = vrot.lane.b32.xlu0 %v4270, 16
        %v5199 = vpop.permute.xlu0 %5198
        %5202 = vrot.lane.b32.xlu0 %v5190, 24
        %v5203 = vpop.permute.xlu0 %5202
        %v5205 = vsel %vm1510, %v2430, %v5195
        %vm5206 = vcmask 130048
        %v5207 = vsel %vm5206, %v5205, %v5199
        %vm5208 = vcmask 195584
        %v5209 = vsel %vm5208, %v5207, %v5203
        %v5210 = vld [vmem:[#allocation11] sm:$0xff]
        %v5211 = vld [vmem:[#allocation11 + $0x8] sm:$0xff]
        %v5212 = vld [vmem:[#allocation11 + $0x10] sm:$0xff]
        %v5213 = vld [vmem:[#allocation11 + $0x18] sm:$0xff]
        %v5215 = vsel %vm503, %v5209, 0
        %5217 = vmatprep.subr.mxu0 0.0
        %5218 = vmatpush1.msra.mxu0 0.0
        %5219 = vmatprep.subr.mxu0 0.0
        %5220 = vmatpush1.msra.mxu0 0.0
        %5221 = vmatprep.subr.mxu0 0.0
        %5222 = vmatpush1.msra.mxu0 0.0
        %5223 = vmatprep.subr.mxu0 0.0
        %5224 = vmatpush1.msra.mxu0 0.0
        %5225 = vmatprep.subr.mxu0 0.0
        %5226 = vmatpush1.msra.mxu0 0.0
        %5227 = vmatprep.subr.mxu0 0.0
        %5228 = vmatpush1.msra.mxu0 0.0
        %5229 = vmatprep.subr.mxu0 0.0
        %5230 = vmatpush1.msra.mxu0 0.0
        %5231 = vmatprep.subr.mxu0 0.0
        %5232 = vmatpush1.msra.mxu0 0.0
        %5233 = vmatprep.subr.mxu0 0.0
        %5234 = vmatpush1.msra.mxu0 0.0
        %5235 = vmatprep.subr.mxu0 0.0
        %5236 = vmatpush1.msra.mxu0 0.0
        %5237 = vmatprep.subr.mxu0 0.0
        %5238 = vmatpush1.msra.mxu0 0.0
        %5239 = vmatprep.subr.mxu0 0.0
        %5240 = vmatpush1.msra.mxu0 0.0
        %5241 = vmatprep.subr.mxu0 0.0
        %v5242 = vand.u32 %v5213, 4294901760
        %5243 = vmatpush1.msra.mxu0 %v5242
        %5244 = vmatprep.subr.mxu0 0.0
        %v5245 = vand.u32 %v5212, 4294901760
        %5246 = vmatpush1.msra.mxu0 %v5245
        %5247 = vmatprep.subr.mxu0 0.0
        %v5248 = vand.u32 %v5211, 4294901760
        %5249 = vmatpush1.msra.mxu0 %v5248
        %5250 = vmatprep.subr.mxu0 0.0
        %v5251 = vand.u32 %v5210, 4294901760
        %5252 = vmatpush1.msra.mxu0 %v5251
        %5253 = vmatprep.subr.mxu0 0.0
        %5254 = vmatpush2.msra.mxu0 0.0
        %5255 = vmatprep.subr.mxu0 0.0
        %5256 = vmatpush2.msra.mxu0 0.0
        %5257 = vmatprep.subr.mxu0 0.0
        %5258 = vmatpush2.msra.mxu0 0.0
        %5259 = vmatprep.subr.mxu0 0.0
        %5260 = vmatpush2.msra.mxu0 0.0
        %5261 = vmatprep.subr.mxu0 0.0
        %5262 = vmatpush2.msra.mxu0 0.0
        %5263 = vmatprep.subr.mxu0 0.0
        %5264 = vmatpush2.msra.mxu0 0.0
        %5265 = vmatprep.subr.mxu0 0.0
        %5266 = vmatpush2.msra.mxu0 0.0
        %5267 = vmatprep.subr.mxu0 0.0
        %5268 = vmatpush2.msra.mxu0 0.0
        %5269 = vmatprep.subr.mxu0 0.0
        %5270 = vmatpush2.msra.mxu0 0.0
        %5271 = vmatprep.subr.mxu0 0.0
        %5272 = vmatpush2.msra.mxu0 0.0
        %5273 = vmatprep.subr.mxu0 0.0
        %5274 = vmatpush2.msra.mxu0 0.0
        %5275 = vmatprep.subr.mxu0 0.0
        %5276 = vmatpush2.msra.mxu0 0.0
        %5277 = vmatprep.subr.mxu0 0.0
        %5278 = vmatpush2.msra.mxu0 0.0
        %5279 = vmatprep.subr.mxu0 0.0
        %5280 = vmatpush2.msra.mxu0 0.0
        %5281 = vmatprep.subr.mxu0 0.0
        %5282 = vmatpush2.msra.mxu0 0.0
        %5283 = vmatprep.subr.mxu0 0.0
        %5284 = vmatpush2.msra.mxu0 0.0
        %5285 = vmatprep.mubr.f32.mxu0 0.0
        %v5286 = vand.u32 %v5215, 4294901760
        %v5287 = vsub.f32 %v5215, %v5286
        %v5288 = vand.u32 %v5287, 4294901760
        %v5289 = vsub.f32 %v5287, %v5288
        %v5290 = vand.u32 %v5289, 4294901760
        %5291 = vmatmul.mubr.f32.gmra.mxu0 %v5290
        %v5292 = vpop.f32.mrf.mxu0
        %v5293 = vadd.f32 %v498, %v5292
        %v5294 = vpop.f32.mrf.mxu0
        %5295 = vdwg.mxu0
        %5296 = vmatprep.subr.mxu0 0.0
        %5297 = vmatpush1.msra.mxu0 0.0
        %5298 = vmatprep.subr.mxu0 0.0
        %5299 = vmatpush1.msra.mxu0 0.0
        %5300 = vmatprep.subr.mxu0 0.0
        %5301 = vmatpush1.msra.mxu0 0.0
        %5302 = vmatprep.subr.mxu0 0.0
        %5303 = vmatpush1.msra.mxu0 0.0
        %5304 = vmatprep.subr.mxu0 0.0
        %5305 = vmatpush1.msra.mxu0 0.0
        %5306 = vmatprep.subr.mxu0 0.0
        %5307 = vmatpush1.msra.mxu0 0.0
        %5308 = vmatprep.subr.mxu0 0.0
        %5309 = vmatpush1.msra.mxu0 0.0
        %5310 = vmatprep.subr.mxu0 0.0
        %5311 = vmatpush1.msra.mxu0 0.0
        %5312 = vmatprep.subr.mxu0 0.0
        %5313 = vmatpush1.msra.mxu0 0.0
        %5314 = vmatprep.subr.mxu0 0.0
        %5315 = vmatpush1.msra.mxu0 0.0
        %5316 = vmatprep.subr.mxu0 0.0
        %5317 = vmatpush1.msra.mxu0 0.0
        %5318 = vmatprep.subr.mxu0 0.0
        %5319 = vmatpush1.msra.mxu0 0.0
        %5320 = vmatprep.subr.mxu0 0.0
        %v5321 = vand.u32 %v5213, 4294901760
        %v5322 = vsub.f32 %v5213, %v5321
        %v5323 = vand.u32 %v5322, 4294901760
        %v5324 = vsub.f32 %v5322, %v5323
        %v5325 = vand.u32 %v5324, 4294901760
        %5326 = vmatpush1.msra.mxu0 %v5325
        %5327 = vmatprep.subr.mxu0 0.0
        %v5328 = vand.u32 %v5212, 4294901760
        %v5329 = vsub.f32 %v5212, %v5328
        %v5330 = vand.u32 %v5329, 4294901760
        %v5331 = vsub.f32 %v5329, %v5330
        %v5332 = vand.u32 %v5331, 4294901760
        %5333 = vmatpush1.msra.mxu0 %v5332
        %5334 = vmatprep.subr.mxu0 0.0
        %v5335 = vand.u32 %v5211, 4294901760
        %v5336 = vsub.f32 %v5211, %v5335
        %v5337 = vand.u32 %v5336, 4294901760
        %v5338 = vsub.f32 %v5336, %v5337
        %v5339 = vand.u32 %v5338, 4294901760
        %5340 = vmatpush1.msra.mxu0 %v5339
        %5341 = vmatprep.subr.mxu0 0.0
        %v5342 = vand.u32 %v5210, 4294901760
        %v5343 = vsub.f32 %v5210, %v5342
        %v5344 = vand.u32 %v5343, 4294901760
        %v5345 = vsub.f32 %v5343, %v5344
        %v5346 = vand.u32 %v5345, 4294901760
        %5347 = vmatpush1.msra.mxu0 %v5346
        %5348 = vmatprep.subr.mxu0 0.0
        %5349 = vmatpush2.msra.mxu0 0.0
        %5350 = vmatprep.subr.mxu0 0.0
        %5351 = vmatpush2.msra.mxu0 0.0
        %5352 = vmatprep.subr.mxu0 0.0
        %5353 = vmatpush2.msra.mxu0 0.0
        %5354 = vmatprep.subr.mxu0 0.0
        %5355 = vmatpush2.msra.mxu0 0.0
        %5356 = vmatprep.subr.mxu0 0.0
        %5357 = vmatpush2.msra.mxu0 0.0
        %5358 = vmatprep.subr.mxu0 0.0
        %5359 = vmatpush2.msra.mxu0 0.0
        %5360 = vmatprep.subr.mxu0 0.0
        %5361 = vmatpush2.msra.mxu0 0.0
        %5362 = vmatprep.subr.mxu0 0.0
        %5363 = vmatpush2.msra.mxu0 0.0
        %5364 = vmatprep.subr.mxu0 0.0
        %5365 = vmatpush2.msra.mxu0 0.0
        %5366 = vmatprep.subr.mxu0 0.0
        %5367 = vmatpush2.msra.mxu0 0.0
        %5368 = vmatprep.subr.mxu0 0.0
        %5369 = vmatpush2.msra.mxu0 0.0
        %5370 = vmatprep.subr.mxu0 0.0
        %5371 = vmatpush2.msra.mxu0 0.0
        %5372 = vmatprep.subr.mxu0 0.0
        %5373 = vmatpush2.msra.mxu0 0.0
        %5374 = vmatprep.subr.mxu0 0.0
        %5375 = vmatpush2.msra.mxu0 0.0
        %5376 = vmatprep.subr.mxu0 0.0
        %5377 = vmatpush2.msra.mxu0 0.0
        %5378 = vmatprep.subr.mxu0 0.0
        %5379 = vmatpush2.msra.mxu0 0.0
        %5380 = vmatprep.mubr.f32.mxu0 0.0
        %v5381 = vand.u32 %v5215, 4294901760
        %5382 = vmatmul.mubr.f32.gmra.mxu0 %v5381
        %v5383 = vpop.f32.mrf.mxu0
        %v5384 = vadd.f32 %v5293, %v5383
        %v5385 = vpop.f32.mrf.mxu0
        %5386 = vdwg.mxu0
        %5387 = vmatprep.subr.mxu0 0.0
        %5388 = vmatpush1.msra.mxu0 0.0
        %5389 = vmatprep.subr.mxu0 0.0
        %5390 = vmatpush1.msra.mxu0 0.0
        %5391 = vmatprep.subr.mxu0 0.0
        %5392 = vmatpush1.msra.mxu0 0.0
        %5393 = vmatprep.subr.mxu0 0.0
        %5394 = vmatpush1.msra.mxu0 0.0
        %5395 = vmatprep.subr.mxu0 0.0
        %5396 = vmatpush1.msra.mxu0 0.0
        %5397 = vmatprep.subr.mxu0 0.0
        %5398 = vmatpush1.msra.mxu0 0.0
        %5399 = vmatprep.subr.mxu0 0.0
        %5400 = vmatpush1.msra.mxu0 0.0
        %5401 = vmatprep.subr.mxu0 0.0
        %5402 = vmatpush1.msra.mxu0 0.0
        %5403 = vmatprep.subr.mxu0 0.0
        %5404 = vmatpush1.msra.mxu0 0.0
        %5405 = vmatprep.subr.mxu0 0.0
        %5406 = vmatpush1.msra.mxu0 0.0
        %5407 = vmatprep.subr.mxu0 0.0
        %5408 = vmatpush1.msra.mxu0 0.0
        %5409 = vmatprep.subr.mxu0 0.0
        %5410 = vmatpush1.msra.mxu0 0.0
        %5411 = vmatprep.subr.mxu0 0.0
        %v5412 = vand.u32 %v5213, 4294901760
        %v5413 = vsub.f32 %v5213, %v5412
        %5414 = vmatpush1.msra.mxu0 %v5413
        %5415 = vmatprep.subr.mxu0 0.0
        %v5416 = vand.u32 %v5212, 4294901760
        %v5417 = vsub.f32 %v5212, %v5416
        %5418 = vmatpush1.msra.mxu0 %v5417
        %5419 = vmatprep.subr.mxu0 0.0
        %v5420 = vand.u32 %v5211, 4294901760
        %v5421 = vsub.f32 %v5211, %v5420
        %5422 = vmatpush1.msra.mxu0 %v5421
        %5423 = vmatprep.subr.mxu0 0.0
        %v5424 = vand.u32 %v5210, 4294901760
        %v5425 = vsub.f32 %v5210, %v5424
        %5426 = vmatpush1.msra.mxu0 %v5425
        %5427 = vmatprep.subr.mxu0 0.0
        %5428 = vmatpush2.msra.mxu0 0.0
        %5429 = vmatprep.subr.mxu0 0.0
        %5430 = vmatpush2.msra.mxu0 0.0
        %5431 = vmatprep.subr.mxu0 0.0
        %5432 = vmatpush2.msra.mxu0 0.0
        %5433 = vmatprep.subr.mxu0 0.0
        %5434 = vmatpush2.msra.mxu0 0.0
        %5435 = vmatprep.subr.mxu0 0.0
        %5436 = vmatpush2.msra.mxu0 0.0
        %5437 = vmatprep.subr.mxu0 0.0
        %5438 = vmatpush2.msra.mxu0 0.0
        %5439 = vmatprep.subr.mxu0 0.0
        %5440 = vmatpush2.msra.mxu0 0.0
        %5441 = vmatprep.subr.mxu0 0.0
        %5442 = vmatpush2.msra.mxu0 0.0
        %5443 = vmatprep.subr.mxu0 0.0
        %5444 = vmatpush2.msra.mxu0 0.0
        %5445 = vmatprep.subr.mxu0 0.0
        %5446 = vmatpush2.msra.mxu0 0.0
        %5447 = vmatprep.subr.mxu0 0.0
        %5448 = vmatpush2.msra.mxu0 0.0
        %5449 = vmatprep.subr.mxu0 0.0
        %5450 = vmatpush2.msra.mxu0 0.0
        %5451 = vmatprep.subr.mxu0 0.0
        %5452 = vmatpush2.msra.mxu0 0.0
        %5453 = vmatprep.subr.mxu0 0.0
        %5454 = vmatpush2.msra.mxu0 0.0
        %5455 = vmatprep.subr.mxu0 0.0
        %5456 = vmatpush2.msra.mxu0 0.0
        %5457 = vmatprep.subr.mxu0 0.0
        %5458 = vmatpush2.msra.mxu0 0.0
        %5459 = vmatprep.mubr.f32.mxu0 0.0
        %v5460 = vand.u32 %v5215, 4294901760
        %v5461 = vsub.f32 %v5215, %v5460
        %5462 = vmatmul.mubr.f32.gmra.mxu0 %v5461
        %v5463 = vpop.f32.mrf.mxu0
        %v5464 = vadd.f32 %v5384, %v5463
        %v5465 = vpop.f32.mrf.mxu0
        %5466 = vdwg.mxu0
        %5467 = vmatprep.subr.mxu0 0.0
        %5468 = vmatpush1.msra.mxu0 0.0
        %5469 = vmatprep.subr.mxu0 0.0
        %5470 = vmatpush1.msra.mxu0 0.0
        %5471 = vmatprep.subr.mxu0 0.0
        %5472 = vmatpush1.msra.mxu0 0.0
        %5473 = vmatprep.subr.mxu0 0.0
        %5474 = vmatpush1.msra.mxu0 0.0
        %5475 = vmatprep.subr.mxu0 0.0
        %5476 = vmatpush1.msra.mxu0 0.0
        %5477 = vmatprep.subr.mxu0 0.0
        %5478 = vmatpush1.msra.mxu0 0.0
        %5479 = vmatprep.subr.mxu0 0.0
        %5480 = vmatpush1.msra.mxu0 0.0
        %5481 = vmatprep.subr.mxu0 0.0
        %5482 = vmatpush1.msra.mxu0 0.0
        %5483 = vmatprep.subr.mxu0 0.0
        %5484 = vmatpush1.msra.mxu0 0.0
        %5485 = vmatprep.subr.mxu0 0.0
        %5486 = vmatpush1.msra.mxu0 0.0
        %5487 = vmatprep.subr.mxu0 0.0
        %5488 = vmatpush1.msra.mxu0 0.0
        %5489 = vmatprep.subr.mxu0 0.0
        %5490 = vmatpush1.msra.mxu0 0.0
        %5491 = vmatprep.subr.mxu0 0.0
        %v5492 = vand.u32 %v5213, 4294901760
        %5493 = vmatpush1.msra.mxu0 %v5492
        %5494 = vmatprep.subr.mxu0 0.0
        %v5495 = vand.u32 %v5212, 4294901760
        %5496 = vmatpush1.msra.mxu0 %v5495
        %5497 = vmatprep.subr.mxu0 0.0
        %v5498 = vand.u32 %v5211, 4294901760
        %5499 = vmatpush1.msra.mxu0 %v5498
        %5500 = vmatprep.subr.mxu0 0.0
        %v5501 = vand.u32 %v5210, 4294901760
        %5502 = vmatpush1.msra.mxu0 %v5501
        %5503 = vmatprep.subr.mxu0 0.0
        %5504 = vmatpush2.msra.mxu0 0.0
        %5505 = vmatprep.subr.mxu0 0.0
        %5506 = vmatpush2.msra.mxu0 0.0
        %5507 = vmatprep.subr.mxu0 0.0
        %5508 = vmatpush2.msra.mxu0 0.0
        %5509 = vmatprep.subr.mxu0 0.0
        %5510 = vmatpush2.msra.mxu0 0.0
        %5511 = vmatprep.subr.mxu0 0.0
        %5512 = vmatpush2.msra.mxu0 0.0
        %5513 = vmatprep.subr.mxu0 0.0
        %5514 = vmatpush2.msra.mxu0 0.0
        %5515 = vmatprep.subr.mxu0 0.0
        %5516 = vmatpush2.msra.mxu0 0.0
        %5517 = vmatprep.subr.mxu0 0.0
        %5518 = vmatpush2.msra.mxu0 0.0
        %5519 = vmatprep.subr.mxu0 0.0
        %5520 = vmatpush2.msra.mxu0 0.0
        %5521 = vmatprep.subr.mxu0 0.0
        %5522 = vmatpush2.msra.mxu0 0.0
        %5523 = vmatprep.subr.mxu0 0.0
        %5524 = vmatpush2.msra.mxu0 0.0
        %5525 = vmatprep.subr.mxu0 0.0
        %5526 = vmatpush2.msra.mxu0 0.0
        %5527 = vmatprep.subr.mxu0 0.0
        %5528 = vmatpush2.msra.mxu0 0.0
        %5529 = vmatprep.subr.mxu0 0.0
        %5530 = vmatpush2.msra.mxu0 0.0
        %5531 = vmatprep.subr.mxu0 0.0
        %5532 = vmatpush2.msra.mxu0 0.0
        %5533 = vmatprep.subr.mxu0 0.0
        %5534 = vmatpush2.msra.mxu0 0.0
        %5535 = vmatprep.mubr.f32.mxu0 0.0
        %v5536 = vand.u32 %v5215, 4294901760
        %v5537 = vsub.f32 %v5215, %v5536
        %v5538 = vand.u32 %v5537, 4294901760
        %5539 = vmatmul.mubr.f32.gmra.mxu0 %v5538
        %v5540 = vpop.f32.mrf.mxu0
        %v5541 = vadd.f32 %v5464, %v5540
        %v5542 = vpop.f32.mrf.mxu0
        %5543 = vdwg.mxu0
        %5544 = vmatprep.subr.mxu0 0.0
        %5545 = vmatpush1.msra.mxu0 0.0
        %5546 = vmatprep.subr.mxu0 0.0
        %5547 = vmatpush1.msra.mxu0 0.0
        %5548 = vmatprep.subr.mxu0 0.0
        %5549 = vmatpush1.msra.mxu0 0.0
        %5550 = vmatprep.subr.mxu0 0.0
        %5551 = vmatpush1.msra.mxu0 0.0
        %5552 = vmatprep.subr.mxu0 0.0
        %5553 = vmatpush1.msra.mxu0 0.0
        %5554 = vmatprep.subr.mxu0 0.0
        %5555 = vmatpush1.msra.mxu0 0.0
        %5556 = vmatprep.subr.mxu0 0.0
        %5557 = vmatpush1.msra.mxu0 0.0
        %5558 = vmatprep.subr.mxu0 0.0
        %5559 = vmatpush1.msra.mxu0 0.0
        %5560 = vmatprep.subr.mxu0 0.0
        %5561 = vmatpush1.msra.mxu0 0.0
        %5562 = vmatprep.subr.mxu0 0.0
        %5563 = vmatpush1.msra.mxu0 0.0
        %5564 = vmatprep.subr.mxu0 0.0
        %5565 = vmatpush1.msra.mxu0 0.0
        %5566 = vmatprep.subr.mxu0 0.0
        %5567 = vmatpush1.msra.mxu0 0.0
        %5568 = vmatprep.subr.mxu0 0.0
        %v5569 = vand.u32 %v5213, 4294901760
        %v5570 = vsub.f32 %v5213, %v5569
        %v5571 = vand.u32 %v5570, 4294901760
        %5572 = vmatpush1.msra.mxu0 %v5571
        %5573 = vmatprep.subr.mxu0 0.0
        %v5574 = vand.u32 %v5212, 4294901760
        %v5575 = vsub.f32 %v5212, %v5574
        %v5576 = vand.u32 %v5575, 4294901760
        %5577 = vmatpush1.msra.mxu0 %v5576
        %5578 = vmatprep.subr.mxu0 0.0
        %v5579 = vand.u32 %v5211, 4294901760
        %v5580 = vsub.f32 %v5211, %v5579
        %v5581 = vand.u32 %v5580, 4294901760
        %5582 = vmatpush1.msra.mxu0 %v5581
        %5583 = vmatprep.subr.mxu0 0.0
        %v5584 = vand.u32 %v5210, 4294901760
        %v5585 = vsub.f32 %v5210, %v5584
        %v5586 = vand.u32 %v5585, 4294901760
        %5587 = vmatpush1.msra.mxu0 %v5586
        %5588 = vmatprep.subr.mxu0 0.0
        %5589 = vmatpush2.msra.mxu0 0.0
        %5590 = vmatprep.subr.mxu0 0.0
        %5591 = vmatpush2.msra.mxu0 0.0
        %5592 = vmatprep.subr.mxu0 0.0
        %5593 = vmatpush2.msra.mxu0 0.0
        %5594 = vmatprep.subr.mxu0 0.0
        %5595 = vmatpush2.msra.mxu0 0.0
        %5596 = vmatprep.subr.mxu0 0.0
        %5597 = vmatpush2.msra.mxu0 0.0
        %5598 = vmatprep.subr.mxu0 0.0
        %5599 = vmatpush2.msra.mxu0 0.0
        %5600 = vmatprep.subr.mxu0 0.0
        %5601 = vmatpush2.msra.mxu0 0.0
        %5602 = vmatprep.subr.mxu0 0.0
        %5603 = vmatpush2.msra.mxu0 0.0
        %5604 = vmatprep.subr.mxu0 0.0
        %5605 = vmatpush2.msra.mxu0 0.0
        %5606 = vmatprep.subr.mxu0 0.0
        %5607 = vmatpush2.msra.mxu0 0.0
        %5608 = vmatprep.subr.mxu0 0.0
        %5609 = vmatpush2.msra.mxu0 0.0
        %5610 = vmatprep.subr.mxu0 0.0
        %5611 = vmatpush2.msra.mxu0 0.0
        %5612 = vmatprep.subr.mxu0 0.0
        %5613 = vmatpush2.msra.mxu0 0.0
        %5614 = vmatprep.subr.mxu0 0.0
        %5615 = vmatpush2.msra.mxu0 0.0
        %5616 = vmatprep.subr.mxu0 0.0
        %5617 = vmatpush2.msra.mxu0 0.0
        %5618 = vmatprep.subr.mxu0 0.0
        %5619 = vmatpush2.msra.mxu0 0.0
        %5620 = vmatprep.mubr.f32.mxu0 0.0
        %v5621 = vand.u32 %v5215, 4294901760
        %5622 = vmatmul.mubr.f32.gmra.mxu0 %v5621
        %v5623 = vpop.f32.mrf.mxu0
        %v5624 = vadd.f32 %v5541, %v5623
        %v5625 = vpop.f32.mrf.mxu0
        %5626 = vdwg.mxu0
        %5627 = vmatprep.subr.mxu0 0.0
        %5628 = vmatpush1.msra.mxu0 0.0
        %5629 = vmatprep.subr.mxu0 0.0
        %5630 = vmatpush1.msra.mxu0 0.0
        %5631 = vmatprep.subr.mxu0 0.0
        %5632 = vmatpush1.msra.mxu0 0.0
        %5633 = vmatprep.subr.mxu0 0.0
        %5634 = vmatpush1.msra.mxu0 0.0
        %5635 = vmatprep.subr.mxu0 0.0
        %5636 = vmatpush1.msra.mxu0 0.0
        %5637 = vmatprep.subr.mxu0 0.0
        %5638 = vmatpush1.msra.mxu0 0.0
        %5639 = vmatprep.subr.mxu0 0.0
        %5640 = vmatpush1.msra.mxu0 0.0
        %5641 = vmatprep.subr.mxu0 0.0
        %5642 = vmatpush1.msra.mxu0 0.0
        %5643 = vmatprep.subr.mxu0 0.0
        %5644 = vmatpush1.msra.mxu0 0.0
        %5645 = vmatprep.subr.mxu0 0.0
        %5646 = vmatpush1.msra.mxu0 0.0
        %5647 = vmatprep.subr.mxu0 0.0
        %5648 = vmatpush1.msra.mxu0 0.0
        %5649 = vmatprep.subr.mxu0 0.0
        %5650 = vmatpush1.msra.mxu0 0.0
        %5651 = vmatprep.subr.mxu0 0.0
        %v5652 = vand.u32 %v5213, 4294901760
        %5653 = vmatpush1.msra.mxu0 %v5652
        %5654 = vmatprep.subr.mxu0 0.0
        %v5655 = vand.u32 %v5212, 4294901760
        %5656 = vmatpush1.msra.mxu0 %v5655
        %5657 = vmatprep.subr.mxu0 0.0
        %v5658 = vand.u32 %v5211, 4294901760
        %5659 = vmatpush1.msra.mxu0 %v5658
        %5660 = vmatprep.subr.mxu0 0.0
        %v5661 = vand.u32 %v5210, 4294901760
        %5662 = vmatpush1.msra.mxu0 %v5661
        %5663 = vmatprep.subr.mxu0 0.0
        %5664 = vmatpush2.msra.mxu0 0.0
        %5665 = vmatprep.subr.mxu0 0.0
        %5666 = vmatpush2.msra.mxu0 0.0
        %5667 = vmatprep.subr.mxu0 0.0
        %5668 = vmatpush2.msra.mxu0 0.0
        %5669 = vmatprep.subr.mxu0 0.0
        %5670 = vmatpush2.msra.mxu0 0.0
        %5671 = vmatprep.subr.mxu0 0.0
        %5672 = vmatpush2.msra.mxu0 0.0
        %5673 = vmatprep.subr.mxu0 0.0
        %5674 = vmatpush2.msra.mxu0 0.0
        %5675 = vmatprep.subr.mxu0 0.0
        %5676 = vmatpush2.msra.mxu0 0.0
        %5677 = vmatprep.subr.mxu0 0.0
        %5678 = vmatpush2.msra.mxu0 0.0
        %5679 = vmatprep.subr.mxu0 0.0
        %5680 = vmatpush2.msra.mxu0 0.0
        %5681 = vmatprep.subr.mxu0 0.0
        %5682 = vmatpush2.msra.mxu0 0.0
        %5683 = vmatprep.subr.mxu0 0.0
        %5684 = vmatpush2.msra.mxu0 0.0
        %5685 = vmatprep.subr.mxu0 0.0
        %5686 = vmatpush2.msra.mxu0 0.0
        %5687 = vmatprep.subr.mxu0 0.0
        %5688 = vmatpush2.msra.mxu0 0.0
        %5689 = vmatprep.subr.mxu0 0.0
        %5690 = vmatpush2.msra.mxu0 0.0
        %5691 = vmatprep.subr.mxu0 0.0
        %5692 = vmatpush2.msra.mxu0 0.0
        %5693 = vmatprep.subr.mxu0 0.0
        %5694 = vmatpush2.msra.mxu0 0.0
        %5695 = vmatprep.mubr.f32.mxu0 0.0
        %v5696 = vand.u32 %v5215, 4294901760
        %5697 = vmatmul.mubr.f32.gmra.mxu0 %v5696
        %v5698 = vpop.f32.mrf.mxu0
        %v5699 = vadd.f32 %v5624, %v5698
        %v5700 = vpop.f32.mrf.mxu0
        %5701 = vdwg.mxu0
        %5702 = vst.msk [vmem:[%s484] sm:$0xff] %vm503, %v5699
        %5703 = vst.msk [vmem:[%s491] sm:$0xff] %vm1510, %v1980
        %5704 = vst.msk [vmem:[%s491 + $0x8] sm:$0xff] %vm1510, %v2900
        %5705 = vst.msk [vmem:[%s491 + $0x10] sm:$0xff] %vm1510, %v3820
        %5706 = vst.msk [vmem:[%s491 + $0x18] sm:$0xff] %vm1510, %v4740
        %s5707 = sand.u32 %s244, 1
        %s5708 = scalar_lea.sflag [#allocation4], %s5707
        %s5709 = sand.u32 %s244, 1
        %s5710 = smul.addr %s5709, 8
        %s5711 = scalar_lea.vmem [#allocation13], %s5710
        %s5712 = sand.u32 %s272, 1
        %s5713 = scalar_lea.sflag [#allocation15], %s5712
        %s5714 = sand.u32 %s272, 1
        %s5715 = smul.addr %s5714, 32
        %s5716 = scalar_lea.vmem [#allocation14], %s5715
        // Predicated region
        $region77: #{tpu_custom_call.1} parent=51 // pred_check
          %p5717 = pneg %p254
        $region78: #{tpu_custom_call.1} parent=51 // pred_check_branch
          %5719 = sbr.rel (%p5717) target = $region80
        $region79: #{tpu_custom_call.1} parent=51 // pred_region
          %s5721 = ssub.s32 128, 128
          %5722 = vsyncadd %s5708, %s5721
          %s5723 = sadd.s32 %s40, %s39
          %s5724 = smul.addr %s5723, 128
          %s5725 = scalar_lea.hbm %s8, %s5724
          %s5727 = sshll.u32 %s5711, 4
          %s5728 = int_to_ptr.vmem [resolvable:$true] %s5727
          %5730 = dma.vmem_to_hbm [thread:$0]  %s5728, 128, %s5725, %s5708
        $region80: #{tpu_custom_call.1} parent=51 // pred_fallthru
          _
        // Predicated region
        $region81: #{tpu_custom_call.1} parent=51 // pred_check
          %p5731 = pneg %p282
        $region82: #{tpu_custom_call.1} parent=51 // pred_check_branch
          %5733 = sbr.rel (%p5731) target = $region84
        $region83: #{tpu_custom_call.1} parent=51 // pred_region
          %s5735 = ssub.s32 512, 512
          %5736 = vsyncadd %s5713, %s5735
          %s5737 = smul.addr %s40, 4
          %s5738 = smul.addr %s39, 4
          %s5739 = sadd.s32 %s5737, %s5738
          %s5740 = smul.addr %s5739, 128
          %s5741 = scalar_lea.hbm %s9, %s5740
          %s5742 = sshll.u32 %s5716, 4
          %s5743 = int_to_ptr.vmem [resolvable:$true] %s5742
          %5748 = dma.vmem_to_hbm [thread:$0]  %s5743, 512, %s5741, %s5713, 128, 128, 8
        $region84: #{tpu_custom_call.1} parent=51 // pred_fallthru
          _
      $region52: #{tpu_custom_call.1} parent=5 // pred_fallthru
        _
      %p5749 = scmp.le.s32.totalorder 2, %s30
      // Predicated region
      $region85: #{tpu_custom_call.1} parent=5 // pred_check
        %p5750 = pneg %p5749
      $region86: #{tpu_custom_call.1} parent=5 // pred_check_branch
        %5752 = sbr.rel (%p5750) target = $region88
      $region87: #{tpu_custom_call.1} parent=5 // pred_region
        %s5753 = ssub.s32 %s30, 2
        // Predicated region
        $region89: #{tpu_custom_call.1} parent=87 // pred_check
          %p5754 = pneg %p260
        $region90: #{tpu_custom_call.1} parent=87 // pred_check_branch
          %5756 = sbr.rel (%p5754) target = $region92
        $region91: #{tpu_custom_call.1} parent=87 // pred_region
          %s5757 = sand.u32 %s245, 1
          %s5758 = scalar_lea.sflag [#allocation4], %s5757
          %s5759 = sand.u32 %s245, 1
          %s5760 = smul.addr %s5759, 8
          %s5761 = scalar_lea.vmem [#allocation13], %s5760
          %5762 = dma.done %s5758, 128
        $region92: #{tpu_custom_call.1} parent=87 // pred_fallthru
          _
        // Predicated region
        $region93: #{tpu_custom_call.1} parent=87 // pred_check
          %p5763 = pneg %p288
        $region94: #{tpu_custom_call.1} parent=87 // pred_check_branch
          %5765 = sbr.rel (%p5763) target = $region96
        $region95: #{tpu_custom_call.1} parent=87 // pred_region
          %s5766 = sand.u32 %s273, 1
          %s5767 = scalar_lea.sflag [#allocation15], %s5766
          %s5768 = sand.u32 %s273, 1
          %s5769 = smul.addr %s5768, 32
          %s5770 = scalar_lea.vmem [#allocation14], %s5769
          %5771 = dma.done %s5767, 512
        $region96: #{tpu_custom_call.1} parent=87 // pred_fallthru
          _
      $region88: #{tpu_custom_call.1} parent=5 // pred_fallthru
        _
    $region6: #{tpu_custom_call.1} parent=1 // loop_footer
      %s34 = sadd.s32 1, %s30
    $region7: #{tpu_custom_call.1} parent=1 // loop_footer_branch
      %29 = sbr.rel target = $region3
    $region8: #{tpu_custom_call.1} parent=1 // loop_exit
      _
    %5772 = vsyncpa [#allocation3], 1
    %s5773 = scalar_lea.sflag [#allocation3], 1
    %5774 = vsyncpa %s5773, 1
    %5775 = vsyncpa [#allocation6], 1
    %s5776 = scalar_lea.sflag [#allocation6], 1
    %5777 = vsyncpa %s5776, 1
    %5778 = vsyncpa [#allocation9], 1
    %5779 = vsyncpa [#allocation12], 1
    %5780 = vsyncpa [#allocation4], 1
    %s5781 = scalar_lea.sflag [#allocation4], 1
    %5782 = vsyncpa %s5781, 1
    %5783 = vsyncpa [#allocation15], 1
    %s5784 = scalar_lea.sflag [#allocation15], 1
    %5785 = vsyncpa %s5784, 1

</llo_original>
